<compile_context>
chip_gen: v6e
topology: v6e:2x2x1
jax: 0.10.0
libtpu: 0.0.40
codegen_flags: <defaults>
</compile_context>

<pallas_src>
import functools

import jax
import jax.numpy as jnp
from jax.experimental import pallas as pl
from jax.experimental.pallas import tpu as pltpu

_LANE = 128
_SUBLANE_BF16 = 16   # bf16 packs 2 rows per sublane -> 16-row tile alignment


def _round_up(n, m):
    return (n + m - 1) // m * m


def _const_spec(shape):
    """Whole-array VMEM block, constant index map over the batch grid axis."""
    nd = len(shape)
    return pl.BlockSpec(tuple(shape), lambda b, _nd=nd: (0,) * _nd)


def _permute_pad_gate_cols(w, H, Hp):
    """Reorder gate column blocks [i,f,g,o] -> [i,f,o,g], pad each to Hp lanes."""
    blocks = [w[:, 0 * H:1 * H], w[:, 1 * H:2 * H],
              w[:, 3 * H:4 * H], w[:, 2 * H:3 * H]]
    blocks = [jnp.pad(b, ((0, 0), (0, Hp - H))) for b in blocks]
    return jnp.concatenate(blocks, axis=1)


# ----------------------------------------------------------------------------
# Fused kernel: all LSTM layers + recurrence + double-run linear head.
# ----------------------------------------------------------------------------
def _make_fused_kernel(num_layers, seq_len, batch_blk, hidden_pad, unroll):
    T, Bb, Hp = seq_len, batch_blk, hidden_pad
    L = num_layers
    n_in = 2 + 3 * L + 3          # x, q, (wih, whh, b)*L, wh, wq, b_out

    def kernel(*refs):
        x_ref, q_ref = refs[0], refs[1]
        layer_refs = refs[2:2 + 3 * L]
        wh_ref, wq_ref, bo_ref = refs[2 + 3 * L:n_in]
        out_ref = refs[n_in]
        scratch = refs[n_in + 1:]
        xproj_scr = scratch[0]                 # (T*Bb, 4*Hp) bf16
        hseq_scr = scratch[1] if L > 1 else None   # (T*Bb, Hp) bf16

        def run_layer(wih_ref, whh_ref, b_ref, inp2, store_seq):
            # (1) Hoisted input projection: one (T*Bb, Din) @ (Din, 4Hp) MXU
            #     matmul, time-independent; stored in bf16.
            xproj_scr[...] = (
                jnp.dot(inp2, wih_ref[...], preferred_element_type=jnp.float32)
                + b_ref[...]).astype(jnp.bfloat16)

            # (2) Serial recurrence: only h_prev @ W_hh on the critical path.
            #     Gate order is [i, f, o, g]: one wide sigmoid + one tanh, all
            #     slices lane-aligned (Hp is a multiple of 128).
            def step(t, carry):
                h_bf, c = carry
                row = pl.multiple_of(t * Bb, Bb)     # Bb is a 16-row multiple
                gates = xproj_scr[pl.ds(row, Bb), :] + jnp.dot(
                    h_bf, whh_ref[...], preferred_element_type=jnp.float32)
                s = jax.nn.sigmoid(gates[:, :3 * Hp])
                g = jnp.tanh(gates[:, 3 * Hp:])
                i_g = s[:, 0 * Hp:1 * Hp]
                f_g = s[:, 1 * Hp:2 * Hp]
                o_g = s[:, 2 * Hp:3 * Hp]
                c = f_g * c + i_g * g
                h_new = (o_g * jnp.tanh(c)).astype(jnp.bfloat16)
                if store_seq:                        # keep h_seq in VMEM only
                    hseq_scr[pl.ds(row, Bb), :] = h_new
                return h_new, c

            h0 = jnp.zeros((Bb, Hp), jnp.bfloat16)
            c0 = jnp.zeros((Bb, Hp), jnp.float32)
            h_last, _ = jax.lax.fori_loop(0, T, step, (h0, c0), unroll=unroll)
            return h_last

        h = None
        for l in range(L):
            wih_ref, whh_ref, b_ref = layer_refs[3 * l:3 * l + 3]
            if l == 0:
                din = x_ref.shape[-1]
                # (T, Bb, Din) -> (T*Bb, Din): Bb % 8 == 0, layout-preserving.
                inp2 = x_ref[...].reshape(T * Bb, din)
            else:
                inp2 = hseq_scr[...]                 # already bf16, no cast
            h = run_layer(wih_ref, whh_ref, b_ref, inp2,
                          store_seq=(l < L - 1))

        # (3) Fused double-run head: h @ W_h computed ONCE; rank-1 quantile
        #     term is a VPU broadcast multiply; both runs written lane-dense.
        base = (jnp.dot(h.astype(jnp.float32), wh_ref[...],
                        preferred_element_type=jnp.float32) + bo_ref[...])
        q = q_ref[...]                               # (Bb, 1)
        wq = wq_ref[...]                             # (1, P_pad)
        out_ref[0] = base + q * wq                   # cat(h, q)       branch
        out_ref[1] = base + (1.0 - q) * wq           # cat(h, 1 - q)   branch

    return kernel


# ----------------------------------------------------------------------------
# Forward wrapper (matches LSTM_Lattice.forward with output_size == 1).
# ----------------------------------------------------------------------------
def lstm_lattice_forward(x, quantile, params, *, double_run=True, valid_run=False):
    # x: (B, T, input_size) batch-first, quantile: (B, 1)
    B, T, Din = x.shape
    H = params["lstm_layers"][0][1].shape[0]          # w_hh_t: (H, 4H)
    P = params["head"][0].shape[1]                    # w_h:    (H, P)
    L = len(params["lstm_layers"])

    Hp = _round_up(H, _LANE)                          # lane-aligned gate blocks
    B_pad = _round_up(max(B, _SUBLANE_BF16), _SUBLANE_BF16)
    P_pad = _round_up(max(P, _LANE), _LANE)           # lane-dense head output

    # Optional batch grid (2 blocks) when each half stays 16-row aligned:
    # lights up v7x's second TensorCore via "parallel"; no-op (1 block) else.
    nb = 2 if (B_pad % (2 * _SUBLANE_BF16) == 0) else 1
    Bb = B_pad // nb

    # Time-major + batch pad once in the wrapper (tiny one-time copy).
    x_tm = jnp.transpose(x, (1, 0, 2)).astype(jnp.bfloat16)
    x_tm = jnp.pad(x_tm, ((0, 0), (0, B_pad - B), (0, 0)))   # (T, B_pad, Din)

    q = quantile[..., 0:1].astype(jnp.float32)        # output_size == 1
    q = jnp.pad(q, ((0, B_pad - B), (0, 0)))          # (B_pad, 1)

    # Weight prep: gate permutation [i,f,g,o] -> [i,f,o,g], per-gate lane pad,
    # contraction-dim pad for deep layers; MXU operands in bf16.
    lstm_w = []
    for li, (w_ih_t, w_hh_t, b) in enumerate(params["lstm_layers"]):
        w_ih = w_ih_t.astype(jnp.float32)
        if li > 0:                                    # input dim H -> Hp
            w_ih = jnp.pad(w_ih, ((0, Hp - H), (0, 0)))
        w_ih = _permute_pad_gate_cols(w_ih, H, Hp).astype(jnp.bfloat16)
        w_hh = jnp.pad(w_hh_t.astype(jnp.float32), ((0, Hp - H), (0, 0)))
        w_hh = _permute_pad_gate_cols(w_hh, H, Hp).astype(jnp.bfloat16)
        bias = _permute_pad_gate_cols(b.astype(jnp.float32), H, Hp)
        lstm_w += [w_ih, w_hh, bias]

    w_h, w_q, b_o = params["head"]
    w_h = jnp.pad(w_h.astype(jnp.float32), ((0, Hp - H), (0, P_pad - P)))
    w_q = jnp.pad(w_q.astype(jnp.float32), ((0, 0), (0, P_pad - P)))
    b_o = jnp.pad(b_o.astype(jnp.float32), ((0, 0), (0, P_pad - P)))

    args = [x_tm, q] + lstm_w + [w_h, w_q, b_o]

    in_specs = [
        pl.BlockSpec((T, Bb, Din), lambda b: (0, b, 0)),
        pl.BlockSpec((Bb, 1), lambda b: (b, 0)),
    ] + [_const_spec(a.shape) for a in lstm_w + [w_h, w_q, b_o]]
    out_spec = pl.BlockSpec((2, Bb, P_pad), lambda b: (0, b, 0))

    scratch_shapes = [pltpu.VMEM((T * Bb, 4 * Hp), jnp.bfloat16)]
    if L > 1:
        scratch_shapes.append(pltpu.VMEM((T * Bb, Hp), jnp.bfloat16))

    # Explicit VMEM budget: inputs/weights/output (x2 for double buffering)
    # + scratch + headroom; clamp to physical-ish ceiling.
    io_bytes = sum(int(a.size) * a.dtype.itemsize for a in args)
    io_bytes += 2 * B_pad * P_pad * 4
    scratch_bytes = T * Bb * 4 * Hp * 2 + (T * Bb * Hp * 2 if L > 1 else 0)
    vmem_limit = int(2 * io_bytes + scratch_bytes + (4 << 20))
    vmem_limit = min(max(vmem_limit, 32 << 20), 128 << 20)

    unroll = T if T <= 16 else 4                      # partial unroll for long T

    kernel = _make_fused_kernel(L, T, Bb, Hp, unroll)
    out = pl.pallas_call(
        kernel,
        out_shape=jax.ShapeDtypeStruct((2, B_pad, P_pad), jnp.float32),
        grid=(nb,),
        in_specs=in_specs,
        out_specs=out_spec,
        scratch_shapes=scratch_shapes,
        compiler_params=pltpu.CompilerParams(
            dimension_semantics=("parallel",),
            vmem_limit_bytes=vmem_limit),
    )(*args)

    out1 = out[0, :B, :P]
    if double_run and not valid_run:
        return jnp.stack([out1, out[1, :B, :P]], axis=-1)   # (B, P, 2)
    return out1[..., None]                                   # (B, P, 1)


# ----------------------------------------------------------------------------
# Parameter init (PyTorch nn.LSTM / nn.Linear style uniform init).
# ----------------------------------------------------------------------------
def init_params(key, input_size, hidden_size, num_layers, pred_length):
    params = {"lstm_layers": []}
    scale = 1.0 / jnp.sqrt(hidden_size)
    for layer in range(num_layers):
        d_in = input_size if layer == 0 else hidden_size
        key, k1, k2, k3, k4 = jax.random.split(key, 5)
        w_ih = jax.random.uniform(k1, (4 * hidden_size, d_in), jnp.float32, -scale, scale)
        w_hh = jax.random.uniform(k2, (4 * hidden_size, hidden_size), jnp.float32, -scale, scale)
        b_ih = jax.random.uniform(k3, (4 * hidden_size,), jnp.float32, -scale, scale)
        b_hh = jax.random.uniform(k4, (4 * hidden_size,), jnp.float32, -scale, scale)
        params["lstm_layers"].append(
            (w_ih.T, w_hh.T, (b_ih + b_hh).reshape(1, 4 * hidden_size)))
    # Linear(hidden_size + 1 -> pred_length); split weight into h-part / q-part.
    key, k1, k2 = jax.random.split(key, 3)
    lscale = 1.0 / jnp.sqrt(hidden_size + 1)
    w = jax.random.uniform(k1, (pred_length, hidden_size + 1), jnp.float32, -lscale, lscale)
    b = jax.random.uniform(k2, (pred_length,), jnp.float32, -lscale, lscale)
    params["head"] = (w[:, :hidden_size].T,               # (H, P)
                      w[:, hidden_size:].T,               # (1, P)
                      b.reshape(1, pred_length))          # (1, P)
    return params


# ----------------------------------------------------------------------------
# Pure-JAX reference (f32) for correctness checking.
# ----------------------------------------------------------------------------
def _reference_forward(x, quantile, params, *, double_run=True, valid_run=False):
    h_seq = jnp.transpose(x, (1, 0, 2)).astype(jnp.float32)   # (T, B, D)
    for (w_ih_t, w_hh_t, b) in params["lstm_layers"]:
        _, B_, _ = h_seq.shape
        Hh = w_hh_t.shape[0]

        def step(carry, x_t):
            h, c = carry
            gates = x_t @ w_ih_t + h @ w_hh_t + b
            i = jax.nn.sigmoid(gates[:, 0 * Hh:1 * Hh])
            f = jax.nn.sigmoid(gates[:, 1 * Hh:2 * Hh])
            g = jnp.tanh(gates[:, 2 * Hh:3 * Hh])
            o = jax.nn.sigmoid(gates[:, 3 * Hh:4 * Hh])
            c = f * c + i * g
            h = o * jnp.tanh(c)
            return (h, c), h

        zeros = jnp.zeros((B_, Hh), jnp.float32)
        (_, _), h_seq = jax.lax.scan(step, (zeros, zeros), h_seq)
    h_last = h_seq[-1]
    w_h, w_q, b_o = params["head"]
    q = quantile[..., 0:1].astype(jnp.float32)
    o1 = h_last @ w_h + q @ w_q + b_o
    if double_run and not valid_run:
        o2 = h_last @ w_h + (1.0 - q) @ w_q + b_o
        return jnp.stack([o1, o2], axis=-1)
    return o1[..., None]


if __name__ == "__main__":
    B, T, D_IN, H, NUM_LAYERS, P = 2, 8, 8, 32, 2, 4

    key = jax.random.PRNGKey(0)
    key, kx, kq, kp = jax.random.split(key, 4)
    x = jax.random.normal(kx, (B, T, D_IN), jnp.float32)
    quantile = jax.random.uniform(kq, (B, 1), jnp.float32)

    params = init_params(kp, D_IN, H, NUM_LAYERS, P)

    fwd = jax.jit(functools.partial(lstm_lattice_forward,
                                    double_run=True, valid_run=False))
    out = fwd(x, quantile, params)
    jax.block_until_ready(out)

    assert out.shape == (B, P, 2), out.shape
    assert bool(jnp.all(jnp.isfinite(out)))

    ref = _reference_forward(x, quantile, params, double_run=True, valid_run=False)
    max_err = float(jnp.max(jnp.abs(out - ref)))
    assert jnp.allclose(out, ref, atol=5e-2, rtol=5e-2), max_err

    print("KERNEL_OK")
</pallas_src>

<mosaic_0001>
module attributes {stable_mosaic.version = 11 : i64} {
  func.func @kernel(%arg0: i32, %arg1: memref<8x16x8xbf16, #tpu.memory_space<vmem>>, %arg2: memref<16x1xf32, #tpu.memory_space<vmem>>, %arg3: memref<8x512xbf16, #tpu.memory_space<vmem>>, %arg4: memref<128x512xbf16, #tpu.memory_space<vmem>>, %arg5: memref<1x512xf32, #tpu.memory_space<vmem>>, %arg6: memref<128x512xbf16, #tpu.memory_space<vmem>>, %arg7: memref<128x512xbf16, #tpu.memory_space<vmem>>, %arg8: memref<1x512xf32, #tpu.memory_space<vmem>>, %arg9: memref<128x128xf32, #tpu.memory_space<vmem>>, %arg10: memref<1x128xf32, #tpu.memory_space<vmem>>, %arg11: memref<1x128xf32, #tpu.memory_space<vmem>>, %arg12: memref<2x16x128xf32, #tpu.memory_space<vmem>>, %arg13: memref<128x512xbf16, #tpu.memory_space<vmem>>, %arg14: memref<128x128xbf16, #tpu.memory_space<vmem>>) attributes {dimension_semantics = [#tpu.dimension_semantics<parallel>], iteration_bounds = array<i64: 1>, scalar_prefetch = 0 : i64, scratch_operands = 2 : i64, tpu.core_type = #tpu.core_type<tc>, window_params = [{transform_indices = @transform_0, window_bounds = array<i64: 8, 16, 8>}, {transform_indices = @transform_1, window_bounds = array<i64: 16, 1>}, {pipeline_mode = #tpu.pipeline_mode<synchronous>, transform_indices = @transform_2, window_bounds = array<i64: 8, 512>}, {pipeline_mode = #tpu.pipeline_mode<synchronous>, transform_indices = @transform_3, window_bounds = array<i64: 128, 512>}, {pipeline_mode = #tpu.pipeline_mode<synchronous>, transform_indices = @transform_4, window_bounds = array<i64: 1, 512>}, {pipeline_mode = #tpu.pipeline_mode<synchronous>, transform_indices = @transform_5, window_bounds = array<i64: 128, 512>}, {pipeline_mode = #tpu.pipeline_mode<synchronous>, transform_indices = @transform_6, window_bounds = array<i64: 128, 512>}, {pipeline_mode = #tpu.pipeline_mode<synchronous>, transform_indices = @transform_7, window_bounds = array<i64: 1, 512>}, {pipeline_mode = #tpu.pipeline_mode<synchronous>, transform_indices = @transform_8, window_bounds = array<i64: 128, 128>}, {pipeline_mode = #tpu.pipeline_mode<synchronous>, transform_indices = @transform_9, window_bounds = array<i64: 1, 128>}, {pipeline_mode = #tpu.pipeline_mode<synchronous>, transform_indices = @transform_10, window_bounds = array<i64: 1, 128>}, {transform_indices = @transform_11, window_bounds = array<i64: 2, 16, 128>}]} {
    %c0 = arith.constant 0 : index
    %c0_0 = arith.constant 0 : index
    %c0_1 = arith.constant 0 : index
    %0 = vector.load %arg1[%c0, %c0_0, %c0_1] : memref<8x16x8xbf16, #tpu.memory_space<vmem>>, vector<8x16x8xbf16>
    %1 = vector.shape_cast %0 : vector<8x16x8xbf16> to vector<128x8xbf16>
    %c0_2 = arith.constant 0 : index
    %c0_3 = arith.constant 0 : index
    %2 = vector.load %arg3[%c0_2, %c0_3] : memref<8x512xbf16, #tpu.memory_space<vmem>>, vector<8x512xbf16>
    %cst = arith.constant dense<0.000000e+00> : vector<128x512xf32>
    %3 = tpu.matmul %1, %2, %cst {dimension_numbers = #tpu.dot_dimension_numbers<[1], [0], [0], [1], [0, 0, 1, 1], [], []>} : vector<128x8xbf16>, vector<8x512xbf16>, vector<128x512xf32> -> vector<128x512xf32>
    %c0_4 = arith.constant 0 : index
    %c0_5 = arith.constant 0 : index
    %4 = vector.load %arg5[%c0_4, %c0_5] : memref<1x512xf32, #tpu.memory_space<vmem>>, vector<1x512xf32>
    %5 = vector.broadcast %4 : vector<1x512xf32> to vector<128x512xf32>
    %6 = arith.addf %3, %5 : vector<128x512xf32>
    %7 = arith.truncf %6 : vector<128x512xf32> to vector<128x512xbf16>
    %c0_6 = arith.constant 0 : index
    %c0_7 = arith.constant 0 : index
    %8 = vector.load %arg13[%c0_6, %c0_7] : memref<128x512xbf16, #tpu.memory_space<vmem>>, vector<128x512xbf16>
    tpu.vector_store %arg13[%c0_6, %c0_7], %7 {strides = array<i32>} : memref<128x512xbf16, #tpu.memory_space<vmem>>, vector<128x512xbf16>,
    %cst_8 = arith.constant 0.000000e+00 : bf16
    %9 = vector.broadcast %cst_8 : bf16 to vector<16x128xbf16>
    %cst_9 = arith.constant 0.000000e+00 : f32
    %10 = vector.broadcast %cst_9 : f32 to vector<16x128xf32>
    %c0_i32 = arith.constant 0 : i32
    %c16_i32 = arith.constant 16 : i32
    %11 = arith.muli %c0_i32, %c16_i32 : i32
    %12 = tpu.assume_multiple %11, 16 : i32
    %13 = arith.index_cast %12 : i32 to index
    %c0_10 = arith.constant 0 : index
    %14 = vector.load %arg13[%13, %c0_10] : memref<128x512xbf16, #tpu.memory_space<vmem>>, vector<16x512xbf16>
    %c0_11 = arith.constant 0 : index
    %c0_12 = arith.constant 0 : index
    %15 = vector.load %arg4[%c0_11, %c0_12] : memref<128x512xbf16, #tpu.memory_space<vmem>>, vector<128x512xbf16>
    %cst_13 = arith.constant dense<0.000000e+00> : vector<16x512xf32>
    %16 = tpu.matmul %9, %15, %cst_13 {dimension_numbers = #tpu.dot_dimension_numbers<[1], [0], [0], [1], [0, 0, 1, 1], [], []>} : vector<16x128xbf16>, vector<128x512xbf16>, vector<16x512xf32> -> vector<16x512xf32>
    %17 = arith.extf %14 : vector<16x512xbf16> to vector<16x512xf32>
    %18 = arith.addf %17, %16 : vector<16x512xf32>
    %19 = vector.extract_strided_slice %18 {offsets = [0, 0], sizes = [16, 384], strides = [1, 1]} : vector<16x512xf32> to vector<16x384xf32>
    %20 = arith.negf %19 : vector<16x384xf32>
    %21 = math.exp %20 : vector<16x384xf32>
    %cst_14 = arith.constant 1.000000e+00 : f32
    %22 = vector.broadcast %cst_14 : f32 to vector<16x384xf32>
    %23 = arith.addf %22, %21 : vector<16x384xf32>
    %24 = arith.divf %22, %23 : vector<16x384xf32>
    %25 = vector.extract_strided_slice %18 {offsets = [0, 384], sizes = [16, 128], strides = [1, 1]} : vector<16x512xf32> to vector<16x128xf32>
    %26 = math.tanh %25 : vector<16x128xf32>
    %27 = vector.extract_strided_slice %24 {offsets = [0, 0], sizes = [16, 128], strides = [1, 1]} : vector<16x384xf32> to vector<16x128xf32>
    %28 = vector.extract_strided_slice %24 {offsets = [0, 128], sizes = [16, 128], strides = [1, 1]} : vector<16x384xf32> to vector<16x128xf32>
    %29 = vector.extract_strided_slice %24 {offsets = [0, 256], sizes = [16, 128], strides = [1, 1]} : vector<16x384xf32> to vector<16x128xf32>
    %30 = arith.mulf %28, %10 : vector<16x128xf32>
    %31 = arith.mulf %27, %26 : vector<16x128xf32>
    %32 = arith.addf %30, %31 : vector<16x128xf32>
    %33 = math.tanh %32 : vector<16x128xf32>
    %34 = arith.mulf %29, %33 : vector<16x128xf32>
    %35 = arith.truncf %34 : vector<16x128xf32> to vector<16x128xbf16>
    %36 = arith.index_cast %12 : i32 to index
    %c0_15 = arith.constant 0 : index
    %37 = vector.load %arg14[%36, %c0_15] : memref<128x128xbf16, #tpu.memory_space<vmem>>, vector<16x128xbf16>
    tpu.vector_store %arg14[%36, %c0_15], %35 {strides = array<i32>} : memref<128x128xbf16, #tpu.memory_space<vmem>>, vector<16x128xbf16>,
    %c1_i32 = arith.constant 1 : i32
    %c16_i32_16 = arith.constant 16 : i32
    %38 = arith.muli %c1_i32, %c16_i32_16 : i32
    %39 = tpu.assume_multiple %38, 16 : i32
    %40 = arith.index_cast %39 : i32 to index
    %c0_17 = arith.constant 0 : index
    %41 = vector.load %arg13[%40, %c0_17] : memref<128x512xbf16, #tpu.memory_space<vmem>>, vector<16x512xbf16>
    %c0_18 = arith.constant 0 : index
    %c0_19 = arith.constant 0 : index
    %42 = vector.load %arg4[%c0_18, %c0_19] : memref<128x512xbf16, #tpu.memory_space<vmem>>, vector<128x512xbf16>
    %cst_20 = arith.constant dense<0.000000e+00> : vector<16x512xf32>
    %43 = tpu.matmul %35, %42, %cst_20 {dimension_numbers = #tpu.dot_dimension_numbers<[1], [0], [0], [1], [0, 0, 1, 1], [], []>} : vector<16x128xbf16>, vector<128x512xbf16>, vector<16x512xf32> -> vector<16x512xf32>
    %44 = arith.extf %41 : vector<16x512xbf16> to vector<16x512xf32>
    %45 = arith.addf %44, %43 : vector<16x512xf32>
    %46 = vector.extract_strided_slice %45 {offsets = [0, 0], sizes = [16, 384], strides = [1, 1]} : vector<16x512xf32> to vector<16x384xf32>
    %47 = arith.negf %46 : vector<16x384xf32>
    %48 = math.exp %47 : vector<16x384xf32>
    %cst_21 = arith.constant 1.000000e+00 : f32
    %49 = vector.broadcast %cst_21 : f32 to vector<16x384xf32>
    %50 = arith.addf %49, %48 : vector<16x384xf32>
    %51 = arith.divf %49, %50 : vector<16x384xf32>
    %52 = vector.extract_strided_slice %45 {offsets = [0, 384], sizes = [16, 128], strides = [1, 1]} : vector<16x512xf32> to vector<16x128xf32>
    %53 = math.tanh %52 : vector<16x128xf32>
    %54 = vector.extract_strided_slice %51 {offsets = [0, 0], sizes = [16, 128], strides = [1, 1]} : vector<16x384xf32> to vector<16x128xf32>
    %55 = vector.extract_strided_slice %51 {offsets = [0, 128], sizes = [16, 128], strides = [1, 1]} : vector<16x384xf32> to vector<16x128xf32>
    %56 = vector.extract_strided_slice %51 {offsets = [0, 256], sizes = [16, 128], strides = [1, 1]} : vector<16x384xf32> to vector<16x128xf32>
    %57 = arith.mulf %55, %32 : vector<16x128xf32>
    %58 = arith.mulf %54, %53 : vector<16x128xf32>
    %59 = arith.addf %57, %58 : vector<16x128xf32>
    %60 = math.tanh %59 : vector<16x128xf32>
    %61 = arith.mulf %56, %60 : vector<16x128xf32>
    %62 = arith.truncf %61 : vector<16x128xf32> to vector<16x128xbf16>
    %63 = arith.index_cast %39 : i32 to index
    %c0_22 = arith.constant 0 : index
    %64 = vector.load %arg14[%63, %c0_22] : memref<128x128xbf16, #tpu.memory_space<vmem>>, vector<16x128xbf16>
    tpu.vector_store %arg14[%63, %c0_22], %62 {strides = array<i32>} : memref<128x128xbf16, #tpu.memory_space<vmem>>, vector<16x128xbf16>,
    %c2_i32 = arith.constant 2 : i32
    %c16_i32_23 = arith.constant 16 : i32
    %65 = arith.muli %c2_i32, %c16_i32_23 : i32
    %66 = tpu.assume_multiple %65, 16 : i32
    %67 = arith.index_cast %66 : i32 to index
    %c0_24 = arith.constant 0 : index
    %68 = vector.load %arg13[%67, %c0_24] : memref<128x512xbf16, #tpu.memory_space<vmem>>, vector<16x512xbf16>
    %c0_25 = arith.constant 0 : index
    %c0_26 = arith.constant 0 : index
    %69 = vector.load %arg4[%c0_25, %c0_26] : memref<128x512xbf16, #tpu.memory_space<vmem>>, vector<128x512xbf16>
    %cst_27 = arith.constant dense<0.000000e+00> : vector<16x512xf32>
    %70 = tpu.matmul %62, %69, %cst_27 {dimension_numbers = #tpu.dot_dimension_numbers<[1], [0], [0], [1], [0, 0, 1, 1], [], []>} : vector<16x128xbf16>, vector<128x512xbf16>, vector<16x512xf32> -> vector<16x512xf32>
    %71 = arith.extf %68 : vector<16x512xbf16> to vector<16x512xf32>
    %72 = arith.addf %71, %70 : vector<16x512xf32>
    %73 = vector.extract_strided_slice %72 {offsets = [0, 0], sizes = [16, 384], strides = [1, 1]} : vector<16x512xf32> to vector<16x384xf32>
    %74 = arith.negf %73 : vector<16x384xf32>
    %75 = math.exp %74 : vector<16x384xf32>
    %cst_28 = arith.constant 1.000000e+00 : f32
    %76 = vector.broadcast %cst_28 : f32 to vector<16x384xf32>
    %77 = arith.addf %76, %75 : vector<16x384xf32>
    %78 = arith.divf %76, %77 : vector<16x384xf32>
    %79 = vector.extract_strided_slice %72 {offsets = [0, 384], sizes = [16, 128], strides = [1, 1]} : vector<16x512xf32> to vector<16x128xf32>
    %80 = math.tanh %79 : vector<16x128xf32>
    %81 = vector.extract_strided_slice %78 {offsets = [0, 0], sizes = [16, 128], strides = [1, 1]} : vector<16x384xf32> to vector<16x128xf32>
    %82 = vector.extract_strided_slice %78 {offsets = [0, 128], sizes = [16, 128], strides = [1, 1]} : vector<16x384xf32> to vector<16x128xf32>
    %83 = vector.extract_strided_slice %78 {offsets = [0, 256], sizes = [16, 128], strides = [1, 1]} : vector<16x384xf32> to vector<16x128xf32>
    %84 = arith.mulf %82, %59 : vector<16x128xf32>
    %85 = arith.mulf %81, %80 : vector<16x128xf32>
    %86 = arith.addf %84, %85 : vector<16x128xf32>
    %87 = math.tanh %86 : vector<16x128xf32>
    %88 = arith.mulf %83, %87 : vector<16x128xf32>
    %89 = arith.truncf %88 : vector<16x128xf32> to vector<16x128xbf16>
    %90 = arith.index_cast %66 : i32 to index
    %c0_29 = arith.constant 0 : index
    %91 = vector.load %arg14[%90, %c0_29] : memref<128x128xbf16, #tpu.memory_space<vmem>>, vector<16x128xbf16>
    tpu.vector_store %arg14[%90, %c0_29], %89 {strides = array<i32>} : memref<128x128xbf16, #tpu.memory_space<vmem>>, vector<16x128xbf16>,
    %c3_i32 = arith.constant 3 : i32
    %c16_i32_30 = arith.constant 16 : i32
    %92 = arith.muli %c3_i32, %c16_i32_30 : i32
    %93 = tpu.assume_multiple %92, 16 : i32
    %94 = arith.index_cast %93 : i32 to index
    %c0_31 = arith.constant 0 : index
    %95 = vector.load %arg13[%94, %c0_31] : memref<128x512xbf16, #tpu.memory_space<vmem>>, vector<16x512xbf16>
    %c0_32 = arith.constant 0 : index
    %c0_33 = arith.constant 0 : index
    %96 = vector.load %arg4[%c0_32, %c0_33] : memref<128x512xbf16, #tpu.memory_space<vmem>>, vector<128x512xbf16>
    %cst_34 = arith.constant dense<0.000000e+00> : vector<16x512xf32>
    %97 = tpu.matmul %89, %96, %cst_34 {dimension_numbers = #tpu.dot_dimension_numbers<[1], [0], [0], [1], [0, 0, 1, 1], [], []>} : vector<16x128xbf16>, vector<128x512xbf16>, vector<16x512xf32> -> vector<16x512xf32>
    %98 = arith.extf %95 : vector<16x512xbf16> to vector<16x512xf32>
    %99 = arith.addf %98, %97 : vector<16x512xf32>
    %100 = vector.extract_strided_slice %99 {offsets = [0, 0], sizes = [16, 384], strides = [1, 1]} : vector<16x512xf32> to vector<16x384xf32>
    %101 = arith.negf %100 : vector<16x384xf32>
    %102 = math.exp %101 : vector<16x384xf32>
    %cst_35 = arith.constant 1.000000e+00 : f32
    %103 = vector.broadcast %cst_35 : f32 to vector<16x384xf32>
    %104 = arith.addf %103, %102 : vector<16x384xf32>
    %105 = arith.divf %103, %104 : vector<16x384xf32>
    %106 = vector.extract_strided_slice %99 {offsets = [0, 384], sizes = [16, 128], strides = [1, 1]} : vector<16x512xf32> to vector<16x128xf32>
    %107 = math.tanh %106 : vector<16x128xf32>
    %108 = vector.extract_strided_slice %105 {offsets = [0, 0], sizes = [16, 128], strides = [1, 1]} : vector<16x384xf32> to vector<16x128xf32>
    %109 = vector.extract_strided_slice %105 {offsets = [0, 128], sizes = [16, 128], strides = [1, 1]} : vector<16x384xf32> to vector<16x128xf32>
    %110 = vector.extract_strided_slice %105 {offsets = [0, 256], sizes = [16, 128], strides = [1, 1]} : vector<16x384xf32> to vector<16x128xf32>
    %111 = arith.mulf %109, %86 : vector<16x128xf32>
    %112 = arith.mulf %108, %107 : vector<16x128xf32>
    %113 = arith.addf %111, %112 : vector<16x128xf32>
    %114 = math.tanh %113 : vector<16x128xf32>
    %115 = arith.mulf %110, %114 : vector<16x128xf32>
    %116 = arith.truncf %115 : vector<16x128xf32> to vector<16x128xbf16>
    %117 = arith.index_cast %93 : i32 to index
    %c0_36 = arith.constant 0 : index
    %118 = vector.load %arg14[%117, %c0_36] : memref<128x128xbf16, #tpu.memory_space<vmem>>, vector<16x128xbf16>
    tpu.vector_store %arg14[%117, %c0_36], %116 {strides = array<i32>} : memref<128x128xbf16, #tpu.memory_space<vmem>>, vector<16x128xbf16>,
    %c4_i32 = arith.constant 4 : i32
    %c16_i32_37 = arith.constant 16 : i32
    %119 = arith.muli %c4_i32, %c16_i32_37 : i32
    %120 = tpu.assume_multiple %119, 16 : i32
    %121 = arith.index_cast %120 : i32 to index
    %c0_38 = arith.constant 0 : index
    %122 = vector.load %arg13[%121, %c0_38] : memref<128x512xbf16, #tpu.memory_space<vmem>>, vector<16x512xbf16>
    %c0_39 = arith.constant 0 : index
    %c0_40 = arith.constant 0 : index
    %123 = vector.load %arg4[%c0_39, %c0_40] : memref<128x512xbf16, #tpu.memory_space<vmem>>, vector<128x512xbf16>
    %cst_41 = arith.constant dense<0.000000e+00> : vector<16x512xf32>
    %124 = tpu.matmul %116, %123, %cst_41 {dimension_numbers = #tpu.dot_dimension_numbers<[1], [0], [0], [1], [0, 0, 1, 1], [], []>} : vector<16x128xbf16>, vector<128x512xbf16>, vector<16x512xf32> -> vector<16x512xf32>
    %125 = arith.extf %122 : vector<16x512xbf16> to vector<16x512xf32>
    %126 = arith.addf %125, %124 : vector<16x512xf32>
    %127 = vector.extract_strided_slice %126 {offsets = [0, 0], sizes = [16, 384], strides = [1, 1]} : vector<16x512xf32> to vector<16x384xf32>
    %128 = arith.negf %127 : vector<16x384xf32>
    %129 = math.exp %128 : vector<16x384xf32>
    %cst_42 = arith.constant 1.000000e+00 : f32
    %130 = vector.broadcast %cst_42 : f32 to vector<16x384xf32>
    %131 = arith.addf %130, %129 : vector<16x384xf32>
    %132 = arith.divf %130, %131 : vector<16x384xf32>
    %133 = vector.extract_strided_slice %126 {offsets = [0, 384], sizes = [16, 128], strides = [1, 1]} : vector<16x512xf32> to vector<16x128xf32>
    %134 = math.tanh %133 : vector<16x128xf32>
    %135 = vector.extract_strided_slice %132 {offsets = [0, 0], sizes = [16, 128], strides = [1, 1]} : vector<16x384xf32> to vector<16x128xf32>
    %136 = vector.extract_strided_slice %132 {offsets = [0, 128], sizes = [16, 128], strides = [1, 1]} : vector<16x384xf32> to vector<16x128xf32>
    %137 = vector.extract_strided_slice %132 {offsets = [0, 256], sizes = [16, 128], strides = [1, 1]} : vector<16x384xf32> to vector<16x128xf32>
    %138 = arith.mulf %136, %113 : vector<16x128xf32>
    %139 = arith.mulf %135, %134 : vector<16x128xf32>
    %140 = arith.addf %138, %139 : vector<16x128xf32>
    %141 = math.tanh %140 : vector<16x128xf32>
    %142 = arith.mulf %137, %141 : vector<16x128xf32>
    %143 = arith.truncf %142 : vector<16x128xf32> to vector<16x128xbf16>
    %144 = arith.index_cast %120 : i32 to index
    %c0_43 = arith.constant 0 : index
    %145 = vector.load %arg14[%144, %c0_43] : memref<128x128xbf16, #tpu.memory_space<vmem>>, vector<16x128xbf16>
    tpu.vector_store %arg14[%144, %c0_43], %143 {strides = array<i32>} : memref<128x128xbf16, #tpu.memory_space<vmem>>, vector<16x128xbf16>,
    %c5_i32 = arith.constant 5 : i32
    %c16_i32_44 = arith.constant 16 : i32
    %146 = arith.muli %c5_i32, %c16_i32_44 : i32
    %147 = tpu.assume_multiple %146, 16 : i32
    %148 = arith.index_cast %147 : i32 to index
    %c0_45 = arith.constant 0 : index
    %149 = vector.load %arg13[%148, %c0_45] : memref<128x512xbf16, #tpu.memory_space<vmem>>, vector<16x512xbf16>
    %c0_46 = arith.constant 0 : index
    %c0_47 = arith.constant 0 : index
    %150 = vector.load %arg4[%c0_46, %c0_47] : memref<128x512xbf16, #tpu.memory_space<vmem>>, vector<128x512xbf16>
    %cst_48 = arith.constant dense<0.000000e+00> : vector<16x512xf32>
    %151 = tpu.matmul %143, %150, %cst_48 {dimension_numbers = #tpu.dot_dimension_numbers<[1], [0], [0], [1], [0, 0, 1, 1], [], []>} : vector<16x128xbf16>, vector<128x512xbf16>, vector<16x512xf32> -> vector<16x512xf32>
    %152 = arith.extf %149 : vector<16x512xbf16> to vector<16x512xf32>
    %153 = arith.addf %152, %151 : vector<16x512xf32>
    %154 = vector.extract_strided_slice %153 {offsets = [0, 0], sizes = [16, 384], strides = [1, 1]} : vector<16x512xf32> to vector<16x384xf32>
    %155 = arith.negf %154 : vector<16x384xf32>
    %156 = math.exp %155 : vector<16x384xf32>
    %cst_49 = arith.constant 1.000000e+00 : f32
    %157 = vector.broadcast %cst_49 : f32 to vector<16x384xf32>
    %158 = arith.addf %157, %156 : vector<16x384xf32>
    %159 = arith.divf %157, %158 : vector<16x384xf32>
    %160 = vector.extract_strided_slice %153 {offsets = [0, 384], sizes = [16, 128], strides = [1, 1]} : vector<16x512xf32> to vector<16x128xf32>
    %161 = math.tanh %160 : vector<16x128xf32>
    %162 = vector.extract_strided_slice %159 {offsets = [0, 0], sizes = [16, 128], strides = [1, 1]} : vector<16x384xf32> to vector<16x128xf32>
    %163 = vector.extract_strided_slice %159 {offsets = [0, 128], sizes = [16, 128], strides = [1, 1]} : vector<16x384xf32> to vector<16x128xf32>
    %164 = vector.extract_strided_slice %159 {offsets = [0, 256], sizes = [16, 128], strides = [1, 1]} : vector<16x384xf32> to vector<16x128xf32>
    %165 = arith.mulf %163, %140 : vector<16x128xf32>
    %166 = arith.mulf %162, %161 : vector<16x128xf32>
    %167 = arith.addf %165, %166 : vector<16x128xf32>
    %168 = math.tanh %167 : vector<16x128xf32>
    %169 = arith.mulf %164, %168 : vector<16x128xf32>
    %170 = arith.truncf %169 : vector<16x128xf32> to vector<16x128xbf16>
    %171 = arith.index_cast %147 : i32 to index
    %c0_50 = arith.constant 0 : index
    %172 = vector.load %arg14[%171, %c0_50] : memref<128x128xbf16, #tpu.memory_space<vmem>>, vector<16x128xbf16>
    tpu.vector_store %arg14[%171, %c0_50], %170 {strides = array<i32>} : memref<128x128xbf16, #tpu.memory_space<vmem>>, vector<16x128xbf16>,
    %c6_i32 = arith.constant 6 : i32
    %c16_i32_51 = arith.constant 16 : i32
    %173 = arith.muli %c6_i32, %c16_i32_51 : i32
    %174 = tpu.assume_multiple %173, 16 : i32
    %175 = arith.index_cast %174 : i32 to index
    %c0_52 = arith.constant 0 : index
    %176 = vector.load %arg13[%175, %c0_52] : memref<128x512xbf16, #tpu.memory_space<vmem>>, vector<16x512xbf16>
    %c0_53 = arith.constant 0 : index
    %c0_54 = arith.constant 0 : index
    %177 = vector.load %arg4[%c0_53, %c0_54] : memref<128x512xbf16, #tpu.memory_space<vmem>>, vector<128x512xbf16>
    %cst_55 = arith.constant dense<0.000000e+00> : vector<16x512xf32>
    %178 = tpu.matmul %170, %177, %cst_55 {dimension_numbers = #tpu.dot_dimension_numbers<[1], [0], [0], [1], [0, 0, 1, 1], [], []>} : vector<16x128xbf16>, vector<128x512xbf16>, vector<16x512xf32> -> vector<16x512xf32>
    %179 = arith.extf %176 : vector<16x512xbf16> to vector<16x512xf32>
    %180 = arith.addf %179, %178 : vector<16x512xf32>
    %181 = vector.extract_strided_slice %180 {offsets = [0, 0], sizes = [16, 384], strides = [1, 1]} : vector<16x512xf32> to vector<16x384xf32>
    %182 = arith.negf %181 : vector<16x384xf32>
    %183 = math.exp %182 : vector<16x384xf32>
    %cst_56 = arith.constant 1.000000e+00 : f32
    %184 = vector.broadcast %cst_56 : f32 to vector<16x384xf32>
    %185 = arith.addf %184, %183 : vector<16x384xf32>
    %186 = arith.divf %184, %185 : vector<16x384xf32>
    %187 = vector.extract_strided_slice %180 {offsets = [0, 384], sizes = [16, 128], strides = [1, 1]} : vector<16x512xf32> to vector<16x128xf32>
    %188 = math.tanh %187 : vector<16x128xf32>
    %189 = vector.extract_strided_slice %186 {offsets = [0, 0], sizes = [16, 128], strides = [1, 1]} : vector<16x384xf32> to vector<16x128xf32>
    %190 = vector.extract_strided_slice %186 {offsets = [0, 128], sizes = [16, 128], strides = [1, 1]} : vector<16x384xf32> to vector<16x128xf32>
    %191 = vector.extract_strided_slice %186 {offsets = [0, 256], sizes = [16, 128], strides = [1, 1]} : vector<16x384xf32> to vector<16x128xf32>
    %192 = arith.mulf %190, %167 : vector<16x128xf32>
    %193 = arith.mulf %189, %188 : vector<16x128xf32>
    %194 = arith.addf %192, %193 : vector<16x128xf32>
    %195 = math.tanh %194 : vector<16x128xf32>
    %196 = arith.mulf %191, %195 : vector<16x128xf32>
    %197 = arith.truncf %196 : vector<16x128xf32> to vector<16x128xbf16>
    %198 = arith.index_cast %174 : i32 to index
    %c0_57 = arith.constant 0 : index
    %199 = vector.load %arg14[%198, %c0_57] : memref<128x128xbf16, #tpu.memory_space<vmem>>, vector<16x128xbf16>
    tpu.vector_store %arg14[%198, %c0_57], %197 {strides = array<i32>} : memref<128x128xbf16, #tpu.memory_space<vmem>>, vector<16x128xbf16>,
    %c7_i32 = arith.constant 7 : i32
    %c16_i32_58 = arith.constant 16 : i32
    %200 = arith.muli %c7_i32, %c16_i32_58 : i32
    %201 = tpu.assume_multiple %200, 16 : i32
    %202 = arith.index_cast %201 : i32 to index
    %c0_59 = arith.constant 0 : index
    %203 = vector.load %arg13[%202, %c0_59] : memref<128x512xbf16, #tpu.memory_space<vmem>>, vector<16x512xbf16>
    %c0_60 = arith.constant 0 : index
    %c0_61 = arith.constant 0 : index
    %204 = vector.load %arg4[%c0_60, %c0_61] : memref<128x512xbf16, #tpu.memory_space<vmem>>, vector<128x512xbf16>
    %cst_62 = arith.constant dense<0.000000e+00> : vector<16x512xf32>
    %205 = tpu.matmul %197, %204, %cst_62 {dimension_numbers = #tpu.dot_dimension_numbers<[1], [0], [0], [1], [0, 0, 1, 1], [], []>} : vector<16x128xbf16>, vector<128x512xbf16>, vector<16x512xf32> -> vector<16x512xf32>
    %206 = arith.extf %203 : vector<16x512xbf16> to vector<16x512xf32>
    %207 = arith.addf %206, %205 : vector<16x512xf32>
    %208 = vector.extract_strided_slice %207 {offsets = [0, 0], sizes = [16, 384], strides = [1, 1]} : vector<16x512xf32> to vector<16x384xf32>
    %209 = arith.negf %208 : vector<16x384xf32>
    %210 = math.exp %209 : vector<16x384xf32>
    %cst_63 = arith.constant 1.000000e+00 : f32
    %211 = vector.broadcast %cst_63 : f32 to vector<16x384xf32>
    %212 = arith.addf %211, %210 : vector<16x384xf32>
    %213 = arith.divf %211, %212 : vector<16x384xf32>
    %214 = vector.extract_strided_slice %207 {offsets = [0, 384], sizes = [16, 128], strides = [1, 1]} : vector<16x512xf32> to vector<16x128xf32>
    %215 = math.tanh %214 : vector<16x128xf32>
    %216 = vector.extract_strided_slice %213 {offsets = [0, 0], sizes = [16, 128], strides = [1, 1]} : vector<16x384xf32> to vector<16x128xf32>
    %217 = vector.extract_strided_slice %213 {offsets = [0, 128], sizes = [16, 128], strides = [1, 1]} : vector<16x384xf32> to vector<16x128xf32>
    %218 = vector.extract_strided_slice %213 {offsets = [0, 256], sizes = [16, 128], strides = [1, 1]} : vector<16x384xf32> to vector<16x128xf32>
    %219 = arith.mulf %217, %194 : vector<16x128xf32>
    %220 = arith.mulf %216, %215 : vector<16x128xf32>
    %221 = arith.addf %219, %220 : vector<16x128xf32>
    %222 = math.tanh %221 : vector<16x128xf32>
    %223 = arith.mulf %218, %222 : vector<16x128xf32>
    %224 = arith.truncf %223 : vector<16x128xf32> to vector<16x128xbf16>
    %225 = arith.index_cast %201 : i32 to index
    %c0_64 = arith.constant 0 : index
    %226 = vector.load %arg14[%225, %c0_64] : memref<128x128xbf16, #tpu.memory_space<vmem>>, vector<16x128xbf16>
    tpu.vector_store %arg14[%225, %c0_64], %224 {strides = array<i32>} : memref<128x128xbf16, #tpu.memory_space<vmem>>, vector<16x128xbf16>,
    %c8_i32 = arith.constant 8 : i32
    %c0_65 = arith.constant 0 : index
    %c0_66 = arith.constant 0 : index
    %227 = vector.load %arg14[%c0_65, %c0_66] : memref<128x128xbf16, #tpu.memory_space<vmem>>, vector<128x128xbf16>
    %c0_67 = arith.constant 0 : index
    %c0_68 = arith.constant 0 : index
    %228 = vector.load %arg6[%c0_67, %c0_68] : memref<128x512xbf16, #tpu.memory_space<vmem>>, vector<128x512xbf16>
    %cst_69 = arith.constant dense<0.000000e+00> : vector<128x512xf32>
    %229 = tpu.matmul %227, %228, %cst_69 {dimension_numbers = #tpu.dot_dimension_numbers<[1], [0], [0], [1], [0, 0, 1, 1], [], []>} : vector<128x128xbf16>, vector<128x512xbf16>, vector<128x512xf32> -> vector<128x512xf32>
    %c0_70 = arith.constant 0 : index
    %c0_71 = arith.constant 0 : index
    %230 = vector.load %arg8[%c0_70, %c0_71] : memref<1x512xf32, #tpu.memory_space<vmem>>, vector<1x512xf32>
    %231 = vector.broadcast %230 : vector<1x512xf32> to vector<128x512xf32>
    %232 = arith.addf %229, %231 : vector<128x512xf32>
    %233 = arith.truncf %232 : vector<128x512xf32> to vector<128x512xbf16>
    %c0_72 = arith.constant 0 : index
    %c0_73 = arith.constant 0 : index
    %234 = vector.load %arg13[%c0_72, %c0_73] : memref<128x512xbf16, #tpu.memory_space<vmem>>, vector<128x512xbf16>
    tpu.vector_store %arg13[%c0_72, %c0_73], %233 {strides = array<i32>} : memref<128x512xbf16, #tpu.memory_space<vmem>>, vector<128x512xbf16>,
    %cst_74 = arith.constant 0.000000e+00 : bf16
    %235 = vector.broadcast %cst_74 : bf16 to vector<16x128xbf16>
    %cst_75 = arith.constant 0.000000e+00 : f32
    %236 = vector.broadcast %cst_75 : f32 to vector<16x128xf32>
    %c0_i32_76 = arith.constant 0 : i32
    %c16_i32_77 = arith.constant 16 : i32
    %237 = arith.muli %c0_i32_76, %c16_i32_77 : i32
    %238 = tpu.assume_multiple %237, 16 : i32
    %239 = arith.index_cast %238 : i32 to index
    %c0_78 = arith.constant 0 : index
    %240 = vector.load %arg13[%239, %c0_78] : memref<128x512xbf16, #tpu.memory_space<vmem>>, vector<16x512xbf16>
    %c0_79 = arith.constant 0 : index
    %c0_80 = arith.constant 0 : index
    %241 = vector.load %arg7[%c0_79, %c0_80] : memref<128x512xbf16, #tpu.memory_space<vmem>>, vector<128x512xbf16>
    %cst_81 = arith.constant dense<0.000000e+00> : vector<16x512xf32>
    %242 = tpu.matmul %235, %241, %cst_81 {dimension_numbers = #tpu.dot_dimension_numbers<[1], [0], [0], [1], [0, 0, 1, 1], [], []>} : vector<16x128xbf16>, vector<128x512xbf16>, vector<16x512xf32> -> vector<16x512xf32>
    %243 = arith.extf %240 : vector<16x512xbf16> to vector<16x512xf32>
    %244 = arith.addf %243, %242 : vector<16x512xf32>
    %245 = vector.extract_strided_slice %244 {offsets = [0, 0], sizes = [16, 384], strides = [1, 1]} : vector<16x512xf32> to vector<16x384xf32>
    %246 = arith.negf %245 : vector<16x384xf32>
    %247 = math.exp %246 : vector<16x384xf32>
    %cst_82 = arith.constant 1.000000e+00 : f32
    %248 = vector.broadcast %cst_82 : f32 to vector<16x384xf32>
    %249 = arith.addf %248, %247 : vector<16x384xf32>
    %250 = arith.divf %248, %249 : vector<16x384xf32>
    %251 = vector.extract_strided_slice %244 {offsets = [0, 384], sizes = [16, 128], strides = [1, 1]} : vector<16x512xf32> to vector<16x128xf32>
    %252 = math.tanh %251 : vector<16x128xf32>
    %253 = vector.extract_strided_slice %250 {offsets = [0, 0], sizes = [16, 128], strides = [1, 1]} : vector<16x384xf32> to vector<16x128xf32>
    %254 = vector.extract_strided_slice %250 {offsets = [0, 128], sizes = [16, 128], strides = [1, 1]} : vector<16x384xf32> to vector<16x128xf32>
    %255 = vector.extract_strided_slice %250 {offsets = [0, 256], sizes = [16, 128], strides = [1, 1]} : vector<16x384xf32> to vector<16x128xf32>
    %256 = arith.mulf %254, %236 : vector<16x128xf32>
    %257 = arith.mulf %253, %252 : vector<16x128xf32>
    %258 = arith.addf %256, %257 : vector<16x128xf32>
    %259 = math.tanh %258 : vector<16x128xf32>
    %260 = arith.mulf %255, %259 : vector<16x128xf32>
    %261 = arith.truncf %260 : vector<16x128xf32> to vector<16x128xbf16>
    %c1_i32_83 = arith.constant 1 : i32
    %c16_i32_84 = arith.constant 16 : i32
    %262 = arith.muli %c1_i32_83, %c16_i32_84 : i32
    %263 = tpu.assume_multiple %262, 16 : i32
    %264 = arith.index_cast %263 : i32 to index
    %c0_85 = arith.constant 0 : index
    %265 = vector.load %arg13[%264, %c0_85] : memref<128x512xbf16, #tpu.memory_space<vmem>>, vector<16x512xbf16>
    %c0_86 = arith.constant 0 : index
    %c0_87 = arith.constant 0 : index
    %266 = vector.load %arg7[%c0_86, %c0_87] : memref<128x512xbf16, #tpu.memory_space<vmem>>, vector<128x512xbf16>
    %cst_88 = arith.constant dense<0.000000e+00> : vector<16x512xf32>
    %267 = tpu.matmul %261, %266, %cst_88 {dimension_numbers = #tpu.dot_dimension_numbers<[1], [0], [0], [1], [0, 0, 1, 1], [], []>} : vector<16x128xbf16>, vector<128x512xbf16>, vector<16x512xf32> -> vector<16x512xf32>
    %268 = arith.extf %265 : vector<16x512xbf16> to vector<16x512xf32>
    %269 = arith.addf %268, %267 : vector<16x512xf32>
    %270 = vector.extract_strided_slice %269 {offsets = [0, 0], sizes = [16, 384], strides = [1, 1]} : vector<16x512xf32> to vector<16x384xf32>
    %271 = arith.negf %270 : vector<16x384xf32>
    %272 = math.exp %271 : vector<16x384xf32>
    %cst_89 = arith.constant 1.000000e+00 : f32
    %273 = vector.broadcast %cst_89 : f32 to vector<16x384xf32>
    %274 = arith.addf %273, %272 : vector<16x384xf32>
    %275 = arith.divf %273, %274 : vector<16x384xf32>
    %276 = vector.extract_strided_slice %269 {offsets = [0, 384], sizes = [16, 128], strides = [1, 1]} : vector<16x512xf32> to vector<16x128xf32>
    %277 = math.tanh %276 : vector<16x128xf32>
    %278 = vector.extract_strided_slice %275 {offsets = [0, 0], sizes = [16, 128], strides = [1, 1]} : vector<16x384xf32> to vector<16x128xf32>
    %279 = vector.extract_strided_slice %275 {offsets = [0, 128], sizes = [16, 128], strides = [1, 1]} : vector<16x384xf32> to vector<16x128xf32>
    %280 = vector.extract_strided_slice %275 {offsets = [0, 256], sizes = [16, 128], strides = [1, 1]} : vector<16x384xf32> to vector<16x128xf32>
    %281 = arith.mulf %279, %258 : vector<16x128xf32>
    %282 = arith.mulf %278, %277 : vector<16x128xf32>
    %283 = arith.addf %281, %282 : vector<16x128xf32>
    %284 = math.tanh %283 : vector<16x128xf32>
    %285 = arith.mulf %280, %284 : vector<16x128xf32>
    %286 = arith.truncf %285 : vector<16x128xf32> to vector<16x128xbf16>
    %c2_i32_90 = arith.constant 2 : i32
    %c16_i32_91 = arith.constant 16 : i32
    %287 = arith.muli %c2_i32_90, %c16_i32_91 : i32
    %288 = tpu.assume_multiple %287, 16 : i32
    %289 = arith.index_cast %288 : i32 to index
    %c0_92 = arith.constant 0 : index
    %290 = vector.load %arg13[%289, %c0_92] : memref<128x512xbf16, #tpu.memory_space<vmem>>, vector<16x512xbf16>
    %c0_93 = arith.constant 0 : index
    %c0_94 = arith.constant 0 : index
    %291 = vector.load %arg7[%c0_93, %c0_94] : memref<128x512xbf16, #tpu.memory_space<vmem>>, vector<128x512xbf16>
    %cst_95 = arith.constant dense<0.000000e+00> : vector<16x512xf32>
    %292 = tpu.matmul %286, %291, %cst_95 {dimension_numbers = #tpu.dot_dimension_numbers<[1], [0], [0], [1], [0, 0, 1, 1], [], []>} : vector<16x128xbf16>, vector<128x512xbf16>, vector<16x512xf32> -> vector<16x512xf32>
    %293 = arith.extf %290 : vector<16x512xbf16> to vector<16x512xf32>
    %294 = arith.addf %293, %292 : vector<16x512xf32>
    %295 = vector.extract_strided_slice %294 {offsets = [0, 0], sizes = [16, 384], strides = [1, 1]} : vector<16x512xf32> to vector<16x384xf32>
    %296 = arith.negf %295 : vector<16x384xf32>
    %297 = math.exp %296 : vector<16x384xf32>
    %cst_96 = arith.constant 1.000000e+00 : f32
    %298 = vector.broadcast %cst_96 : f32 to vector<16x384xf32>
    %299 = arith.addf %298, %297 : vector<16x384xf32>
    %300 = arith.divf %298, %299 : vector<16x384xf32>
    %301 = vector.extract_strided_slice %294 {offsets = [0, 384], sizes = [16, 128], strides = [1, 1]} : vector<16x512xf32> to vector<16x128xf32>
    %302 = math.tanh %301 : vector<16x128xf32>
    %303 = vector.extract_strided_slice %300 {offsets = [0, 0], sizes = [16, 128], strides = [1, 1]} : vector<16x384xf32> to vector<16x128xf32>
    %304 = vector.extract_strided_slice %300 {offsets = [0, 128], sizes = [16, 128], strides = [1, 1]} : vector<16x384xf32> to vector<16x128xf32>
    %305 = vector.extract_strided_slice %300 {offsets = [0, 256], sizes = [16, 128], strides = [1, 1]} : vector<16x384xf32> to vector<16x128xf32>
    %306 = arith.mulf %304, %283 : vector<16x128xf32>
    %307 = arith.mulf %303, %302 : vector<16x128xf32>
    %308 = arith.addf %306, %307 : vector<16x128xf32>
    %309 = math.tanh %308 : vector<16x128xf32>
    %310 = arith.mulf %305, %309 : vector<16x128xf32>
    %311 = arith.truncf %310 : vector<16x128xf32> to vector<16x128xbf16>
    %c3_i32_97 = arith.constant 3 : i32
    %c16_i32_98 = arith.constant 16 : i32
    %312 = arith.muli %c3_i32_97, %c16_i32_98 : i32
    %313 = tpu.assume_multiple %312, 16 : i32
    %314 = arith.index_cast %313 : i32 to index
    %c0_99 = arith.constant 0 : index
    %315 = vector.load %arg13[%314, %c0_99] : memref<128x512xbf16, #tpu.memory_space<vmem>>, vector<16x512xbf16>
    %c0_100 = arith.constant 0 : index
    %c0_101 = arith.constant 0 : index
    %316 = vector.load %arg7[%c0_100, %c0_101] : memref<128x512xbf16, #tpu.memory_space<vmem>>, vector<128x512xbf16>
    %cst_102 = arith.constant dense<0.000000e+00> : vector<16x512xf32>
    %317 = tpu.matmul %311, %316, %cst_102 {dimension_numbers = #tpu.dot_dimension_numbers<[1], [0], [0], [1], [0, 0, 1, 1], [], []>} : vector<16x128xbf16>, vector<128x512xbf16>, vector<16x512xf32> -> vector<16x512xf32>
    %318 = arith.extf %315 : vector<16x512xbf16> to vector<16x512xf32>
    %319 = arith.addf %318, %317 : vector<16x512xf32>
    %320 = vector.extract_strided_slice %319 {offsets = [0, 0], sizes = [16, 384], strides = [1, 1]} : vector<16x512xf32> to vector<16x384xf32>
    %321 = arith.negf %320 : vector<16x384xf32>
    %322 = math.exp %321 : vector<16x384xf32>
    %cst_103 = arith.constant 1.000000e+00 : f32
    %323 = vector.broadcast %cst_103 : f32 to vector<16x384xf32>
    %324 = arith.addf %323, %322 : vector<16x384xf32>
    %325 = arith.divf %323, %324 : vector<16x384xf32>
    %326 = vector.extract_strided_slice %319 {offsets = [0, 384], sizes = [16, 128], strides = [1, 1]} : vector<16x512xf32> to vector<16x128xf32>
    %327 = math.tanh %326 : vector<16x128xf32>
    %328 = vector.extract_strided_slice %325 {offsets = [0, 0], sizes = [16, 128], strides = [1, 1]} : vector<16x384xf32> to vector<16x128xf32>
    %329 = vector.extract_strided_slice %325 {offsets = [0, 128], sizes = [16, 128], strides = [1, 1]} : vector<16x384xf32> to vector<16x128xf32>
    %330 = vector.extract_strided_slice %325 {offsets = [0, 256], sizes = [16, 128], strides = [1, 1]} : vector<16x384xf32> to vector<16x128xf32>
    %331 = arith.mulf %329, %308 : vector<16x128xf32>
    %332 = arith.mulf %328, %327 : vector<16x128xf32>
    %333 = arith.addf %331, %332 : vector<16x128xf32>
    %334 = math.tanh %333 : vector<16x128xf32>
    %335 = arith.mulf %330, %334 : vector<16x128xf32>
    %336 = arith.truncf %335 : vector<16x128xf32> to vector<16x128xbf16>
    %c4_i32_104 = arith.constant 4 : i32
    %c16_i32_105 = arith.constant 16 : i32
    %337 = arith.muli %c4_i32_104, %c16_i32_105 : i32
    %338 = tpu.assume_multiple %337, 16 : i32
    %339 = arith.index_cast %338 : i32 to index
    %c0_106 = arith.constant 0 : index
    %340 = vector.load %arg13[%339, %c0_106] : memref<128x512xbf16, #tpu.memory_space<vmem>>, vector<16x512xbf16>
    %c0_107 = arith.constant 0 : index
    %c0_108 = arith.constant 0 : index
    %341 = vector.load %arg7[%c0_107, %c0_108] : memref<128x512xbf16, #tpu.memory_space<vmem>>, vector<128x512xbf16>
    %cst_109 = arith.constant dense<0.000000e+00> : vector<16x512xf32>
    %342 = tpu.matmul %336, %341, %cst_109 {dimension_numbers = #tpu.dot_dimension_numbers<[1], [0], [0], [1], [0, 0, 1, 1], [], []>} : vector<16x128xbf16>, vector<128x512xbf16>, vector<16x512xf32> -> vector<16x512xf32>
    %343 = arith.extf %340 : vector<16x512xbf16> to vector<16x512xf32>
    %344 = arith.addf %343, %342 : vector<16x512xf32>
    %345 = vector.extract_strided_slice %344 {offsets = [0, 0], sizes = [16, 384], strides = [1, 1]} : vector<16x512xf32> to vector<16x384xf32>
    %346 = arith.negf %345 : vector<16x384xf32>
    %347 = math.exp %346 : vector<16x384xf32>
    %cst_110 = arith.constant 1.000000e+00 : f32
    %348 = vector.broadcast %cst_110 : f32 to vector<16x384xf32>
    %349 = arith.addf %348, %347 : vector<16x384xf32>
    %350 = arith.divf %348, %349 : vector<16x384xf32>
    %351 = vector.extract_strided_slice %344 {offsets = [0, 384], sizes = [16, 128], strides = [1, 1]} : vector<16x512xf32> to vector<16x128xf32>
    %352 = math.tanh %351 : vector<16x128xf32>
    %353 = vector.extract_strided_slice %350 {offsets = [0, 0], sizes = [16, 128], strides = [1, 1]} : vector<16x384xf32> to vector<16x128xf32>
    %354 = vector.extract_strided_slice %350 {offsets = [0, 128], sizes = [16, 128], strides = [1, 1]} : vector<16x384xf32> to vector<16x128xf32>
    %355 = vector.extract_strided_slice %350 {offsets = [0, 256], sizes = [16, 128], strides = [1, 1]} : vector<16x384xf32> to vector<16x128xf32>
    %356 = arith.mulf %354, %333 : vector<16x128xf32>
    %357 = arith.mulf %353, %352 : vector<16x128xf32>
    %358 = arith.addf %356, %357 : vector<16x128xf32>
    %359 = math.tanh %358 : vector<16x128xf32>
    %360 = arith.mulf %355, %359 : vector<16x128xf32>
    %361 = arith.truncf %360 : vector<16x128xf32> to vector<16x128xbf16>
    %c5_i32_111 = arith.constant 5 : i32
    %c16_i32_112 = arith.constant 16 : i32
    %362 = arith.muli %c5_i32_111, %c16_i32_112 : i32
    %363 = tpu.assume_multiple %362, 16 : i32
    %364 = arith.index_cast %363 : i32 to index
    %c0_113 = arith.constant 0 : index
    %365 = vector.load %arg13[%364, %c0_113] : memref<128x512xbf16, #tpu.memory_space<vmem>>, vector<16x512xbf16>
    %c0_114 = arith.constant 0 : index
    %c0_115 = arith.constant 0 : index
    %366 = vector.load %arg7[%c0_114, %c0_115] : memref<128x512xbf16, #tpu.memory_space<vmem>>, vector<128x512xbf16>
    %cst_116 = arith.constant dense<0.000000e+00> : vector<16x512xf32>
    %367 = tpu.matmul %361, %366, %cst_116 {dimension_numbers = #tpu.dot_dimension_numbers<[1], [0], [0], [1], [0, 0, 1, 1], [], []>} : vector<16x128xbf16>, vector<128x512xbf16>, vector<16x512xf32> -> vector<16x512xf32>
    %368 = arith.extf %365 : vector<16x512xbf16> to vector<16x512xf32>
    %369 = arith.addf %368, %367 : vector<16x512xf32>
    %370 = vector.extract_strided_slice %369 {offsets = [0, 0], sizes = [16, 384], strides = [1, 1]} : vector<16x512xf32> to vector<16x384xf32>
    %371 = arith.negf %370 : vector<16x384xf32>
    %372 = math.exp %371 : vector<16x384xf32>
    %cst_117 = arith.constant 1.000000e+00 : f32
    %373 = vector.broadcast %cst_117 : f32 to vector<16x384xf32>
    %374 = arith.addf %373, %372 : vector<16x384xf32>
    %375 = arith.divf %373, %374 : vector<16x384xf32>
    %376 = vector.extract_strided_slice %369 {offsets = [0, 384], sizes = [16, 128], strides = [1, 1]} : vector<16x512xf32> to vector<16x128xf32>
    %377 = math.tanh %376 : vector<16x128xf32>
    %378 = vector.extract_strided_slice %375 {offsets = [0, 0], sizes = [16, 128], strides = [1, 1]} : vector<16x384xf32> to vector<16x128xf32>
    %379 = vector.extract_strided_slice %375 {offsets = [0, 128], sizes = [16, 128], strides = [1, 1]} : vector<16x384xf32> to vector<16x128xf32>
    %380 = vector.extract_strided_slice %375 {offsets = [0, 256], sizes = [16, 128], strides = [1, 1]} : vector<16x384xf32> to vector<16x128xf32>
    %381 = arith.mulf %379, %358 : vector<16x128xf32>
    %382 = arith.mulf %378, %377 : vector<16x128xf32>
    %383 = arith.addf %381, %382 : vector<16x128xf32>
    %384 = math.tanh %383 : vector<16x128xf32>
    %385 = arith.mulf %380, %384 : vector<16x128xf32>
    %386 = arith.truncf %385 : vector<16x128xf32> to vector<16x128xbf16>
    %c6_i32_118 = arith.constant 6 : i32
    %c16_i32_119 = arith.constant 16 : i32
    %387 = arith.muli %c6_i32_118, %c16_i32_119 : i32
    %388 = tpu.assume_multiple %387, 16 : i32
    %389 = arith.index_cast %388 : i32 to index
    %c0_120 = arith.constant 0 : index
    %390 = vector.load %arg13[%389, %c0_120] : memref<128x512xbf16, #tpu.memory_space<vmem>>, vector<16x512xbf16>
    %c0_121 = arith.constant 0 : index
    %c0_122 = arith.constant 0 : index
    %391 = vector.load %arg7[%c0_121, %c0_122] : memref<128x512xbf16, #tpu.memory_space<vmem>>, vector<128x512xbf16>
    %cst_123 = arith.constant dense<0.000000e+00> : vector<16x512xf32>
    %392 = tpu.matmul %386, %391, %cst_123 {dimension_numbers = #tpu.dot_dimension_numbers<[1], [0], [0], [1], [0, 0, 1, 1], [], []>} : vector<16x128xbf16>, vector<128x512xbf16>, vector<16x512xf32> -> vector<16x512xf32>
    %393 = arith.extf %390 : vector<16x512xbf16> to vector<16x512xf32>
    %394 = arith.addf %393, %392 : vector<16x512xf32>
    %395 = vector.extract_strided_slice %394 {offsets = [0, 0], sizes = [16, 384], strides = [1, 1]} : vector<16x512xf32> to vector<16x384xf32>
    %396 = arith.negf %395 : vector<16x384xf32>
    %397 = math.exp %396 : vector<16x384xf32>
    %cst_124 = arith.constant 1.000000e+00 : f32
    %398 = vector.broadcast %cst_124 : f32 to vector<16x384xf32>
    %399 = arith.addf %398, %397 : vector<16x384xf32>
    %400 = arith.divf %398, %399 : vector<16x384xf32>
    %401 = vector.extract_strided_slice %394 {offsets = [0, 384], sizes = [16, 128], strides = [1, 1]} : vector<16x512xf32> to vector<16x128xf32>
    %402 = math.tanh %401 : vector<16x128xf32>
    %403 = vector.extract_strided_slice %400 {offsets = [0, 0], sizes = [16, 128], strides = [1, 1]} : vector<16x384xf32> to vector<16x128xf32>
    %404 = vector.extract_strided_slice %400 {offsets = [0, 128], sizes = [16, 128], strides = [1, 1]} : vector<16x384xf32> to vector<16x128xf32>
    %405 = vector.extract_strided_slice %400 {offsets = [0, 256], sizes = [16, 128], strides = [1, 1]} : vector<16x384xf32> to vector<16x128xf32>
    %406 = arith.mulf %404, %383 : vector<16x128xf32>
    %407 = arith.mulf %403, %402 : vector<16x128xf32>
    %408 = arith.addf %406, %407 : vector<16x128xf32>
    %409 = math.tanh %408 : vector<16x128xf32>
    %410 = arith.mulf %405, %409 : vector<16x128xf32>
    %411 = arith.truncf %410 : vector<16x128xf32> to vector<16x128xbf16>
    %c7_i32_125 = arith.constant 7 : i32
    %c16_i32_126 = arith.constant 16 : i32
    %412 = arith.muli %c7_i32_125, %c16_i32_126 : i32
    %413 = tpu.assume_multiple %412, 16 : i32
    %414 = arith.index_cast %413 : i32 to index
    %c0_127 = arith.constant 0 : index
    %415 = vector.load %arg13[%414, %c0_127] : memref<128x512xbf16, #tpu.memory_space<vmem>>, vector<16x512xbf16>
    %c0_128 = arith.constant 0 : index
    %c0_129 = arith.constant 0 : index
    %416 = vector.load %arg7[%c0_128, %c0_129] : memref<128x512xbf16, #tpu.memory_space<vmem>>, vector<128x512xbf16>
    %cst_130 = arith.constant dense<0.000000e+00> : vector<16x512xf32>
    %417 = tpu.matmul %411, %416, %cst_130 {dimension_numbers = #tpu.dot_dimension_numbers<[1], [0], [0], [1], [0, 0, 1, 1], [], []>} : vector<16x128xbf16>, vector<128x512xbf16>, vector<16x512xf32> -> vector<16x512xf32>
    %418 = arith.extf %415 : vector<16x512xbf16> to vector<16x512xf32>
    %419 = arith.addf %418, %417 : vector<16x512xf32>
    %420 = vector.extract_strided_slice %419 {offsets = [0, 0], sizes = [16, 384], strides = [1, 1]} : vector<16x512xf32> to vector<16x384xf32>
    %421 = arith.negf %420 : vector<16x384xf32>
    %422 = math.exp %421 : vector<16x384xf32>
    %cst_131 = arith.constant 1.000000e+00 : f32
    %423 = vector.broadcast %cst_131 : f32 to vector<16x384xf32>
    %424 = arith.addf %423, %422 : vector<16x384xf32>
    %425 = arith.divf %423, %424 : vector<16x384xf32>
    %426 = vector.extract_strided_slice %419 {offsets = [0, 384], sizes = [16, 128], strides = [1, 1]} : vector<16x512xf32> to vector<16x128xf32>
    %427 = math.tanh %426 : vector<16x128xf32>
    %428 = vector.extract_strided_slice %425 {offsets = [0, 0], sizes = [16, 128], strides = [1, 1]} : vector<16x384xf32> to vector<16x128xf32>
    %429 = vector.extract_strided_slice %425 {offsets = [0, 128], sizes = [16, 128], strides = [1, 1]} : vector<16x384xf32> to vector<16x128xf32>
    %430 = vector.extract_strided_slice %425 {offsets = [0, 256], sizes = [16, 128], strides = [1, 1]} : vector<16x384xf32> to vector<16x128xf32>
    %431 = arith.mulf %429, %408 : vector<16x128xf32>
    %432 = arith.mulf %428, %427 : vector<16x128xf32>
    %433 = arith.addf %431, %432 : vector<16x128xf32>
    %434 = math.tanh %433 : vector<16x128xf32>
    %435 = arith.mulf %430, %434 : vector<16x128xf32>
    %436 = arith.truncf %435 : vector<16x128xf32> to vector<16x128xbf16>
    %c8_i32_132 = arith.constant 8 : i32
    %437 = arith.extf %436 : vector<16x128xbf16> to vector<16x128xf32>
    %c0_133 = arith.constant 0 : index
    %c0_134 = arith.constant 0 : index
    %438 = vector.load %arg9[%c0_133, %c0_134] : memref<128x128xf32, #tpu.memory_space<vmem>>, vector<128x128xf32>
    %cst_135 = arith.constant dense<0.000000e+00> : vector<16x128xf32>
    %439 = tpu.matmul %437, %438, %cst_135 {dimension_numbers = #tpu.dot_dimension_numbers<[1], [0], [0], [1], [0, 0, 1, 1], [], []>} : vector<16x128xf32>, vector<128x128xf32>, vector<16x128xf32> -> vector<16x128xf32>
    %c0_136 = arith.constant 0 : index
    %c0_137 = arith.constant 0 : index
    %440 = vector.load %arg11[%c0_136, %c0_137] : memref<1x128xf32, #tpu.memory_space<vmem>>, vector<1x128xf32>
    %441 = vector.broadcast %440 : vector<1x128xf32> to vector<16x128xf32>
    %442 = arith.addf %439, %441 : vector<16x128xf32>
    %c0_138 = arith.constant 0 : index
    %c0_139 = arith.constant 0 : index
    %443 = vector.load %arg2[%c0_138, %c0_139] : memref<16x1xf32, #tpu.memory_space<vmem>>, vector<16x1xf32>
    %c0_140 = arith.constant 0 : index
    %c0_141 = arith.constant 0 : index
    %444 = vector.load %arg10[%c0_140, %c0_141] : memref<1x128xf32, #tpu.memory_space<vmem>>, vector<1x128xf32>
    %445 = vector.broadcast %443 : vector<16x1xf32> to vector<16x128xf32>
    %446 = vector.broadcast %444 : vector<1x128xf32> to vector<16x128xf32>
    %447 = arith.mulf %445, %446 : vector<16x128xf32>
    %448 = arith.addf %442, %447 : vector<16x128xf32>
    %c0_142 = arith.constant 0 : index
    %c0_143 = arith.constant 0 : index
    %c0_144 = arith.constant 0 : index
    %449 = vector.load %arg12[%c0_142, %c0_143, %c0_144] : memref<2x16x128xf32, #tpu.memory_space<vmem>>, vector<1x16x128xf32>
    %450 = vector.shape_cast %449 : vector<1x16x128xf32> to vector<16x128xf32>
    %451 = vector.shape_cast %448 : vector<16x128xf32> to vector<1x16x128xf32>
    tpu.vector_store %arg12[%c0_142, %c0_143, %c0_144], %451 {strides = array<i32>} : memref<2x16x128xf32, #tpu.memory_space<vmem>>, vector<1x16x128xf32>,
    %cst_145 = arith.constant 1.000000e+00 : f32
    %452 = vector.broadcast %cst_145 : f32 to vector<16x1xf32>
    %453 = arith.subf %452, %443 : vector<16x1xf32>
    %454 = vector.broadcast %453 : vector<16x1xf32> to vector<16x128xf32>
    %455 = vector.broadcast %444 : vector<1x128xf32> to vector<16x128xf32>
    %456 = arith.mulf %454, %455 : vector<16x128xf32>
    %457 = arith.addf %442, %456 : vector<16x128xf32>
    %c1 = arith.constant 1 : index
    %c0_146 = arith.constant 0 : index
    %c0_147 = arith.constant 0 : index
    %458 = vector.load %arg12[%c1, %c0_146, %c0_147] : memref<2x16x128xf32, #tpu.memory_space<vmem>>, vector<1x16x128xf32>
    %459 = vector.shape_cast %458 : vector<1x16x128xf32> to vector<16x128xf32>
    %460 = vector.shape_cast %457 : vector<16x128xf32> to vector<1x16x128xf32>
    tpu.vector_store %arg12[%c1, %c0_146, %c0_147], %460 {strides = array<i32>} : memref<2x16x128xf32, #tpu.memory_space<vmem>>, vector<1x16x128xf32>,
    return
  }
  func.func @transform_0(%arg0: i32) -> (i32, i32, i32) {
    %c0_i32 = arith.constant 0 : i32
    %c0_i32_0 = arith.constant 0 : i32
    %c0_i32_1 = arith.constant 0 : i32
    return %c0_i32, %arg0, %c0_i32_0 : i32, i32, i32
  }
  func.func @transform_1(%arg0: i32) -> (i32, i32) {
    %c0_i32 = arith.constant 0 : i32
    %c0_i32_0 = arith.constant 0 : i32
    return %arg0, %c0_i32 : i32, i32
  }
  func.func @transform_2(%arg0: i32) -> (i32, i32) {
    %c0_i32 = arith.constant 0 : i32
    %c0_i32_0 = arith.constant 0 : i32
    %c0_i32_1 = arith.constant 0 : i32
    return %c0_i32, %c0_i32_0 : i32, i32
  }
  func.func @transform_3(%arg0: i32) -> (i32, i32) {
    %c0_i32 = arith.constant 0 : i32
    %c0_i32_0 = arith.constant 0 : i32
    %c0_i32_1 = arith.constant 0 : i32
    return %c0_i32, %c0_i32_0 : i32, i32
  }
  func.func @transform_4(%arg0: i32) -> (i32, i32) {
    %c0_i32 = arith.constant 0 : i32
    %c0_i32_0 = arith.constant 0 : i32
    %c0_i32_1 = arith.constant 0 : i32
    return %c0_i32, %c0_i32_0 : i32, i32
  }
  func.func @transform_5(%arg0: i32) -> (i32, i32) {
    %c0_i32 = arith.constant 0 : i32
    %c0_i32_0 = arith.constant 0 : i32
    %c0_i32_1 = arith.constant 0 : i32
    return %c0_i32, %c0_i32_0 : i32, i32
  }
  func.func @transform_6(%arg0: i32) -> (i32, i32) {
    %c0_i32 = arith.constant 0 : i32
    %c0_i32_0 = arith.constant 0 : i32
    %c0_i32_1 = arith.constant 0 : i32
    return %c0_i32, %c0_i32_0 : i32, i32
  }
  func.func @transform_7(%arg0: i32) -> (i32, i32) {
    %c0_i32 = arith.constant 0 : i32
    %c0_i32_0 = arith.constant 0 : i32
    %c0_i32_1 = arith.constant 0 : i32
    return %c0_i32, %c0_i32_0 : i32, i32
  }
  func.func @transform_8(%arg0: i32) -> (i32, i32) {
    %c0_i32 = arith.constant 0 : i32
    %c0_i32_0 = arith.constant 0 : i32
    %c0_i32_1 = arith.constant 0 : i32
    return %c0_i32, %c0_i32_0 : i32, i32
  }
  func.func @transform_9(%arg0: i32) -> (i32, i32) {
    %c0_i32 = arith.constant 0 : i32
    %c0_i32_0 = arith.constant 0 : i32
    %c0_i32_1 = arith.constant 0 : i32
    return %c0_i32, %c0_i32_0 : i32, i32
  }
  func.func @transform_10(%arg0: i32) -> (i32, i32) {
    %c0_i32 = arith.constant 0 : i32
    %c0_i32_0 = arith.constant 0 : i32
    %c0_i32_1 = arith.constant 0 : i32
    return %c0_i32, %c0_i32_0 : i32, i32
  }
  func.func @transform_11(%arg0: i32) -> (i32, i32, i32) {
    %c0_i32 = arith.constant 0 : i32
    %c0_i32_0 = arith.constant 0 : i32
    %c0_i32_1 = arith.constant 0 : i32
    return %c0_i32, %arg0, %c0_i32_0 : i32, i32, i32
  }
}

</mosaic_0001>

<llo_original>
// kernel: lstm_lattice_forward.1
$region0: #{lstm_lattice_forward.1}
  #allocation0 [shape = 'u32[]', space=smem, size = 0x4, offset = 0x4, fixed_abs, tag = 'smem constant byte address 0x4 - core index']
  #allocation1 [shape = 'u32[144,128]{1,0:T(1,128)}', space=vmem, size = 0x12000, scoped, tag = 'internal scratch']
  #allocation2 [shape = 'bf16[128,512]{1,0:T(8,128)(2,1)}', space=vmem, size = 0x20000, scoped, tag = 'scratch operand']
  #allocation3 [shape = 'bf16[128,128]{1,0:T(8,128)(2,1)}', space=vmem, size = 0x8000, scoped, tag = 'scratch operand']
  %s0 = inlined_call_operand.vmem [shape: bf16[8,16,8], index: 0, kind: input, shape index: {}]
  %s1 = inlined_call_operand.vmem [shape: f32[16,1], index: 1, kind: input, shape index: {}]
  %s2 = inlined_call_operand.vmem [shape: bf16[8,512], index: 2, kind: input, shape index: {}]
  %s3 = inlined_call_operand.vmem [shape: bf16[128,512], index: 3, kind: input, shape index: {}]
  %s4 = inlined_call_operand.vmem [shape: f32[1,512], index: 4, kind: input, shape index: {}]
  %s5 = inlined_call_operand.vmem [shape: bf16[128,512], index: 5, kind: input, shape index: {}]
  %s6 = inlined_call_operand.vmem [shape: bf16[128,512], index: 6, kind: input, shape index: {}]
  %s7 = inlined_call_operand.vmem [shape: f32[1,512], index: 7, kind: input, shape index: {}]
  %s8 = inlined_call_operand.vmem [shape: f32[128,128], index: 8, kind: input, shape index: {}]
  %s9 = inlined_call_operand.vmem [shape: f32[1,128], index: 9, kind: input, shape index: {}]
  %s10 = inlined_call_operand.vmem [shape: f32[1,128], index: 10, kind: input, shape index: {}]
  %s11 = inlined_call_operand.vmem [shape: f32[2,16,128], index: 11, kind: output, shape index: {}]
  %s12 = sld [smem:[#allocation0]]
  $region54: #{lstm_lattice_forward.1} parent=0
    _
  %s14 = ssub.s32 1, %s12
  %s15 = scalar_select 0, %s14, %s12
  // Predicated region
  $region2: #{lstm_lattice_forward.1} parent=0 // pred_check
    _
  $region3: #{lstm_lattice_forward.1} parent=0 // pred_check_branch
    %17 = sbr.rel (0) target = $region5
  $region4: #{lstm_lattice_forward.1} parent=0 // pred_region
    _
  $region5: #{lstm_lattice_forward.1} parent=0 // pred_fallthru
    _
  // Predicated region
  $region6: #{lstm_lattice_forward.1} parent=0 // pred_check
    _
  $region7: #{lstm_lattice_forward.1} parent=0 // pred_check_branch
    %19 = sbr.rel (0) target = $region9
  $region8: #{lstm_lattice_forward.1} parent=0 // pred_region
    _
  $region9: #{lstm_lattice_forward.1} parent=0 // pred_fallthru
    _
  // Predicated region
  $region10: #{lstm_lattice_forward.1} parent=0 // pred_check
    _
  $region11: #{lstm_lattice_forward.1} parent=0 // pred_check_branch
    %21 = sbr.rel (0) target = $region13
  $region12: #{lstm_lattice_forward.1} parent=0 // pred_region
    _
  $region13: #{lstm_lattice_forward.1} parent=0 // pred_fallthru
    _
  // Predicated region
  $region14: #{lstm_lattice_forward.1} parent=0 // pred_check
    _
  $region15: #{lstm_lattice_forward.1} parent=0 // pred_check_branch
    %23 = sbr.rel (0) target = $region17
  $region16: #{lstm_lattice_forward.1} parent=0 // pred_region
    _
  $region17: #{lstm_lattice_forward.1} parent=0 // pred_fallthru
    _
  // Predicated region
  $region18: #{lstm_lattice_forward.1} parent=0 // pred_check
    _
  $region19: #{lstm_lattice_forward.1} parent=0 // pred_check_branch
    %25 = sbr.rel (0) target = $region21
  $region20: #{lstm_lattice_forward.1} parent=0 // pred_region
    _
  $region21: #{lstm_lattice_forward.1} parent=0 // pred_fallthru
    _
  // Predicated region
  $region22: #{lstm_lattice_forward.1} parent=0 // pred_check
    _
  $region23: #{lstm_lattice_forward.1} parent=0 // pred_check_branch
    %27 = sbr.rel (0) target = $region25
  $region24: #{lstm_lattice_forward.1} parent=0 // pred_region
    _
  $region25: #{lstm_lattice_forward.1} parent=0 // pred_fallthru
    _
  // Predicated region
  $region26: #{lstm_lattice_forward.1} parent=0 // pred_check
    _
  $region27: #{lstm_lattice_forward.1} parent=0 // pred_check_branch
    %29 = sbr.rel (0) target = $region29
  $region28: #{lstm_lattice_forward.1} parent=0 // pred_region
    _
  $region29: #{lstm_lattice_forward.1} parent=0 // pred_fallthru
    _
  // Predicated region
  $region30: #{lstm_lattice_forward.1} parent=0 // pred_check
    _
  $region31: #{lstm_lattice_forward.1} parent=0 // pred_check_branch
    %31 = sbr.rel (0) target = $region33
  $region32: #{lstm_lattice_forward.1} parent=0 // pred_region
    _
  $region33: #{lstm_lattice_forward.1} parent=0 // pred_fallthru
    _
  // Predicated region
  $region34: #{lstm_lattice_forward.1} parent=0 // pred_check
    _
  $region35: #{lstm_lattice_forward.1} parent=0 // pred_check_branch
    %33 = sbr.rel (0) target = $region37
  $region36: #{lstm_lattice_forward.1} parent=0 // pred_region
    _
  $region37: #{lstm_lattice_forward.1} parent=0 // pred_fallthru
    _
  // Predicated region
  $region38: #{lstm_lattice_forward.1} parent=0 // pred_check
    _
  $region39: #{lstm_lattice_forward.1} parent=0 // pred_check_branch
    %35 = sbr.rel (0) target = $region41
  $region40: #{lstm_lattice_forward.1} parent=0 // pred_region
    _
  $region41: #{lstm_lattice_forward.1} parent=0 // pred_fallthru
    _
  // Predicated region
  $region42: #{lstm_lattice_forward.1} parent=0 // pred_check
    _
  $region43: #{lstm_lattice_forward.1} parent=0 // pred_check_branch
    %37 = sbr.rel (0) target = $region45
  $region44: #{lstm_lattice_forward.1} parent=0 // pred_region
    _
  $region45: #{lstm_lattice_forward.1} parent=0 // pred_fallthru
    _
  %v39 = vld [vmem:[%s0] sm:$0xf]
  %v40 = vld [vmem:[%s0 + $0x4] sm:$0xf]
  %v41 = vld [vmem:[%s0 + $0x8] sm:$0xf]
  %v42 = vld [vmem:[%s0 + $0xc] sm:$0xf]
  %v43 = vld [vmem:[%s0 + $0x10] sm:$0xf]
  %v44 = vld [vmem:[%s0 + $0x14] sm:$0xf]
  %v45 = vld [vmem:[%s0 + $0x18] sm:$0xf]
  %v46 = vld [vmem:[%s0 + $0x1c] sm:$0xf]
  %v47 = vld [vmem:[%s0 + $0x20] sm:$0xf]
  %v48 = vld [vmem:[%s0 + $0x24] sm:$0xf]
  %v49 = vld [vmem:[%s0 + $0x28] sm:$0xf]
  %v50 = vld [vmem:[%s0 + $0x2c] sm:$0xf]
  %v51 = vld [vmem:[%s0 + $0x30] sm:$0xf]
  %v52 = vld [vmem:[%s0 + $0x34] sm:$0xf]
  %v53 = vld [vmem:[%s0 + $0x38] sm:$0xf]
  %v54 = vld [vmem:[%s0 + $0x3c] sm:$0xf]
  %v55 = vld [vmem:[%s2] sm:$0xff]
  %v56 = vld [vmem:[%s2 + $0x8] sm:$0xff]
  %v57 = vld [vmem:[%s4] sm:$0xf]
  %v59 = vlaneseq
  %v60 = vshrl.u32 %v59, 7
  %v61 = vsub.s32 0, %v60
  %v62 = vrot.slane %v57, %v61
  %v63 = vlaneseq
  %v64 = vshrl.u32 %v63, 7
  %v65 = vsub.s32 1, %v64
  %v66 = vrot.slane %v57, %v65
  %v67 = vlaneseq
  %v68 = vshrl.u32 %v67, 7
  %v69 = vsub.s32 2, %v68
  %v70 = vrot.slane %v57, %v69
  %v71 = vlaneseq
  %v72 = vshrl.u32 %v71, 7
  %v73 = vsub.s32 3, %v72
  %v74 = vrot.slane %v57, %v73
  %v95 = vunpack.c.l.b16 %v39
  %v96 = vunpack.c.l.b16 %v40
  %v97 = vunpack.c.l.b16 %v41
  %v98 = vunpack.c.l.b16 %v42
  %v99 = vunpack.c.l.b16 %v43
  %v100 = vunpack.c.l.b16 %v44
  %v101 = vunpack.c.l.b16 %v45
  %v102 = vunpack.c.l.b16 %v46
  %v103 = vunpack.c.l.b16 %v47
  %v104 = vunpack.c.l.b16 %v48
  %v105 = vunpack.c.l.b16 %v49
  %v106 = vunpack.c.l.b16 %v50
  %v107 = vunpack.c.l.b16 %v51
  %v108 = vunpack.c.l.b16 %v52
  %v109 = vunpack.c.l.b16 %v53
  %v110 = vunpack.c.l.b16 %v54
  %v111 = vpack.c.b16 %v96, %v95
  %v112 = vpack.c.b16 %v98, %v97
  %v113 = vpack.c.b16 %v100, %v99
  %v114 = vpack.c.b16 %v102, %v101
  %v115 = vpack.c.b16 %v104, %v103
  %v116 = vpack.c.b16 %v106, %v105
  %v117 = vpack.c.b16 %v108, %v107
  %v118 = vpack.c.b16 %v110, %v109
  %v121 = vunpack.c.l.b16 %v55
  %v122 = vunpack.c.h.b16 %v55
  %v123 = vunpack.c.l.b16 %v56
  %v124 = vunpack.c.h.b16 %v56
  %v125 = vpack.c.b16 %v121, %v121
  %v126 = vpack.c.b16 %v122, %v122
  %v127 = vpack.c.b16 %v123, %v123
  %v128 = vpack.c.b16 %v124, %v124
  %vm129 = vcmask 64512
  %v131 = vsel %vm129, %v111, 0
  %v134 = vsel %vm129, %v112, 0
  %v137 = vsel %vm129, %v113, 0
  %v140 = vsel %vm129, %v114, 0
  %v143 = vsel %vm129, %v115, 0
  %v146 = vsel %vm129, %v116, 0
  %v149 = vsel %vm129, %v117, 0
  %v152 = vsel %vm129, %v118, 0
  %vm154 = vcmask 1043456
  %v156 = vsel %vm154, %v125, 0
  %v159 = vsel %vm154, %v126, 0
  %v162 = vsel %vm154, %v127, 0
  %v165 = vsel %vm154, %v128, 0
  %167 = vmatprep.subr.bf16.mxu0 0
  %168 = vmatpush1.bf16.msra.mxu0 0
  %169 = vmatprep.subr.bf16.mxu0 0
  %170 = vmatpush1.bf16.msra.mxu0 0
  %171 = vmatprep.subr.bf16.mxu0 0
  %172 = vmatpush1.bf16.msra.mxu0 0
  %173 = vmatprep.subr.bf16.mxu0 0
  %174 = vmatpush1.bf16.msra.mxu0 0
  %175 = vmatprep.subr.bf16.mxu0 0
  %176 = vmatpush1.bf16.msra.mxu0 0
  %177 = vmatprep.subr.bf16.mxu0 0
  %178 = vmatpush1.bf16.msra.mxu0 0
  %179 = vmatprep.subr.bf16.mxu0 0
  %180 = vmatpush1.bf16.msra.mxu0 0
  %181 = vmatprep.subr.bf16.mxu0 %v159
  %182 = vmatpush1.bf16.msra.mxu0 %v156
  %183 = vmatprep.subr.bf16.mxu0 0
  %184 = vmatpush2.bf16.msra.mxu0 0
  %185 = vmatprep.subr.bf16.mxu0 0
  %186 = vmatpush2.bf16.msra.mxu0 0
  %187 = vmatprep.subr.bf16.mxu0 0
  %188 = vmatpush2.bf16.msra.mxu0 0
  %189 = vmatprep.subr.bf16.mxu0 0
  %190 = vmatpush2.bf16.msra.mxu0 0
  %191 = vmatprep.subr.bf16.mxu0 0
  %192 = vmatpush2.bf16.msra.mxu0 0
  %193 = vmatprep.subr.bf16.mxu0 0
  %194 = vmatpush2.bf16.msra.mxu0 0
  %195 = vmatprep.subr.bf16.mxu0 0
  %196 = vmatpush2.bf16.msra.mxu0 0
  %197 = vmatprep.subr.bf16.mxu0 0
  %198 = vmatpush2.bf16.msra.mxu0 0
  %199 = vmatprep.mubr.bf16.mxu0 0
  %200 = vmatmul.mubr.bf16.gmra.mxu0 %v131
  %v201 = vpop.f32.mrf.mxu0
  %v202 = vadd.f32 %v62, %v201
  %v203 = vpop.f32.mrf.mxu0
  %v204 = vadd.f32 %v66, %v203
  %v205 = vpop.f32.mrf.mxu0
  %v206 = vadd.f32 %v62, %v205
  %v207 = vpop.f32.mrf.mxu0
  %v208 = vadd.f32 %v66, %v207
  %209 = vmatprep.mubr.bf16.mxu0 0
  %210 = vmatmul.mubr.bf16.gmra.mxu0 %v134
  %v211 = vpop.f32.mrf.mxu0
  %v212 = vadd.f32 %v62, %v211
  %v213 = vpop.f32.mrf.mxu0
  %v214 = vadd.f32 %v66, %v213
  %v215 = vpop.f32.mrf.mxu0
  %v216 = vadd.f32 %v62, %v215
  %v217 = vpop.f32.mrf.mxu0
  %v218 = vadd.f32 %v66, %v217
  %219 = vmatprep.mubr.bf16.mxu0 0
  %220 = vmatmul.mubr.bf16.gmra.mxu0 %v137
  %v221 = vpop.f32.mrf.mxu0
  %v222 = vadd.f32 %v62, %v221
  %v223 = vpop.f32.mrf.mxu0
  %v224 = vadd.f32 %v66, %v223
  %v225 = vpop.f32.mrf.mxu0
  %v226 = vadd.f32 %v62, %v225
  %v227 = vpop.f32.mrf.mxu0
  %v228 = vadd.f32 %v66, %v227
  %229 = vmatprep.mubr.bf16.mxu0 0
  %230 = vmatmul.mubr.bf16.gmra.mxu0 %v140
  %v231 = vpop.f32.mrf.mxu0
  %v232 = vadd.f32 %v62, %v231
  %v233 = vpop.f32.mrf.mxu0
  %v234 = vadd.f32 %v66, %v233
  %v235 = vpop.f32.mrf.mxu0
  %v236 = vadd.f32 %v62, %v235
  %v237 = vpop.f32.mrf.mxu0
  %v238 = vadd.f32 %v66, %v237
  %239 = vmatprep.mubr.bf16.mxu0 0
  %240 = vmatmul.mubr.bf16.gmra.mxu0 %v143
  %v241 = vpop.f32.mrf.mxu0
  %v242 = vadd.f32 %v62, %v241
  %v243 = vpop.f32.mrf.mxu0
  %v244 = vadd.f32 %v66, %v243
  %v245 = vpop.f32.mrf.mxu0
  %v246 = vadd.f32 %v62, %v245
  %v247 = vpop.f32.mrf.mxu0
  %v248 = vadd.f32 %v66, %v247
  %249 = vmatprep.mubr.bf16.mxu0 0
  %250 = vmatmul.mubr.bf16.gmra.mxu0 %v146
  %v251 = vpop.f32.mrf.mxu0
  %v252 = vadd.f32 %v62, %v251
  %v253 = vpop.f32.mrf.mxu0
  %v254 = vadd.f32 %v66, %v253
  %v255 = vpop.f32.mrf.mxu0
  %v256 = vadd.f32 %v62, %v255
  %v257 = vpop.f32.mrf.mxu0
  %v258 = vadd.f32 %v66, %v257
  %259 = vmatprep.mubr.bf16.mxu0 0
  %260 = vmatmul.mubr.bf16.gmra.mxu0 %v149
  %v261 = vpop.f32.mrf.mxu0
  %v262 = vadd.f32 %v62, %v261
  %v263 = vpop.f32.mrf.mxu0
  %v264 = vadd.f32 %v66, %v263
  %v265 = vpop.f32.mrf.mxu0
  %v266 = vadd.f32 %v62, %v265
  %v267 = vpop.f32.mrf.mxu0
  %v268 = vadd.f32 %v66, %v267
  %269 = vmatprep.mubr.bf16.mxu0 0
  %270 = vmatmul.mubr.bf16.gmra.mxu0 %v152
  %v271 = vpop.f32.mrf.mxu0
  %v272 = vadd.f32 %v62, %v271
  %v273 = vpop.f32.mrf.mxu0
  %v274 = vadd.f32 %v66, %v273
  %v275 = vpop.f32.mrf.mxu0
  %v276 = vadd.f32 %v62, %v275
  %v277 = vpop.f32.mrf.mxu0
  %v278 = vadd.f32 %v66, %v277
  %279 = vdwg.mxu0
  %280 = vmatprep.subr.bf16.mxu0 0
  %281 = vmatpush1.bf16.msra.mxu0 0
  %282 = vmatprep.subr.bf16.mxu0 0
  %283 = vmatpush1.bf16.msra.mxu0 0
  %284 = vmatprep.subr.bf16.mxu0 0
  %285 = vmatpush1.bf16.msra.mxu0 0
  %286 = vmatprep.subr.bf16.mxu0 0
  %287 = vmatpush1.bf16.msra.mxu0 0
  %288 = vmatprep.subr.bf16.mxu0 0
  %289 = vmatpush1.bf16.msra.mxu0 0
  %290 = vmatprep.subr.bf16.mxu0 0
  %291 = vmatpush1.bf16.msra.mxu0 0
  %292 = vmatprep.subr.bf16.mxu0 0
  %293 = vmatpush1.bf16.msra.mxu0 0
  %294 = vmatprep.subr.bf16.mxu0 %v165
  %295 = vmatpush1.bf16.msra.mxu0 %v162
  %296 = vmatprep.subr.bf16.mxu0 0
  %297 = vmatpush2.bf16.msra.mxu0 0
  %298 = vmatprep.subr.bf16.mxu0 0
  %299 = vmatpush2.bf16.msra.mxu0 0
  %300 = vmatprep.subr.bf16.mxu0 0
  %301 = vmatpush2.bf16.msra.mxu0 0
  %302 = vmatprep.subr.bf16.mxu0 0
  %303 = vmatpush2.bf16.msra.mxu0 0
  %304 = vmatprep.subr.bf16.mxu0 0
  %305 = vmatpush2.bf16.msra.mxu0 0
  %306 = vmatprep.subr.bf16.mxu0 0
  %307 = vmatpush2.bf16.msra.mxu0 0
  %308 = vmatprep.subr.bf16.mxu0 0
  %309 = vmatpush2.bf16.msra.mxu0 0
  %310 = vmatprep.subr.bf16.mxu0 0
  %311 = vmatpush2.bf16.msra.mxu0 0
  %312 = vmatprep.mubr.bf16.mxu0 0
  %313 = vmatmul.mubr.bf16.gmra.mxu0 %v131
  %v314 = vpop.f32.mrf.mxu0
  %v315 = vadd.f32 %v70, %v314
  %v316 = vpop.f32.mrf.mxu0
  %v317 = vadd.f32 %v74, %v316
  %v318 = vpop.f32.mrf.mxu0
  %v319 = vadd.f32 %v70, %v318
  %v320 = vpop.f32.mrf.mxu0
  %v321 = vadd.f32 %v74, %v320
  %322 = vmatprep.mubr.bf16.mxu0 0
  %323 = vmatmul.mubr.bf16.gmra.mxu0 %v134
  %v324 = vpop.f32.mrf.mxu0
  %v325 = vadd.f32 %v70, %v324
  %v326 = vpop.f32.mrf.mxu0
  %v327 = vadd.f32 %v74, %v326
  %v328 = vpop.f32.mrf.mxu0
  %v329 = vadd.f32 %v70, %v328
  %v330 = vpop.f32.mrf.mxu0
  %v331 = vadd.f32 %v74, %v330
  %332 = vmatprep.mubr.bf16.mxu0 0
  %333 = vmatmul.mubr.bf16.gmra.mxu0 %v137
  %v334 = vpop.f32.mrf.mxu0
  %v335 = vadd.f32 %v70, %v334
  %v336 = vpop.f32.mrf.mxu0
  %v337 = vadd.f32 %v74, %v336
  %v338 = vpop.f32.mrf.mxu0
  %v339 = vadd.f32 %v70, %v338
  %v340 = vpop.f32.mrf.mxu0
  %v341 = vadd.f32 %v74, %v340
  %342 = vmatprep.mubr.bf16.mxu0 0
  %343 = vmatmul.mubr.bf16.gmra.mxu0 %v140
  %v344 = vpop.f32.mrf.mxu0
  %v345 = vadd.f32 %v70, %v344
  %v346 = vpop.f32.mrf.mxu0
  %v347 = vadd.f32 %v74, %v346
  %v348 = vpop.f32.mrf.mxu0
  %v349 = vadd.f32 %v70, %v348
  %v350 = vpop.f32.mrf.mxu0
  %v351 = vadd.f32 %v74, %v350
  %352 = vmatprep.mubr.bf16.mxu0 0
  %353 = vmatmul.mubr.bf16.gmra.mxu0 %v143
  %v354 = vpop.f32.mrf.mxu0
  %v355 = vadd.f32 %v70, %v354
  %v356 = vpop.f32.mrf.mxu0
  %v357 = vadd.f32 %v74, %v356
  %v358 = vpop.f32.mrf.mxu0
  %v359 = vadd.f32 %v70, %v358
  %v360 = vpop.f32.mrf.mxu0
  %v361 = vadd.f32 %v74, %v360
  %362 = vmatprep.mubr.bf16.mxu0 0
  %363 = vmatmul.mubr.bf16.gmra.mxu0 %v146
  %v364 = vpop.f32.mrf.mxu0
  %v365 = vadd.f32 %v70, %v364
  %v366 = vpop.f32.mrf.mxu0
  %v367 = vadd.f32 %v74, %v366
  %v368 = vpop.f32.mrf.mxu0
  %v369 = vadd.f32 %v70, %v368
  %v370 = vpop.f32.mrf.mxu0
  %v371 = vadd.f32 %v74, %v370
  %372 = vmatprep.mubr.bf16.mxu0 0
  %373 = vmatmul.mubr.bf16.gmra.mxu0 %v149
  %v374 = vpop.f32.mrf.mxu0
  %v375 = vadd.f32 %v70, %v374
  %v376 = vpop.f32.mrf.mxu0
  %v377 = vadd.f32 %v74, %v376
  %v378 = vpop.f32.mrf.mxu0
  %v379 = vadd.f32 %v70, %v378
  %v380 = vpop.f32.mrf.mxu0
  %v381 = vadd.f32 %v74, %v380
  %382 = vmatprep.mubr.bf16.mxu0 0
  %383 = vmatmul.mubr.bf16.gmra.mxu0 %v152
  %v384 = vpop.f32.mrf.mxu0
  %v385 = vadd.f32 %v70, %v384
  %v386 = vpop.f32.mrf.mxu0
  %v387 = vadd.f32 %v74, %v386
  %v388 = vpop.f32.mrf.mxu0
  %v389 = vadd.f32 %v70, %v388
  %v390 = vpop.f32.mrf.mxu0
  %v391 = vadd.f32 %v74, %v390
  %392 = vdwg.mxu0
  %v393 = vpack.c.bf16 %v206, %v202
  %v394 = vpack.c.bf16 %v208, %v204
  %v395 = vpack.c.bf16 %v319, %v315
  %v396 = vpack.c.bf16 %v321, %v317
  %v397 = vpack.c.bf16 %v216, %v212
  %v398 = vpack.c.bf16 %v218, %v214
  %v399 = vpack.c.bf16 %v329, %v325
  %v400 = vpack.c.bf16 %v331, %v327
  %v401 = vpack.c.bf16 %v226, %v222
  %v402 = vpack.c.bf16 %v228, %v224
  %v403 = vpack.c.bf16 %v339, %v335
  %v404 = vpack.c.bf16 %v341, %v337
  %v405 = vpack.c.bf16 %v236, %v232
  %v406 = vpack.c.bf16 %v238, %v234
  %v407 = vpack.c.bf16 %v349, %v345
  %v408 = vpack.c.bf16 %v351, %v347
  %v409 = vpack.c.bf16 %v246, %v242
  %v410 = vpack.c.bf16 %v248, %v244
  %v411 = vpack.c.bf16 %v359, %v355
  %v412 = vpack.c.bf16 %v361, %v357
  %v413 = vpack.c.bf16 %v256, %v252
  %v414 = vpack.c.bf16 %v258, %v254
  %v415 = vpack.c.bf16 %v369, %v365
  %v416 = vpack.c.bf16 %v371, %v367
  %v417 = vpack.c.bf16 %v266, %v262
  %v418 = vpack.c.bf16 %v268, %v264
  %v419 = vpack.c.bf16 %v379, %v375
  %v420 = vpack.c.bf16 %v381, %v377
  %v421 = vpack.c.bf16 %v276, %v272
  %v422 = vpack.c.bf16 %v278, %v274
  %v423 = vpack.c.bf16 %v389, %v385
  %v424 = vpack.c.bf16 %v391, %v387
  %v457 = vunpack.c.l.b16 %v393
  %v458 = vunpack.c.l.b16 %v394
  %v459 = vunpack.c.l.b16 %v395
  %v460 = vunpack.c.l.b16 %v396
  %v461 = vunpack.c.h.b16 %v393
  %v462 = vunpack.c.h.b16 %v394
  %v463 = vunpack.c.h.b16 %v395
  %v464 = vunpack.c.h.b16 %v396
  %v465 = vunpack.c.l.b16 %v397
  %v466 = vunpack.c.l.b16 %v398
  %v467 = vunpack.c.l.b16 %v399
  %v468 = vunpack.c.l.b16 %v400
  %v469 = vunpack.c.h.b16 %v397
  %v470 = vunpack.c.h.b16 %v398
  %v471 = vunpack.c.h.b16 %v399
  %v472 = vunpack.c.h.b16 %v400
  %v473 = vunpack.c.l.b16 %v401
  %v474 = vunpack.c.l.b16 %v402
  %v475 = vunpack.c.l.b16 %v403
  %v476 = vunpack.c.l.b16 %v404
  %v477 = vunpack.c.h.b16 %v401
  %v478 = vunpack.c.h.b16 %v402
  %v479 = vunpack.c.h.b16 %v403
  %v480 = vunpack.c.h.b16 %v404
  %v481 = vunpack.c.l.b16 %v405
  %v482 = vunpack.c.l.b16 %v406
  %v483 = vunpack.c.l.b16 %v407
  %v484 = vunpack.c.l.b16 %v408
  %v485 = vunpack.c.h.b16 %v405
  %v486 = vunpack.c.h.b16 %v406
  %v487 = vunpack.c.h.b16 %v407
  %v488 = vunpack.c.h.b16 %v408
  %v489 = vunpack.c.l.b16 %v409
  %v490 = vunpack.c.l.b16 %v410
  %v491 = vunpack.c.l.b16 %v411
  %v492 = vunpack.c.l.b16 %v412
  %v493 = vunpack.c.h.b16 %v409
  %v494 = vunpack.c.h.b16 %v410
  %v495 = vunpack.c.h.b16 %v411
  %v496 = vunpack.c.h.b16 %v412
  %v497 = vunpack.c.l.b16 %v413
  %v498 = vunpack.c.l.b16 %v414
  %v499 = vunpack.c.l.b16 %v415
  %v500 = vunpack.c.l.b16 %v416
  %v501 = vunpack.c.h.b16 %v413
  %v502 = vunpack.c.h.b16 %v414
  %v503 = vunpack.c.h.b16 %v415
  %v504 = vunpack.c.h.b16 %v416
  %v505 = vunpack.c.l.b16 %v417
  %v506 = vunpack.c.l.b16 %v418
  %v507 = vunpack.c.l.b16 %v419
  %v508 = vunpack.c.l.b16 %v420
  %v509 = vunpack.c.h.b16 %v417
  %v510 = vunpack.c.h.b16 %v418
  %v511 = vunpack.c.h.b16 %v419
  %v512 = vunpack.c.h.b16 %v420
  %v513 = vunpack.c.l.b16 %v421
  %v514 = vunpack.c.l.b16 %v422
  %v515 = vunpack.c.l.b16 %v423
  %v516 = vunpack.c.l.b16 %v424
  %v517 = vunpack.c.h.b16 %v421
  %v518 = vunpack.c.h.b16 %v422
  %v519 = vunpack.c.h.b16 %v423
  %v520 = vunpack.c.h.b16 %v424
  %v521 = vpack.c.b16 %v458, %v457
  %v522 = vpack.c.b16 %v460, %v459
  %v523 = vpack.c.b16 %v462, %v461
  %v524 = vpack.c.b16 %v464, %v463
  %v525 = vpack.c.b16 %v466, %v465
  %v526 = vpack.c.b16 %v468, %v467
  %v527 = vpack.c.b16 %v470, %v469
  %v528 = vpack.c.b16 %v472, %v471
  %v529 = vpack.c.b16 %v474, %v473
  %v530 = vpack.c.b16 %v476, %v475
  %v531 = vpack.c.b16 %v478, %v477
  %v532 = vpack.c.b16 %v480, %v479
  %v533 = vpack.c.b16 %v482, %v481
  %v534 = vpack.c.b16 %v484, %v483
  %v535 = vpack.c.b16 %v486, %v485
  %v536 = vpack.c.b16 %v488, %v487
  %v537 = vpack.c.b16 %v490, %v489
  %v538 = vpack.c.b16 %v492, %v491
  %v539 = vpack.c.b16 %v494, %v493
  %v540 = vpack.c.b16 %v496, %v495
  %v541 = vpack.c.b16 %v498, %v497
  %v542 = vpack.c.b16 %v500, %v499
  %v543 = vpack.c.b16 %v502, %v501
  %v544 = vpack.c.b16 %v504, %v503
  %v545 = vpack.c.b16 %v506, %v505
  %v546 = vpack.c.b16 %v508, %v507
  %v547 = vpack.c.b16 %v510, %v509
  %v548 = vpack.c.b16 %v512, %v511
  %v549 = vpack.c.b16 %v514, %v513
  %v550 = vpack.c.b16 %v516, %v515
  %v551 = vpack.c.b16 %v518, %v517
  %v552 = vpack.c.b16 %v520, %v519
  %585 = vst [vmem:[#allocation2] sm:$0xff] %v521
  %586 = vst [vmem:[#allocation2 + $0x8] sm:$0xff] %v522
  %587 = vst [vmem:[#allocation2 + $0x10] sm:$0xff] %v523
  %588 = vst [vmem:[#allocation2 + $0x18] sm:$0xff] %v524
  %589 = vst [vmem:[#allocation2 + $0x20] sm:$0xff] %v525
  %590 = vst [vmem:[#allocation2 + $0x28] sm:$0xff] %v526
  %591 = vst [vmem:[#allocation2 + $0x30] sm:$0xff] %v527
  %592 = vst [vmem:[#allocation2 + $0x38] sm:$0xff] %v528
  %593 = vst [vmem:[#allocation2 + $0x40] sm:$0xff] %v529
  %594 = vst [vmem:[#allocation2 + $0x48] sm:$0xff] %v530
  %595 = vst [vmem:[#allocation2 + $0x50] sm:$0xff] %v531
  %596 = vst [vmem:[#allocation2 + $0x58] sm:$0xff] %v532
  %597 = vst [vmem:[#allocation2 + $0x60] sm:$0xff] %v533
  %598 = vst [vmem:[#allocation2 + $0x68] sm:$0xff] %v534
  %599 = vst [vmem:[#allocation2 + $0x70] sm:$0xff] %v535
  %600 = vst [vmem:[#allocation2 + $0x78] sm:$0xff] %v536
  %601 = vst [vmem:[#allocation2 + $0x80] sm:$0xff] %v537
  %602 = vst [vmem:[#allocation2 + $0x88] sm:$0xff] %v538
  %603 = vst [vmem:[#allocation2 + $0x90] sm:$0xff] %v539
  %604 = vst [vmem:[#allocation2 + $0x98] sm:$0xff] %v540
  %605 = vst [vmem:[#allocation2 + $0xa0] sm:$0xff] %v541
  %606 = vst [vmem:[#allocation2 + $0xa8] sm:$0xff] %v542
  %607 = vst [vmem:[#allocation2 + $0xb0] sm:$0xff] %v543
  %608 = vst [vmem:[#allocation2 + $0xb8] sm:$0xff] %v544
  %609 = vst [vmem:[#allocation2 + $0xc0] sm:$0xff] %v545
  %610 = vst [vmem:[#allocation2 + $0xc8] sm:$0xff] %v546
  %611 = vst [vmem:[#allocation2 + $0xd0] sm:$0xff] %v547
  %612 = vst [vmem:[#allocation2 + $0xd8] sm:$0xff] %v548
  %613 = vst [vmem:[#allocation2 + $0xe0] sm:$0xff] %v549
  %614 = vst [vmem:[#allocation2 + $0xe8] sm:$0xff] %v550
  %615 = vst [vmem:[#allocation2 + $0xf0] sm:$0xff] %v551
  %616 = vst [vmem:[#allocation2 + $0xf8] sm:$0xff] %v552
  %s617 = smul.u32 0, 4
  %s618 = smul.addr %s617, 4
  %s619 = scalar_lea.vmem [#allocation2], %s618
  %v620 = vld [vmem:[%s619] sm:$0xff]
  %v621 = vld [vmem:[%s619 + $0x8] sm:$0xff]
  %v622 = vld [vmem:[%s619 + $0x10] sm:$0xff]
  %v623 = vld [vmem:[%s619 + $0x18] sm:$0xff]
  %v624 = vld [vmem:[%s3] sm:$0xff]
  %v625 = vld [vmem:[%s3 + $0x8] sm:$0xff]
  %v626 = vld [vmem:[%s3 + $0x10] sm:$0xff]
  %v627 = vld [vmem:[%s3 + $0x18] sm:$0xff]
  %v628 = vld [vmem:[%s3 + $0x20] sm:$0xff]
  %v629 = vld [vmem:[%s3 + $0x28] sm:$0xff]
  %v630 = vld [vmem:[%s3 + $0x30] sm:$0xff]
  %v631 = vld [vmem:[%s3 + $0x38] sm:$0xff]
  %v632 = vld [vmem:[%s3 + $0x40] sm:$0xff]
  %v633 = vld [vmem:[%s3 + $0x48] sm:$0xff]
  %v634 = vld [vmem:[%s3 + $0x50] sm:$0xff]
  %v635 = vld [vmem:[%s3 + $0x58] sm:$0xff]
  %v636 = vld [vmem:[%s3 + $0x60] sm:$0xff]
  %v637 = vld [vmem:[%s3 + $0x68] sm:$0xff]
  %v638 = vld [vmem:[%s3 + $0x70] sm:$0xff]
  %v639 = vld [vmem:[%s3 + $0x78] sm:$0xff]
  %v640 = vld [vmem:[%s3 + $0x80] sm:$0xff]
  %v641 = vld [vmem:[%s3 + $0x88] sm:$0xff]
  %v642 = vld [vmem:[%s3 + $0x90] sm:$0xff]
  %v643 = vld [vmem:[%s3 + $0x98] sm:$0xff]
  %v644 = vld [vmem:[%s3 + $0xa0] sm:$0xff]
  %v645 = vld [vmem:[%s3 + $0xa8] sm:$0xff]
  %v646 = vld [vmem:[%s3 + $0xb0] sm:$0xff]
  %v647 = vld [vmem:[%s3 + $0xb8] sm:$0xff]
  %v648 = vld [vmem:[%s3 + $0xc0] sm:$0xff]
  %v649 = vld [vmem:[%s3 + $0xc8] sm:$0xff]
  %v650 = vld [vmem:[%s3 + $0xd0] sm:$0xff]
  %v651 = vld [vmem:[%s3 + $0xd8] sm:$0xff]
  %v652 = vld [vmem:[%s3 + $0xe0] sm:$0xff]
  %v653 = vld [vmem:[%s3 + $0xe8] sm:$0xff]
  %v654 = vld [vmem:[%s3 + $0xf0] sm:$0xff]
  %v655 = vld [vmem:[%s3 + $0xf8] sm:$0xff]
  %v688 = vunpack.c.l.b16 %v624
  %v689 = vunpack.c.h.b16 %v624
  %v690 = vunpack.c.l.b16 %v625
  %v691 = vunpack.c.h.b16 %v625
  %v692 = vunpack.c.l.b16 %v626
  %v693 = vunpack.c.h.b16 %v626
  %v694 = vunpack.c.l.b16 %v627
  %v695 = vunpack.c.h.b16 %v627
  %v696 = vunpack.c.l.b16 %v628
  %v697 = vunpack.c.h.b16 %v628
  %v698 = vunpack.c.l.b16 %v629
  %v699 = vunpack.c.h.b16 %v629
  %v700 = vunpack.c.l.b16 %v630
  %v701 = vunpack.c.h.b16 %v630
  %v702 = vunpack.c.l.b16 %v631
  %v703 = vunpack.c.h.b16 %v631
  %v704 = vunpack.c.l.b16 %v632
  %v705 = vunpack.c.h.b16 %v632
  %v706 = vunpack.c.l.b16 %v633
  %v707 = vunpack.c.h.b16 %v633
  %v708 = vunpack.c.l.b16 %v634
  %v709 = vunpack.c.h.b16 %v634
  %v710 = vunpack.c.l.b16 %v635
  %v711 = vunpack.c.h.b16 %v635
  %v712 = vunpack.c.l.b16 %v636
  %v713 = vunpack.c.h.b16 %v636
  %v714 = vunpack.c.l.b16 %v637
  %v715 = vunpack.c.h.b16 %v637
  %v716 = vunpack.c.l.b16 %v638
  %v717 = vunpack.c.h.b16 %v638
  %v718 = vunpack.c.l.b16 %v639
  %v719 = vunpack.c.h.b16 %v639
  %v720 = vunpack.c.l.b16 %v640
  %v721 = vunpack.c.h.b16 %v640
  %v722 = vunpack.c.l.b16 %v641
  %v723 = vunpack.c.h.b16 %v641
  %v724 = vunpack.c.l.b16 %v642
  %v725 = vunpack.c.h.b16 %v642
  %v726 = vunpack.c.l.b16 %v643
  %v727 = vunpack.c.h.b16 %v643
  %v728 = vunpack.c.l.b16 %v644
  %v729 = vunpack.c.h.b16 %v644
  %v730 = vunpack.c.l.b16 %v645
  %v731 = vunpack.c.h.b16 %v645
  %v732 = vunpack.c.l.b16 %v646
  %v733 = vunpack.c.h.b16 %v646
  %v734 = vunpack.c.l.b16 %v647
  %v735 = vunpack.c.h.b16 %v647
  %v736 = vunpack.c.l.b16 %v648
  %v737 = vunpack.c.h.b16 %v648
  %v738 = vunpack.c.l.b16 %v649
  %v739 = vunpack.c.h.b16 %v649
  %v740 = vunpack.c.l.b16 %v650
  %v741 = vunpack.c.h.b16 %v650
  %v742 = vunpack.c.l.b16 %v651
  %v743 = vunpack.c.h.b16 %v651
  %v744 = vunpack.c.l.b16 %v652
  %v745 = vunpack.c.h.b16 %v652
  %v746 = vunpack.c.l.b16 %v653
  %v747 = vunpack.c.h.b16 %v653
  %v748 = vunpack.c.l.b16 %v654
  %v749 = vunpack.c.h.b16 %v654
  %v750 = vunpack.c.l.b16 %v655
  %v751 = vunpack.c.h.b16 %v655
  %v752 = vpack.c.b16 %v692, %v688
  %v753 = vpack.c.b16 %v693, %v689
  %v754 = vpack.c.b16 %v694, %v690
  %v755 = vpack.c.b16 %v695, %v691
  %v756 = vpack.c.b16 %v700, %v696
  %v757 = vpack.c.b16 %v701, %v697
  %v758 = vpack.c.b16 %v702, %v698
  %v759 = vpack.c.b16 %v703, %v699
  %v760 = vpack.c.b16 %v708, %v704
  %v761 = vpack.c.b16 %v709, %v705
  %v762 = vpack.c.b16 %v710, %v706
  %v763 = vpack.c.b16 %v711, %v707
  %v764 = vpack.c.b16 %v716, %v712
  %v765 = vpack.c.b16 %v717, %v713
  %v766 = vpack.c.b16 %v718, %v714
  %v767 = vpack.c.b16 %v719, %v715
  %v768 = vpack.c.b16 %v724, %v720
  %v769 = vpack.c.b16 %v725, %v721
  %v770 = vpack.c.b16 %v726, %v722
  %v771 = vpack.c.b16 %v727, %v723
  %v772 = vpack.c.b16 %v732, %v728
  %v773 = vpack.c.b16 %v733, %v729
  %v774 = vpack.c.b16 %v734, %v730
  %v775 = vpack.c.b16 %v735, %v731
  %v776 = vpack.c.b16 %v740, %v736
  %v777 = vpack.c.b16 %v741, %v737
  %v778 = vpack.c.b16 %v742, %v738
  %v779 = vpack.c.b16 %v743, %v739
  %v780 = vpack.c.b16 %v748, %v744
  %v781 = vpack.c.b16 %v749, %v745
  %v782 = vpack.c.b16 %v750, %v746
  %v783 = vpack.c.b16 %v751, %v747
  %816 = vmatprep.subr.bf16.mxu0 %v781
  %817 = vmatpush1.bf16.msra.mxu0 %v780
  %818 = vmatprep.subr.bf16.mxu0 %v777
  %819 = vmatpush1.bf16.msra.mxu0 %v776
  %820 = vmatprep.subr.bf16.mxu0 %v773
  %821 = vmatpush1.bf16.msra.mxu0 %v772
  %822 = vmatprep.subr.bf16.mxu0 %v769
  %823 = vmatpush1.bf16.msra.mxu0 %v768
  %824 = vmatprep.subr.bf16.mxu0 %v765
  %825 = vmatpush1.bf16.msra.mxu0 %v764
  %826 = vmatprep.subr.bf16.mxu0 %v761
  %827 = vmatpush1.bf16.msra.mxu0 %v760
  %828 = vmatprep.subr.bf16.mxu0 %v757
  %829 = vmatpush1.bf16.msra.mxu0 %v756
  %830 = vmatprep.subr.bf16.mxu0 %v753
  %831 = vmatpush1.bf16.msra.mxu0 %v752
  %832 = vmatprep.subr.bf16.mxu0 0
  %833 = vmatpush2.bf16.msra.mxu0 0
  %834 = vmatprep.subr.bf16.mxu0 0
  %835 = vmatpush2.bf16.msra.mxu0 0
  %836 = vmatprep.subr.bf16.mxu0 0
  %837 = vmatpush2.bf16.msra.mxu0 0
  %838 = vmatprep.subr.bf16.mxu0 0
  %839 = vmatpush2.bf16.msra.mxu0 0
  %840 = vmatprep.subr.bf16.mxu0 0
  %841 = vmatpush2.bf16.msra.mxu0 0
  %842 = vmatprep.subr.bf16.mxu0 0
  %843 = vmatpush2.bf16.msra.mxu0 0
  %844 = vmatprep.subr.bf16.mxu0 0
  %845 = vmatpush2.bf16.msra.mxu0 0
  %846 = vmatprep.subr.bf16.mxu0 0
  %847 = vmatpush2.bf16.msra.mxu0 0
  %848 = vmatprep.mubr.bf16.mxu0 0
  %849 = vmatmul.mubr.bf16.gmra.mxu0 0
  %v850 = vpop.f32.mrf.mxu0
  %v851 = vadd.f32 0.0, %v850
  %v852 = vpop.f32.mrf.mxu0
  %v853 = vadd.f32 0.0, %v852
  %v854 = vpop.f32.mrf.mxu0
  %v855 = vadd.f32 0.0, %v854
  %v856 = vpop.f32.mrf.mxu0
  %v857 = vadd.f32 0.0, %v856
  %858 = vdwg.mxu0
  %859 = vmatprep.subr.bf16.mxu0 %v783
  %860 = vmatpush1.bf16.msra.mxu0 %v782
  %861 = vmatprep.subr.bf16.mxu0 %v779
  %862 = vmatpush1.bf16.msra.mxu0 %v778
  %863 = vmatprep.subr.bf16.mxu0 %v775
  %864 = vmatpush1.bf16.msra.mxu0 %v774
  %865 = vmatprep.subr.bf16.mxu0 %v771
  %866 = vmatpush1.bf16.msra.mxu0 %v770
  %867 = vmatprep.subr.bf16.mxu0 %v767
  %868 = vmatpush1.bf16.msra.mxu0 %v766
  %869 = vmatprep.subr.bf16.mxu0 %v763
  %870 = vmatpush1.bf16.msra.mxu0 %v762
  %871 = vmatprep.subr.bf16.mxu0 %v759
  %872 = vmatpush1.bf16.msra.mxu0 %v758
  %873 = vmatprep.subr.bf16.mxu0 %v755
  %874 = vmatpush1.bf16.msra.mxu0 %v754
  %875 = vmatprep.subr.bf16.mxu0 0
  %876 = vmatpush2.bf16.msra.mxu0 0
  %877 = vmatprep.subr.bf16.mxu0 0
  %878 = vmatpush2.bf16.msra.mxu0 0
  %879 = vmatprep.subr.bf16.mxu0 0
  %880 = vmatpush2.bf16.msra.mxu0 0
  %881 = vmatprep.subr.bf16.mxu0 0
  %882 = vmatpush2.bf16.msra.mxu0 0
  %883 = vmatprep.subr.bf16.mxu0 0
  %884 = vmatpush2.bf16.msra.mxu0 0
  %885 = vmatprep.subr.bf16.mxu0 0
  %886 = vmatpush2.bf16.msra.mxu0 0
  %887 = vmatprep.subr.bf16.mxu0 0
  %888 = vmatpush2.bf16.msra.mxu0 0
  %889 = vmatprep.subr.bf16.mxu0 0
  %890 = vmatpush2.bf16.msra.mxu0 0
  %891 = vmatprep.mubr.bf16.mxu0 0
  %892 = vmatmul.mubr.bf16.gmra.mxu0 0
  %v893 = vpop.f32.mrf.mxu0
  %v894 = vadd.f32 0.0, %v893
  %v895 = vpop.f32.mrf.mxu0
  %v896 = vadd.f32 0.0, %v895
  %v897 = vpop.f32.mrf.mxu0
  %v898 = vadd.f32 0.0, %v897
  %v899 = vpop.f32.mrf.mxu0
  %v900 = vadd.f32 0.0, %v899
  %901 = vdwg.mxu0
  %v902 = vunpack.c.l.bf16 %v620
  %v903 = vunpack.c.h.bf16 %v620
  %v904 = vunpack.c.l.bf16 %v621
  %v905 = vunpack.c.h.bf16 %v621
  %v906 = vunpack.c.l.bf16 %v622
  %v907 = vunpack.c.h.bf16 %v622
  %v908 = vunpack.c.l.bf16 %v623
  %v909 = vunpack.c.h.bf16 %v623
  %v910 = vadd.f32 %v902, %v851
  %v911 = vadd.f32 %v903, %v853
  %v912 = vadd.f32 %v904, %v894
  %v913 = vadd.f32 %v905, %v896
  %v914 = vadd.f32 %v906, %v855
  %v915 = vadd.f32 %v907, %v857
  %v916 = vadd.f32 %v908, %v898
  %v917 = vadd.f32 %v909, %v900
  %v918 = vxor.u32 %v910, 2147483648
  %v919 = vxor.u32 %v911, 2147483648
  %v920 = vxor.u32 %v912, 2147483648
  %v921 = vxor.u32 %v914, 2147483648
  %v922 = vxor.u32 %v915, 2147483648
  %v923 = vxor.u32 %v916, 2147483648
  %v924 = vmul.f32 %v918, 1.442695
  %v925 = vpow.pop %v924
  %v926 = vmul.f32 %v919, 1.442695
  %v927 = vpow.pop %v926
  %v928 = vmul.f32 %v920, 1.442695
  %v929 = vpow.pop %v928
  %v930 = vmul.f32 %v921, 1.442695
  %v931 = vpow.pop %v930
  %v932 = vmul.f32 %v922, 1.442695
  %v933 = vpow.pop %v932
  %v934 = vmul.f32 %v923, 1.442695
  %v935 = vpow.pop %v934
  %v936 = vadd.f32 %v925, 1.0
  %v937 = vadd.f32 %v927, 1.0
  %v938 = vadd.f32 %v929, 1.0
  %v939 = vadd.f32 %v931, 1.0
  %v940 = vadd.f32 %v933, 1.0
  %v941 = vadd.f32 %v935, 1.0
  %v942 = vrcp.pop %v936
  %v943 = vmul.f32 1.0, %v942
  %v944 = vrcp.pop %v937
  %v945 = vmul.f32 1.0, %v944
  %v946 = vrcp.pop %v938
  %v947 = vmul.f32 1.0, %v946
  %v948 = vrcp.pop %v939
  %v949 = vmul.f32 1.0, %v948
  %v950 = vrcp.pop %v940
  %v951 = vmul.f32 1.0, %v950
  %v952 = vrcp.pop %v941
  %v953 = vmul.f32 1.0, %v952
  %v954 = vtanh.pop %v913
  %v955 = vtanh.pop %v917
  %v956 = vmul.f32 %v945, 0.0
  %v957 = vmul.f32 %v951, 0.0
  %v958 = vmul.f32 %v943, %v954
  %v959 = vmul.f32 %v949, %v955
  %v960 = vadd.f32 %v956, %v958
  %v961 = vadd.f32 %v957, %v959
  %v962 = vtanh.pop %v960
  %v963 = vtanh.pop %v961
  %v964 = vmul.f32 %v947, %v962
  %v965 = vmul.f32 %v953, %v963
  %v966 = vpack.c.bf16 %v965, %v964
  %v968 = vunpack.c.l.b16 %v966
  %v969 = vunpack.c.h.b16 %v966
  %v970 = vpack.c.b16 %v968, %v968
  %v971 = vpack.c.b16 %v969, %v969
  %974 = vst [vmem:[#allocation3] sm:$0xf] %v970
  %975 = vst [vmem:[#allocation3 + $0x4] sm:$0xf] %v971
  %s976 = smul.u32 2, 4
  %s977 = smul.addr %s976, 4
  %s978 = scalar_lea.vmem [#allocation2], %s977
  %v979 = vld [vmem:[%s978] sm:$0xff]
  %v980 = vld [vmem:[%s978 + $0x8] sm:$0xff]
  %v981 = vld [vmem:[%s978 + $0x10] sm:$0xff]
  %v982 = vld [vmem:[%s978 + $0x18] sm:$0xff]
  %v983 = vld [vmem:[%s3] sm:$0xff]
  %v984 = vld [vmem:[%s3 + $0x8] sm:$0xff]
  %v985 = vld [vmem:[%s3 + $0x10] sm:$0xff]
  %v986 = vld [vmem:[%s3 + $0x18] sm:$0xff]
  %v987 = vld [vmem:[%s3 + $0x20] sm:$0xff]
  %v988 = vld [vmem:[%s3 + $0x28] sm:$0xff]
  %v989 = vld [vmem:[%s3 + $0x30] sm:$0xff]
  %v990 = vld [vmem:[%s3 + $0x38] sm:$0xff]
  %v991 = vld [vmem:[%s3 + $0x40] sm:$0xff]
  %v992 = vld [vmem:[%s3 + $0x48] sm:$0xff]
  %v993 = vld [vmem:[%s3 + $0x50] sm:$0xff]
  %v994 = vld [vmem:[%s3 + $0x58] sm:$0xff]
  %v995 = vld [vmem:[%s3 + $0x60] sm:$0xff]
  %v996 = vld [vmem:[%s3 + $0x68] sm:$0xff]
  %v997 = vld [vmem:[%s3 + $0x70] sm:$0xff]
  %v998 = vld [vmem:[%s3 + $0x78] sm:$0xff]
  %v999 = vld [vmem:[%s3 + $0x80] sm:$0xff]
  %v1000 = vld [vmem:[%s3 + $0x88] sm:$0xff]
  %v1001 = vld [vmem:[%s3 + $0x90] sm:$0xff]
  %v1002 = vld [vmem:[%s3 + $0x98] sm:$0xff]
  %v1003 = vld [vmem:[%s3 + $0xa0] sm:$0xff]
  %v1004 = vld [vmem:[%s3 + $0xa8] sm:$0xff]
  %v1005 = vld [vmem:[%s3 + $0xb0] sm:$0xff]
  %v1006 = vld [vmem:[%s3 + $0xb8] sm:$0xff]
  %v1007 = vld [vmem:[%s3 + $0xc0] sm:$0xff]
  %v1008 = vld [vmem:[%s3 + $0xc8] sm:$0xff]
  %v1009 = vld [vmem:[%s3 + $0xd0] sm:$0xff]
  %v1010 = vld [vmem:[%s3 + $0xd8] sm:$0xff]
  %v1011 = vld [vmem:[%s3 + $0xe0] sm:$0xff]
  %v1012 = vld [vmem:[%s3 + $0xe8] sm:$0xff]
  %v1013 = vld [vmem:[%s3 + $0xf0] sm:$0xff]
  %v1014 = vld [vmem:[%s3 + $0xf8] sm:$0xff]
  %v1047 = vunpack.c.l.b16 %v983
  %v1048 = vunpack.c.h.b16 %v983
  %v1049 = vunpack.c.l.b16 %v984
  %v1050 = vunpack.c.h.b16 %v984
  %v1051 = vunpack.c.l.b16 %v985
  %v1052 = vunpack.c.h.b16 %v985
  %v1053 = vunpack.c.l.b16 %v986
  %v1054 = vunpack.c.h.b16 %v986
  %v1055 = vunpack.c.l.b16 %v987
  %v1056 = vunpack.c.h.b16 %v987
  %v1057 = vunpack.c.l.b16 %v988
  %v1058 = vunpack.c.h.b16 %v988
  %v1059 = vunpack.c.l.b16 %v989
  %v1060 = vunpack.c.h.b16 %v989
  %v1061 = vunpack.c.l.b16 %v990
  %v1062 = vunpack.c.h.b16 %v990
  %v1063 = vunpack.c.l.b16 %v991
  %v1064 = vunpack.c.h.b16 %v991
  %v1065 = vunpack.c.l.b16 %v992
  %v1066 = vunpack.c.h.b16 %v992
  %v1067 = vunpack.c.l.b16 %v993
  %v1068 = vunpack.c.h.b16 %v993
  %v1069 = vunpack.c.l.b16 %v994
  %v1070 = vunpack.c.h.b16 %v994
  %v1071 = vunpack.c.l.b16 %v995
  %v1072 = vunpack.c.h.b16 %v995
  %v1073 = vunpack.c.l.b16 %v996
  %v1074 = vunpack.c.h.b16 %v996
  %v1075 = vunpack.c.l.b16 %v997
  %v1076 = vunpack.c.h.b16 %v997
  %v1077 = vunpack.c.l.b16 %v998
  %v1078 = vunpack.c.h.b16 %v998
  %v1079 = vunpack.c.l.b16 %v999
  %v1080 = vunpack.c.h.b16 %v999
  %v1081 = vunpack.c.l.b16 %v1000
  %v1082 = vunpack.c.h.b16 %v1000
  %v1083 = vunpack.c.l.b16 %v1001
  %v1084 = vunpack.c.h.b16 %v1001
  %v1085 = vunpack.c.l.b16 %v1002
  %v1086 = vunpack.c.h.b16 %v1002
  %v1087 = vunpack.c.l.b16 %v1003
  %v1088 = vunpack.c.h.b16 %v1003
  %v1089 = vunpack.c.l.b16 %v1004
  %v1090 = vunpack.c.h.b16 %v1004
  %v1091 = vunpack.c.l.b16 %v1005
  %v1092 = vunpack.c.h.b16 %v1005
  %v1093 = vunpack.c.l.b16 %v1006
  %v1094 = vunpack.c.h.b16 %v1006
  %v1095 = vunpack.c.l.b16 %v1007
  %v1096 = vunpack.c.h.b16 %v1007
  %v1097 = vunpack.c.l.b16 %v1008
  %v1098 = vunpack.c.h.b16 %v1008
  %v1099 = vunpack.c.l.b16 %v1009
  %v1100 = vunpack.c.h.b16 %v1009
  %v1101 = vunpack.c.l.b16 %v1010
  %v1102 = vunpack.c.h.b16 %v1010
  %v1103 = vunpack.c.l.b16 %v1011
  %v1104 = vunpack.c.h.b16 %v1011
  %v1105 = vunpack.c.l.b16 %v1012
  %v1106 = vunpack.c.h.b16 %v1012
  %v1107 = vunpack.c.l.b16 %v1013
  %v1108 = vunpack.c.h.b16 %v1013
  %v1109 = vunpack.c.l.b16 %v1014
  %v1110 = vunpack.c.h.b16 %v1014
  %v1111 = vpack.c.b16 %v1051, %v1047
  %v1112 = vpack.c.b16 %v1052, %v1048
  %v1113 = vpack.c.b16 %v1053, %v1049
  %v1114 = vpack.c.b16 %v1054, %v1050
  %v1115 = vpack.c.b16 %v1059, %v1055
  %v1116 = vpack.c.b16 %v1060, %v1056
  %v1117 = vpack.c.b16 %v1061, %v1057
  %v1118 = vpack.c.b16 %v1062, %v1058
  %v1119 = vpack.c.b16 %v1067, %v1063
  %v1120 = vpack.c.b16 %v1068, %v1064
  %v1121 = vpack.c.b16 %v1069, %v1065
  %v1122 = vpack.c.b16 %v1070, %v1066
  %v1123 = vpack.c.b16 %v1075, %v1071
  %v1124 = vpack.c.b16 %v1076, %v1072
  %v1125 = vpack.c.b16 %v1077, %v1073
  %v1126 = vpack.c.b16 %v1078, %v1074
  %v1127 = vpack.c.b16 %v1083, %v1079
  %v1128 = vpack.c.b16 %v1084, %v1080
  %v1129 = vpack.c.b16 %v1085, %v1081
  %v1130 = vpack.c.b16 %v1086, %v1082
  %v1131 = vpack.c.b16 %v1091, %v1087
  %v1132 = vpack.c.b16 %v1092, %v1088
  %v1133 = vpack.c.b16 %v1093, %v1089
  %v1134 = vpack.c.b16 %v1094, %v1090
  %v1135 = vpack.c.b16 %v1099, %v1095
  %v1136 = vpack.c.b16 %v1100, %v1096
  %v1137 = vpack.c.b16 %v1101, %v1097
  %v1138 = vpack.c.b16 %v1102, %v1098
  %v1139 = vpack.c.b16 %v1107, %v1103
  %v1140 = vpack.c.b16 %v1108, %v1104
  %v1141 = vpack.c.b16 %v1109, %v1105
  %v1142 = vpack.c.b16 %v1110, %v1106
  %1175 = vmatprep.subr.bf16.mxu0 %v1140
  %1176 = vmatpush1.bf16.msra.mxu0 %v1139
  %1177 = vmatprep.subr.bf16.mxu0 %v1136
  %1178 = vmatpush1.bf16.msra.mxu0 %v1135
  %1179 = vmatprep.subr.bf16.mxu0 %v1132
  %1180 = vmatpush1.bf16.msra.mxu0 %v1131
  %1181 = vmatprep.subr.bf16.mxu0 %v1128
  %1182 = vmatpush1.bf16.msra.mxu0 %v1127
  %1183 = vmatprep.subr.bf16.mxu0 %v1124
  %1184 = vmatpush1.bf16.msra.mxu0 %v1123
  %1185 = vmatprep.subr.bf16.mxu0 %v1120
  %1186 = vmatpush1.bf16.msra.mxu0 %v1119
  %1187 = vmatprep.subr.bf16.mxu0 %v1116
  %1188 = vmatpush1.bf16.msra.mxu0 %v1115
  %1189 = vmatprep.subr.bf16.mxu0 %v1112
  %1190 = vmatpush1.bf16.msra.mxu0 %v1111
  %1191 = vmatprep.subr.bf16.mxu0 0
  %1192 = vmatpush2.bf16.msra.mxu0 0
  %1193 = vmatprep.subr.bf16.mxu0 0
  %1194 = vmatpush2.bf16.msra.mxu0 0
  %1195 = vmatprep.subr.bf16.mxu0 0
  %1196 = vmatpush2.bf16.msra.mxu0 0
  %1197 = vmatprep.subr.bf16.mxu0 0
  %1198 = vmatpush2.bf16.msra.mxu0 0
  %1199 = vmatprep.subr.bf16.mxu0 0
  %1200 = vmatpush2.bf16.msra.mxu0 0
  %1201 = vmatprep.subr.bf16.mxu0 0
  %1202 = vmatpush2.bf16.msra.mxu0 0
  %1203 = vmatprep.subr.bf16.mxu0 0
  %1204 = vmatpush2.bf16.msra.mxu0 0
  %1205 = vmatprep.subr.bf16.mxu0 0
  %1206 = vmatpush2.bf16.msra.mxu0 0
  %1207 = vmatprep.mubr.bf16.mxu0 0
  %1208 = vmatmul.mubr.bf16.gmra.mxu0 %v966
  %v1209 = vpop.f32.mrf.mxu0
  %v1210 = vadd.f32 0.0, %v1209
  %v1211 = vpop.f32.mrf.mxu0
  %v1212 = vadd.f32 0.0, %v1211
  %v1213 = vpop.f32.mrf.mxu0
  %v1214 = vadd.f32 0.0, %v1213
  %v1215 = vpop.f32.mrf.mxu0
  %v1216 = vadd.f32 0.0, %v1215
  %1217 = vdwg.mxu0
  %1218 = vmatprep.subr.bf16.mxu0 %v1142
  %1219 = vmatpush1.bf16.msra.mxu0 %v1141
  %1220 = vmatprep.subr.bf16.mxu0 %v1138
  %1221 = vmatpush1.bf16.msra.mxu0 %v1137
  %1222 = vmatprep.subr.bf16.mxu0 %v1134
  %1223 = vmatpush1.bf16.msra.mxu0 %v1133
  %1224 = vmatprep.subr.bf16.mxu0 %v1130
  %1225 = vmatpush1.bf16.msra.mxu0 %v1129
  %1226 = vmatprep.subr.bf16.mxu0 %v1126
  %1227 = vmatpush1.bf16.msra.mxu0 %v1125
  %1228 = vmatprep.subr.bf16.mxu0 %v1122
  %1229 = vmatpush1.bf16.msra.mxu0 %v1121
  %1230 = vmatprep.subr.bf16.mxu0 %v1118
  %1231 = vmatpush1.bf16.msra.mxu0 %v1117
  %1232 = vmatprep.subr.bf16.mxu0 %v1114
  %1233 = vmatpush1.bf16.msra.mxu0 %v1113
  %1234 = vmatprep.subr.bf16.mxu0 0
  %1235 = vmatpush2.bf16.msra.mxu0 0
  %1236 = vmatprep.subr.bf16.mxu0 0
  %1237 = vmatpush2.bf16.msra.mxu0 0
  %1238 = vmatprep.subr.bf16.mxu0 0
  %1239 = vmatpush2.bf16.msra.mxu0 0
  %1240 = vmatprep.subr.bf16.mxu0 0
  %1241 = vmatpush2.bf16.msra.mxu0 0
  %1242 = vmatprep.subr.bf16.mxu0 0
  %1243 = vmatpush2.bf16.msra.mxu0 0
  %1244 = vmatprep.subr.bf16.mxu0 0
  %1245 = vmatpush2.bf16.msra.mxu0 0
  %1246 = vmatprep.subr.bf16.mxu0 0
  %1247 = vmatpush2.bf16.msra.mxu0 0
  %1248 = vmatprep.subr.bf16.mxu0 0
  %1249 = vmatpush2.bf16.msra.mxu0 0
  %1250 = vmatprep.mubr.bf16.mxu0 0
  %1251 = vmatmul.mubr.bf16.gmra.mxu0 %v966
  %v1252 = vpop.f32.mrf.mxu0
  %v1253 = vadd.f32 0.0, %v1252
  %v1254 = vpop.f32.mrf.mxu0
  %v1255 = vadd.f32 0.0, %v1254
  %v1256 = vpop.f32.mrf.mxu0
  %v1257 = vadd.f32 0.0, %v1256
  %v1258 = vpop.f32.mrf.mxu0
  %v1259 = vadd.f32 0.0, %v1258
  %1260 = vdwg.mxu0
  %v1261 = vunpack.c.l.bf16 %v979
  %v1262 = vunpack.c.h.bf16 %v979
  %v1263 = vunpack.c.l.bf16 %v980
  %v1264 = vunpack.c.h.bf16 %v980
  %v1265 = vunpack.c.l.bf16 %v981
  %v1266 = vunpack.c.h.bf16 %v981
  %v1267 = vunpack.c.l.bf16 %v982
  %v1268 = vunpack.c.h.bf16 %v982
  %v1269 = vadd.f32 %v1261, %v1210
  %v1270 = vadd.f32 %v1262, %v1212
  %v1271 = vadd.f32 %v1263, %v1253
  %v1272 = vadd.f32 %v1264, %v1255
  %v1273 = vadd.f32 %v1265, %v1214
  %v1274 = vadd.f32 %v1266, %v1216
  %v1275 = vadd.f32 %v1267, %v1257
  %v1276 = vadd.f32 %v1268, %v1259
  %v1277 = vxor.u32 %v1269, 2147483648
  %v1278 = vxor.u32 %v1270, 2147483648
  %v1279 = vxor.u32 %v1271, 2147483648
  %v1280 = vxor.u32 %v1273, 2147483648
  %v1281 = vxor.u32 %v1274, 2147483648
  %v1282 = vxor.u32 %v1275, 2147483648
  %v1283 = vmul.f32 %v1277, 1.442695
  %v1284 = vpow.pop %v1283
  %v1285 = vmul.f32 %v1278, 1.442695
  %v1286 = vpow.pop %v1285
  %v1287 = vmul.f32 %v1279, 1.442695
  %v1288 = vpow.pop %v1287
  %v1289 = vmul.f32 %v1280, 1.442695
  %v1290 = vpow.pop %v1289
  %v1291 = vmul.f32 %v1281, 1.442695
  %v1292 = vpow.pop %v1291
  %v1293 = vmul.f32 %v1282, 1.442695
  %v1294 = vpow.pop %v1293
  %v1295 = vadd.f32 %v1284, 1.0
  %v1296 = vadd.f32 %v1286, 1.0
  %v1297 = vadd.f32 %v1288, 1.0
  %v1298 = vadd.f32 %v1290, 1.0
  %v1299 = vadd.f32 %v1292, 1.0
  %v1300 = vadd.f32 %v1294, 1.0
  %v1301 = vrcp.pop %v1295
  %v1302 = vmul.f32 1.0, %v1301
  %v1303 = vrcp.pop %v1296
  %v1304 = vmul.f32 1.0, %v1303
  %v1305 = vrcp.pop %v1297
  %v1306 = vmul.f32 1.0, %v1305
  %v1307 = vrcp.pop %v1298
  %v1308 = vmul.f32 1.0, %v1307
  %v1309 = vrcp.pop %v1299
  %v1310 = vmul.f32 1.0, %v1309
  %v1311 = vrcp.pop %v1300
  %v1312 = vmul.f32 1.0, %v1311
  %v1313 = vtanh.pop %v1272
  %v1314 = vtanh.pop %v1276
  %v1315 = vmul.f32 %v1304, %v960
  %v1316 = vmul.f32 %v1310, %v961
  %v1317 = vmul.f32 %v1302, %v1313
  %v1318 = vmul.f32 %v1308, %v1314
  %v1319 = vadd.f32 %v1315, %v1317
  %v1320 = vadd.f32 %v1316, %v1318
  %v1321 = vtanh.pop %v1319
  %v1322 = vtanh.pop %v1320
  %v1323 = vmul.f32 %v1306, %v1321
  %v1324 = vmul.f32 %v1312, %v1322
  %v1325 = vpack.c.bf16 %v1324, %v1323
  %v1327 = vunpack.c.l.b16 %v1325
  %v1328 = vunpack.c.h.b16 %v1325
  %v1329 = vpack.c.b16 %v1327, %v1327
  %v1330 = vpack.c.b16 %v1328, %v1328
  %s1333 = scalar_lea.vmem [#allocation3], 8
  %1334 = vst [vmem:[%s1333] sm:$0xf] %v1329
  %1335 = vst [vmem:[%s1333 + $0x4] sm:$0xf] %v1330
  %s1336 = smul.u32 4, 4
  %s1337 = smul.addr %s1336, 4
  %s1338 = scalar_lea.vmem [#allocation2], %s1337
  %v1339 = vld [vmem:[%s1338] sm:$0xff]
  %v1340 = vld [vmem:[%s1338 + $0x8] sm:$0xff]
  %v1341 = vld [vmem:[%s1338 + $0x10] sm:$0xff]
  %v1342 = vld [vmem:[%s1338 + $0x18] sm:$0xff]
  %v1343 = vld [vmem:[%s3] sm:$0xff]
  %v1344 = vld [vmem:[%s3 + $0x8] sm:$0xff]
  %v1345 = vld [vmem:[%s3 + $0x10] sm:$0xff]
  %v1346 = vld [vmem:[%s3 + $0x18] sm:$0xff]
  %v1347 = vld [vmem:[%s3 + $0x20] sm:$0xff]
  %v1348 = vld [vmem:[%s3 + $0x28] sm:$0xff]
  %v1349 = vld [vmem:[%s3 + $0x30] sm:$0xff]
  %v1350 = vld [vmem:[%s3 + $0x38] sm:$0xff]
  %v1351 = vld [vmem:[%s3 + $0x40] sm:$0xff]
  %v1352 = vld [vmem:[%s3 + $0x48] sm:$0xff]
  %v1353 = vld [vmem:[%s3 + $0x50] sm:$0xff]
  %v1354 = vld [vmem:[%s3 + $0x58] sm:$0xff]
  %v1355 = vld [vmem:[%s3 + $0x60] sm:$0xff]
  %v1356 = vld [vmem:[%s3 + $0x68] sm:$0xff]
  %v1357 = vld [vmem:[%s3 + $0x70] sm:$0xff]
  %v1358 = vld [vmem:[%s3 + $0x78] sm:$0xff]
  %v1359 = vld [vmem:[%s3 + $0x80] sm:$0xff]
  %v1360 = vld [vmem:[%s3 + $0x88] sm:$0xff]
  %v1361 = vld [vmem:[%s3 + $0x90] sm:$0xff]
  %v1362 = vld [vmem:[%s3 + $0x98] sm:$0xff]
  %v1363 = vld [vmem:[%s3 + $0xa0] sm:$0xff]
  %v1364 = vld [vmem:[%s3 + $0xa8] sm:$0xff]
  %v1365 = vld [vmem:[%s3 + $0xb0] sm:$0xff]
  %v1366 = vld [vmem:[%s3 + $0xb8] sm:$0xff]
  %v1367 = vld [vmem:[%s3 + $0xc0] sm:$0xff]
  %v1368 = vld [vmem:[%s3 + $0xc8] sm:$0xff]
  %v1369 = vld [vmem:[%s3 + $0xd0] sm:$0xff]
  %v1370 = vld [vmem:[%s3 + $0xd8] sm:$0xff]
  %v1371 = vld [vmem:[%s3 + $0xe0] sm:$0xff]
  %v1372 = vld [vmem:[%s3 + $0xe8] sm:$0xff]
  %v1373 = vld [vmem:[%s3 + $0xf0] sm:$0xff]
  %v1374 = vld [vmem:[%s3 + $0xf8] sm:$0xff]
  %v1407 = vunpack.c.l.b16 %v1343
  %v1408 = vunpack.c.h.b16 %v1343
  %v1409 = vunpack.c.l.b16 %v1344
  %v1410 = vunpack.c.h.b16 %v1344
  %v1411 = vunpack.c.l.b16 %v1345
  %v1412 = vunpack.c.h.b16 %v1345
  %v1413 = vunpack.c.l.b16 %v1346
  %v1414 = vunpack.c.h.b16 %v1346
  %v1415 = vunpack.c.l.b16 %v1347
  %v1416 = vunpack.c.h.b16 %v1347
  %v1417 = vunpack.c.l.b16 %v1348
  %v1418 = vunpack.c.h.b16 %v1348
  %v1419 = vunpack.c.l.b16 %v1349
  %v1420 = vunpack.c.h.b16 %v1349
  %v1421 = vunpack.c.l.b16 %v1350
  %v1422 = vunpack.c.h.b16 %v1350
  %v1423 = vunpack.c.l.b16 %v1351
  %v1424 = vunpack.c.h.b16 %v1351
  %v1425 = vunpack.c.l.b16 %v1352
  %v1426 = vunpack.c.h.b16 %v1352
  %v1427 = vunpack.c.l.b16 %v1353
  %v1428 = vunpack.c.h.b16 %v1353
  %v1429 = vunpack.c.l.b16 %v1354
  %v1430 = vunpack.c.h.b16 %v1354
  %v1431 = vunpack.c.l.b16 %v1355
  %v1432 = vunpack.c.h.b16 %v1355
  %v1433 = vunpack.c.l.b16 %v1356
  %v1434 = vunpack.c.h.b16 %v1356
  %v1435 = vunpack.c.l.b16 %v1357
  %v1436 = vunpack.c.h.b16 %v1357
  %v1437 = vunpack.c.l.b16 %v1358
  %v1438 = vunpack.c.h.b16 %v1358
  %v1439 = vunpack.c.l.b16 %v1359
  %v1440 = vunpack.c.h.b16 %v1359
  %v1441 = vunpack.c.l.b16 %v1360
  %v1442 = vunpack.c.h.b16 %v1360
  %v1443 = vunpack.c.l.b16 %v1361
  %v1444 = vunpack.c.h.b16 %v1361
  %v1445 = vunpack.c.l.b16 %v1362
  %v1446 = vunpack.c.h.b16 %v1362
  %v1447 = vunpack.c.l.b16 %v1363
  %v1448 = vunpack.c.h.b16 %v1363
  %v1449 = vunpack.c.l.b16 %v1364
  %v1450 = vunpack.c.h.b16 %v1364
  %v1451 = vunpack.c.l.b16 %v1365
  %v1452 = vunpack.c.h.b16 %v1365
  %v1453 = vunpack.c.l.b16 %v1366
  %v1454 = vunpack.c.h.b16 %v1366
  %v1455 = vunpack.c.l.b16 %v1367
  %v1456 = vunpack.c.h.b16 %v1367
  %v1457 = vunpack.c.l.b16 %v1368
  %v1458 = vunpack.c.h.b16 %v1368
  %v1459 = vunpack.c.l.b16 %v1369
  %v1460 = vunpack.c.h.b16 %v1369
  %v1461 = vunpack.c.l.b16 %v1370
  %v1462 = vunpack.c.h.b16 %v1370
  %v1463 = vunpack.c.l.b16 %v1371
  %v1464 = vunpack.c.h.b16 %v1371
  %v1465 = vunpack.c.l.b16 %v1372
  %v1466 = vunpack.c.h.b16 %v1372
  %v1467 = vunpack.c.l.b16 %v1373
  %v1468 = vunpack.c.h.b16 %v1373
  %v1469 = vunpack.c.l.b16 %v1374
  %v1470 = vunpack.c.h.b16 %v1374
  %v1471 = vpack.c.b16 %v1411, %v1407
  %v1472 = vpack.c.b16 %v1412, %v1408
  %v1473 = vpack.c.b16 %v1413, %v1409
  %v1474 = vpack.c.b16 %v1414, %v1410
  %v1475 = vpack.c.b16 %v1419, %v1415
  %v1476 = vpack.c.b16 %v1420, %v1416
  %v1477 = vpack.c.b16 %v1421, %v1417
  %v1478 = vpack.c.b16 %v1422, %v1418
  %v1479 = vpack.c.b16 %v1427, %v1423
  %v1480 = vpack.c.b16 %v1428, %v1424
  %v1481 = vpack.c.b16 %v1429, %v1425
  %v1482 = vpack.c.b16 %v1430, %v1426
  %v1483 = vpack.c.b16 %v1435, %v1431
  %v1484 = vpack.c.b16 %v1436, %v1432
  %v1485 = vpack.c.b16 %v1437, %v1433
  %v1486 = vpack.c.b16 %v1438, %v1434
  %v1487 = vpack.c.b16 %v1443, %v1439
  %v1488 = vpack.c.b16 %v1444, %v1440
  %v1489 = vpack.c.b16 %v1445, %v1441
  %v1490 = vpack.c.b16 %v1446, %v1442
  %v1491 = vpack.c.b16 %v1451, %v1447
  %v1492 = vpack.c.b16 %v1452, %v1448
  %v1493 = vpack.c.b16 %v1453, %v1449
  %v1494 = vpack.c.b16 %v1454, %v1450
  %v1495 = vpack.c.b16 %v1459, %v1455
  %v1496 = vpack.c.b16 %v1460, %v1456
  %v1497 = vpack.c.b16 %v1461, %v1457
  %v1498 = vpack.c.b16 %v1462, %v1458
  %v1499 = vpack.c.b16 %v1467, %v1463
  %v1500 = vpack.c.b16 %v1468, %v1464
  %v1501 = vpack.c.b16 %v1469, %v1465
  %v1502 = vpack.c.b16 %v1470, %v1466
  %1535 = vmatprep.subr.bf16.mxu0 %v1500
  %1536 = vmatpush1.bf16.msra.mxu0 %v1499
  %1537 = vmatprep.subr.bf16.mxu0 %v1496
  %1538 = vmatpush1.bf16.msra.mxu0 %v1495
  %1539 = vmatprep.subr.bf16.mxu0 %v1492
  %1540 = vmatpush1.bf16.msra.mxu0 %v1491
  %1541 = vmatprep.subr.bf16.mxu0 %v1488
  %1542 = vmatpush1.bf16.msra.mxu0 %v1487
  %1543 = vmatprep.subr.bf16.mxu0 %v1484
  %1544 = vmatpush1.bf16.msra.mxu0 %v1483
  %1545 = vmatprep.subr.bf16.mxu0 %v1480
  %1546 = vmatpush1.bf16.msra.mxu0 %v1479
  %1547 = vmatprep.subr.bf16.mxu0 %v1476
  %1548 = vmatpush1.bf16.msra.mxu0 %v1475
  %1549 = vmatprep.subr.bf16.mxu0 %v1472
  %1550 = vmatpush1.bf16.msra.mxu0 %v1471
  %1551 = vmatprep.subr.bf16.mxu0 0
  %1552 = vmatpush2.bf16.msra.mxu0 0
  %1553 = vmatprep.subr.bf16.mxu0 0
  %1554 = vmatpush2.bf16.msra.mxu0 0
  %1555 = vmatprep.subr.bf16.mxu0 0
  %1556 = vmatpush2.bf16.msra.mxu0 0
  %1557 = vmatprep.subr.bf16.mxu0 0
  %1558 = vmatpush2.bf16.msra.mxu0 0
  %1559 = vmatprep.subr.bf16.mxu0 0
  %1560 = vmatpush2.bf16.msra.mxu0 0
  %1561 = vmatprep.subr.bf16.mxu0 0
  %1562 = vmatpush2.bf16.msra.mxu0 0
  %1563 = vmatprep.subr.bf16.mxu0 0
  %1564 = vmatpush2.bf16.msra.mxu0 0
  %1565 = vmatprep.subr.bf16.mxu0 0
  %1566 = vmatpush2.bf16.msra.mxu0 0
  %1567 = vmatprep.mubr.bf16.mxu0 0
  %1568 = vmatmul.mubr.bf16.gmra.mxu0 %v1325
  %v1569 = vpop.f32.mrf.mxu0
  %v1570 = vadd.f32 0.0, %v1569
  %v1571 = vpop.f32.mrf.mxu0
  %v1572 = vadd.f32 0.0, %v1571
  %v1573 = vpop.f32.mrf.mxu0
  %v1574 = vadd.f32 0.0, %v1573
  %v1575 = vpop.f32.mrf.mxu0
  %v1576 = vadd.f32 0.0, %v1575
  %1577 = vdwg.mxu0
  %1578 = vmatprep.subr.bf16.mxu0 %v1502
  %1579 = vmatpush1.bf16.msra.mxu0 %v1501
  %1580 = vmatprep.subr.bf16.mxu0 %v1498
  %1581 = vmatpush1.bf16.msra.mxu0 %v1497
  %1582 = vmatprep.subr.bf16.mxu0 %v1494
  %1583 = vmatpush1.bf16.msra.mxu0 %v1493
  %1584 = vmatprep.subr.bf16.mxu0 %v1490
  %1585 = vmatpush1.bf16.msra.mxu0 %v1489
  %1586 = vmatprep.subr.bf16.mxu0 %v1486
  %1587 = vmatpush1.bf16.msra.mxu0 %v1485
  %1588 = vmatprep.subr.bf16.mxu0 %v1482
  %1589 = vmatpush1.bf16.msra.mxu0 %v1481
  %1590 = vmatprep.subr.bf16.mxu0 %v1478
  %1591 = vmatpush1.bf16.msra.mxu0 %v1477
  %1592 = vmatprep.subr.bf16.mxu0 %v1474
  %1593 = vmatpush1.bf16.msra.mxu0 %v1473
  %1594 = vmatprep.subr.bf16.mxu0 0
  %1595 = vmatpush2.bf16.msra.mxu0 0
  %1596 = vmatprep.subr.bf16.mxu0 0
  %1597 = vmatpush2.bf16.msra.mxu0 0
  %1598 = vmatprep.subr.bf16.mxu0 0
  %1599 = vmatpush2.bf16.msra.mxu0 0
  %1600 = vmatprep.subr.bf16.mxu0 0
  %1601 = vmatpush2.bf16.msra.mxu0 0
  %1602 = vmatprep.subr.bf16.mxu0 0
  %1603 = vmatpush2.bf16.msra.mxu0 0
  %1604 = vmatprep.subr.bf16.mxu0 0
  %1605 = vmatpush2.bf16.msra.mxu0 0
  %1606 = vmatprep.subr.bf16.mxu0 0
  %1607 = vmatpush2.bf16.msra.mxu0 0
  %1608 = vmatprep.subr.bf16.mxu0 0
  %1609 = vmatpush2.bf16.msra.mxu0 0
  %1610 = vmatprep.mubr.bf16.mxu0 0
  %1611 = vmatmul.mubr.bf16.gmra.mxu0 %v1325
  %v1612 = vpop.f32.mrf.mxu0
  %v1613 = vadd.f32 0.0, %v1612
  %v1614 = vpop.f32.mrf.mxu0
  %v1615 = vadd.f32 0.0, %v1614
  %v1616 = vpop.f32.mrf.mxu0
  %v1617 = vadd.f32 0.0, %v1616
  %v1618 = vpop.f32.mrf.mxu0
  %v1619 = vadd.f32 0.0, %v1618
  %1620 = vdwg.mxu0
  %v1621 = vunpack.c.l.bf16 %v1339
  %v1622 = vunpack.c.h.bf16 %v1339
  %v1623 = vunpack.c.l.bf16 %v1340
  %v1624 = vunpack.c.h.bf16 %v1340
  %v1625 = vunpack.c.l.bf16 %v1341
  %v1626 = vunpack.c.h.bf16 %v1341
  %v1627 = vunpack.c.l.bf16 %v1342
  %v1628 = vunpack.c.h.bf16 %v1342
  %v1629 = vadd.f32 %v1621, %v1570
  %v1630 = vadd.f32 %v1622, %v1572
  %v1631 = vadd.f32 %v1623, %v1613
  %v1632 = vadd.f32 %v1624, %v1615
  %v1633 = vadd.f32 %v1625, %v1574
  %v1634 = vadd.f32 %v1626, %v1576
  %v1635 = vadd.f32 %v1627, %v1617
  %v1636 = vadd.f32 %v1628, %v1619
  %v1637 = vxor.u32 %v1629, 2147483648
  %v1638 = vxor.u32 %v1630, 2147483648
  %v1639 = vxor.u32 %v1631, 2147483648
  %v1640 = vxor.u32 %v1633, 2147483648
  %v1641 = vxor.u32 %v1634, 2147483648
  %v1642 = vxor.u32 %v1635, 2147483648
  %v1643 = vmul.f32 %v1637, 1.442695
  %v1644 = vpow.pop %v1643
  %v1645 = vmul.f32 %v1638, 1.442695
  %v1646 = vpow.pop %v1645
  %v1647 = vmul.f32 %v1639, 1.442695
  %v1648 = vpow.pop %v1647
  %v1649 = vmul.f32 %v1640, 1.442695
  %v1650 = vpow.pop %v1649
  %v1651 = vmul.f32 %v1641, 1.442695
  %v1652 = vpow.pop %v1651
  %v1653 = vmul.f32 %v1642, 1.442695
  %v1654 = vpow.pop %v1653
  %v1655 = vadd.f32 %v1644, 1.0
  %v1656 = vadd.f32 %v1646, 1.0
  %v1657 = vadd.f32 %v1648, 1.0
  %v1658 = vadd.f32 %v1650, 1.0
  %v1659 = vadd.f32 %v1652, 1.0
  %v1660 = vadd.f32 %v1654, 1.0
  %v1661 = vrcp.pop %v1655
  %v1662 = vmul.f32 1.0, %v1661
  %v1663 = vrcp.pop %v1656
  %v1664 = vmul.f32 1.0, %v1663
  %v1665 = vrcp.pop %v1657
  %v1666 = vmul.f32 1.0, %v1665
  %v1667 = vrcp.pop %v1658
  %v1668 = vmul.f32 1.0, %v1667
  %v1669 = vrcp.pop %v1659
  %v1670 = vmul.f32 1.0, %v1669
  %v1671 = vrcp.pop %v1660
  %v1672 = vmul.f32 1.0, %v1671
  %v1673 = vtanh.pop %v1632
  %v1674 = vtanh.pop %v1636
  %v1675 = vmul.f32 %v1664, %v1319
  %v1676 = vmul.f32 %v1670, %v1320
  %v1677 = vmul.f32 %v1662, %v1673
  %v1678 = vmul.f32 %v1668, %v1674
  %v1679 = vadd.f32 %v1675, %v1677
  %v1680 = vadd.f32 %v1676, %v1678
  %v1681 = vtanh.pop %v1679
  %v1682 = vtanh.pop %v1680
  %v1683 = vmul.f32 %v1666, %v1681
  %v1684 = vmul.f32 %v1672, %v1682
  %v1685 = vpack.c.bf16 %v1684, %v1683
  %v1687 = vunpack.c.l.b16 %v1685
  %v1688 = vunpack.c.h.b16 %v1685
  %v1689 = vpack.c.b16 %v1687, %v1687
  %v1690 = vpack.c.b16 %v1688, %v1688
  %s1693 = scalar_lea.vmem [#allocation3], 16
  %1694 = vst [vmem:[%s1693] sm:$0xf] %v1689
  %1695 = vst [vmem:[%s1693 + $0x4] sm:$0xf] %v1690
  %s1696 = smul.u32 6, 4
  %s1697 = smul.addr %s1696, 4
  %s1698 = scalar_lea.vmem [#allocation2], %s1697
  %v1699 = vld [vmem:[%s1698] sm:$0xff]
  %v1700 = vld [vmem:[%s1698 + $0x8] sm:$0xff]
  %v1701 = vld [vmem:[%s1698 + $0x10] sm:$0xff]
  %v1702 = vld [vmem:[%s1698 + $0x18] sm:$0xff]
  %v1703 = vld [vmem:[%s3] sm:$0xff]
  %v1704 = vld [vmem:[%s3 + $0x8] sm:$0xff]
  %v1705 = vld [vmem:[%s3 + $0x10] sm:$0xff]
  %v1706 = vld [vmem:[%s3 + $0x18] sm:$0xff]
  %v1707 = vld [vmem:[%s3 + $0x20] sm:$0xff]
  %v1708 = vld [vmem:[%s3 + $0x28] sm:$0xff]
  %v1709 = vld [vmem:[%s3 + $0x30] sm:$0xff]
  %v1710 = vld [vmem:[%s3 + $0x38] sm:$0xff]
  %v1711 = vld [vmem:[%s3 + $0x40] sm:$0xff]
  %v1712 = vld [vmem:[%s3 + $0x48] sm:$0xff]
  %v1713 = vld [vmem:[%s3 + $0x50] sm:$0xff]
  %v1714 = vld [vmem:[%s3 + $0x58] sm:$0xff]
  %v1715 = vld [vmem:[%s3 + $0x60] sm:$0xff]
  %v1716 = vld [vmem:[%s3 + $0x68] sm:$0xff]
  %v1717 = vld [vmem:[%s3 + $0x70] sm:$0xff]
  %v1718 = vld [vmem:[%s3 + $0x78] sm:$0xff]
  %v1719 = vld [vmem:[%s3 + $0x80] sm:$0xff]
  %v1720 = vld [vmem:[%s3 + $0x88] sm:$0xff]
  %v1721 = vld [vmem:[%s3 + $0x90] sm:$0xff]
  %v1722 = vld [vmem:[%s3 + $0x98] sm:$0xff]
  %v1723 = vld [vmem:[%s3 + $0xa0] sm:$0xff]
  %v1724 = vld [vmem:[%s3 + $0xa8] sm:$0xff]
  %v1725 = vld [vmem:[%s3 + $0xb0] sm:$0xff]
  %v1726 = vld [vmem:[%s3 + $0xb8] sm:$0xff]
  %v1727 = vld [vmem:[%s3 + $0xc0] sm:$0xff]
  %v1728 = vld [vmem:[%s3 + $0xc8] sm:$0xff]
  %v1729 = vld [vmem:[%s3 + $0xd0] sm:$0xff]
  %v1730 = vld [vmem:[%s3 + $0xd8] sm:$0xff]
  %v1731 = vld [vmem:[%s3 + $0xe0] sm:$0xff]
  %v1732 = vld [vmem:[%s3 + $0xe8] sm:$0xff]
  %v1733 = vld [vmem:[%s3 + $0xf0] sm:$0xff]
  %v1734 = vld [vmem:[%s3 + $0xf8] sm:$0xff]
  %v1767 = vunpack.c.l.b16 %v1703
  %v1768 = vunpack.c.h.b16 %v1703
  %v1769 = vunpack.c.l.b16 %v1704
  %v1770 = vunpack.c.h.b16 %v1704
  %v1771 = vunpack.c.l.b16 %v1705
  %v1772 = vunpack.c.h.b16 %v1705
  %v1773 = vunpack.c.l.b16 %v1706
  %v1774 = vunpack.c.h.b16 %v1706
  %v1775 = vunpack.c.l.b16 %v1707
  %v1776 = vunpack.c.h.b16 %v1707
  %v1777 = vunpack.c.l.b16 %v1708
  %v1778 = vunpack.c.h.b16 %v1708
  %v1779 = vunpack.c.l.b16 %v1709
  %v1780 = vunpack.c.h.b16 %v1709
  %v1781 = vunpack.c.l.b16 %v1710
  %v1782 = vunpack.c.h.b16 %v1710
  %v1783 = vunpack.c.l.b16 %v1711
  %v1784 = vunpack.c.h.b16 %v1711
  %v1785 = vunpack.c.l.b16 %v1712
  %v1786 = vunpack.c.h.b16 %v1712
  %v1787 = vunpack.c.l.b16 %v1713
  %v1788 = vunpack.c.h.b16 %v1713
  %v1789 = vunpack.c.l.b16 %v1714
  %v1790 = vunpack.c.h.b16 %v1714
  %v1791 = vunpack.c.l.b16 %v1715
  %v1792 = vunpack.c.h.b16 %v1715
  %v1793 = vunpack.c.l.b16 %v1716
  %v1794 = vunpack.c.h.b16 %v1716
  %v1795 = vunpack.c.l.b16 %v1717
  %v1796 = vunpack.c.h.b16 %v1717
  %v1797 = vunpack.c.l.b16 %v1718
  %v1798 = vunpack.c.h.b16 %v1718
  %v1799 = vunpack.c.l.b16 %v1719
  %v1800 = vunpack.c.h.b16 %v1719
  %v1801 = vunpack.c.l.b16 %v1720
  %v1802 = vunpack.c.h.b16 %v1720
  %v1803 = vunpack.c.l.b16 %v1721
  %v1804 = vunpack.c.h.b16 %v1721
  %v1805 = vunpack.c.l.b16 %v1722
  %v1806 = vunpack.c.h.b16 %v1722
  %v1807 = vunpack.c.l.b16 %v1723
  %v1808 = vunpack.c.h.b16 %v1723
  %v1809 = vunpack.c.l.b16 %v1724
  %v1810 = vunpack.c.h.b16 %v1724
  %v1811 = vunpack.c.l.b16 %v1725
  %v1812 = vunpack.c.h.b16 %v1725
  %v1813 = vunpack.c.l.b16 %v1726
  %v1814 = vunpack.c.h.b16 %v1726
  %v1815 = vunpack.c.l.b16 %v1727
  %v1816 = vunpack.c.h.b16 %v1727
  %v1817 = vunpack.c.l.b16 %v1728
  %v1818 = vunpack.c.h.b16 %v1728
  %v1819 = vunpack.c.l.b16 %v1729
  %v1820 = vunpack.c.h.b16 %v1729
  %v1821 = vunpack.c.l.b16 %v1730
  %v1822 = vunpack.c.h.b16 %v1730
  %v1823 = vunpack.c.l.b16 %v1731
  %v1824 = vunpack.c.h.b16 %v1731
  %v1825 = vunpack.c.l.b16 %v1732
  %v1826 = vunpack.c.h.b16 %v1732
  %v1827 = vunpack.c.l.b16 %v1733
  %v1828 = vunpack.c.h.b16 %v1733
  %v1829 = vunpack.c.l.b16 %v1734
  %v1830 = vunpack.c.h.b16 %v1734
  %v1831 = vpack.c.b16 %v1771, %v1767
  %v1832 = vpack.c.b16 %v1772, %v1768
  %v1833 = vpack.c.b16 %v1773, %v1769
  %v1834 = vpack.c.b16 %v1774, %v1770
  %v1835 = vpack.c.b16 %v1779, %v1775
  %v1836 = vpack.c.b16 %v1780, %v1776
  %v1837 = vpack.c.b16 %v1781, %v1777
  %v1838 = vpack.c.b16 %v1782, %v1778
  %v1839 = vpack.c.b16 %v1787, %v1783
  %v1840 = vpack.c.b16 %v1788, %v1784
  %v1841 = vpack.c.b16 %v1789, %v1785
  %v1842 = vpack.c.b16 %v1790, %v1786
  %v1843 = vpack.c.b16 %v1795, %v1791
  %v1844 = vpack.c.b16 %v1796, %v1792
  %v1845 = vpack.c.b16 %v1797, %v1793
  %v1846 = vpack.c.b16 %v1798, %v1794
  %v1847 = vpack.c.b16 %v1803, %v1799
  %v1848 = vpack.c.b16 %v1804, %v1800
  %v1849 = vpack.c.b16 %v1805, %v1801
  %v1850 = vpack.c.b16 %v1806, %v1802
  %v1851 = vpack.c.b16 %v1811, %v1807
  %v1852 = vpack.c.b16 %v1812, %v1808
  %v1853 = vpack.c.b16 %v1813, %v1809
  %v1854 = vpack.c.b16 %v1814, %v1810
  %v1855 = vpack.c.b16 %v1819, %v1815
  %v1856 = vpack.c.b16 %v1820, %v1816
  %v1857 = vpack.c.b16 %v1821, %v1817
  %v1858 = vpack.c.b16 %v1822, %v1818
  %v1859 = vpack.c.b16 %v1827, %v1823
  %v1860 = vpack.c.b16 %v1828, %v1824
  %v1861 = vpack.c.b16 %v1829, %v1825
  %v1862 = vpack.c.b16 %v1830, %v1826
  %1895 = vmatprep.subr.bf16.mxu0 %v1860
  %1896 = vmatpush1.bf16.msra.mxu0 %v1859
  %1897 = vmatprep.subr.bf16.mxu0 %v1856
  %1898 = vmatpush1.bf16.msra.mxu0 %v1855
  %1899 = vmatprep.subr.bf16.mxu0 %v1852
  %1900 = vmatpush1.bf16.msra.mxu0 %v1851
  %1901 = vmatprep.subr.bf16.mxu0 %v1848
  %1902 = vmatpush1.bf16.msra.mxu0 %v1847
  %1903 = vmatprep.subr.bf16.mxu0 %v1844
  %1904 = vmatpush1.bf16.msra.mxu0 %v1843
  %1905 = vmatprep.subr.bf16.mxu0 %v1840
  %1906 = vmatpush1.bf16.msra.mxu0 %v1839
  %1907 = vmatprep.subr.bf16.mxu0 %v1836
  %1908 = vmatpush1.bf16.msra.mxu0 %v1835
  %1909 = vmatprep.subr.bf16.mxu0 %v1832
  %1910 = vmatpush1.bf16.msra.mxu0 %v1831
  %1911 = vmatprep.subr.bf16.mxu0 0
  %1912 = vmatpush2.bf16.msra.mxu0 0
  %1913 = vmatprep.subr.bf16.mxu0 0
  %1914 = vmatpush2.bf16.msra.mxu0 0
  %1915 = vmatprep.subr.bf16.mxu0 0
  %1916 = vmatpush2.bf16.msra.mxu0 0
  %1917 = vmatprep.subr.bf16.mxu0 0
  %1918 = vmatpush2.bf16.msra.mxu0 0
  %1919 = vmatprep.subr.bf16.mxu0 0
  %1920 = vmatpush2.bf16.msra.mxu0 0
  %1921 = vmatprep.subr.bf16.mxu0 0
  %1922 = vmatpush2.bf16.msra.mxu0 0
  %1923 = vmatprep.subr.bf16.mxu0 0
  %1924 = vmatpush2.bf16.msra.mxu0 0
  %1925 = vmatprep.subr.bf16.mxu0 0
  %1926 = vmatpush2.bf16.msra.mxu0 0
  %1927 = vmatprep.mubr.bf16.mxu0 0
  %1928 = vmatmul.mubr.bf16.gmra.mxu0 %v1685
  %v1929 = vpop.f32.mrf.mxu0
  %v1930 = vadd.f32 0.0, %v1929
  %v1931 = vpop.f32.mrf.mxu0
  %v1932 = vadd.f32 0.0, %v1931
  %v1933 = vpop.f32.mrf.mxu0
  %v1934 = vadd.f32 0.0, %v1933
  %v1935 = vpop.f32.mrf.mxu0
  %v1936 = vadd.f32 0.0, %v1935
  %1937 = vdwg.mxu0
  %1938 = vmatprep.subr.bf16.mxu0 %v1862
  %1939 = vmatpush1.bf16.msra.mxu0 %v1861
  %1940 = vmatprep.subr.bf16.mxu0 %v1858
  %1941 = vmatpush1.bf16.msra.mxu0 %v1857
  %1942 = vmatprep.subr.bf16.mxu0 %v1854
  %1943 = vmatpush1.bf16.msra.mxu0 %v1853
  %1944 = vmatprep.subr.bf16.mxu0 %v1850
  %1945 = vmatpush1.bf16.msra.mxu0 %v1849
  %1946 = vmatprep.subr.bf16.mxu0 %v1846
  %1947 = vmatpush1.bf16.msra.mxu0 %v1845
  %1948 = vmatprep.subr.bf16.mxu0 %v1842
  %1949 = vmatpush1.bf16.msra.mxu0 %v1841
  %1950 = vmatprep.subr.bf16.mxu0 %v1838
  %1951 = vmatpush1.bf16.msra.mxu0 %v1837
  %1952 = vmatprep.subr.bf16.mxu0 %v1834
  %1953 = vmatpush1.bf16.msra.mxu0 %v1833
  %1954 = vmatprep.subr.bf16.mxu0 0
  %1955 = vmatpush2.bf16.msra.mxu0 0
  %1956 = vmatprep.subr.bf16.mxu0 0
  %1957 = vmatpush2.bf16.msra.mxu0 0
  %1958 = vmatprep.subr.bf16.mxu0 0
  %1959 = vmatpush2.bf16.msra.mxu0 0
  %1960 = vmatprep.subr.bf16.mxu0 0
  %1961 = vmatpush2.bf16.msra.mxu0 0
  %1962 = vmatprep.subr.bf16.mxu0 0
  %1963 = vmatpush2.bf16.msra.mxu0 0
  %1964 = vmatprep.subr.bf16.mxu0 0
  %1965 = vmatpush2.bf16.msra.mxu0 0
  %1966 = vmatprep.subr.bf16.mxu0 0
  %1967 = vmatpush2.bf16.msra.mxu0 0
  %1968 = vmatprep.subr.bf16.mxu0 0
  %1969 = vmatpush2.bf16.msra.mxu0 0
  %1970 = vmatprep.mubr.bf16.mxu0 0
  %1971 = vmatmul.mubr.bf16.gmra.mxu0 %v1685
  %v1972 = vpop.f32.mrf.mxu0
  %v1973 = vadd.f32 0.0, %v1972
  %v1974 = vpop.f32.mrf.mxu0
  %v1975 = vadd.f32 0.0, %v1974
  %v1976 = vpop.f32.mrf.mxu0
  %v1977 = vadd.f32 0.0, %v1976
  %v1978 = vpop.f32.mrf.mxu0
  %v1979 = vadd.f32 0.0, %v1978
  %1980 = vdwg.mxu0
  %v1981 = vunpack.c.l.bf16 %v1699
  %v1982 = vunpack.c.h.bf16 %v1699
  %v1983 = vunpack.c.l.bf16 %v1700
  %v1984 = vunpack.c.h.bf16 %v1700
  %v1985 = vunpack.c.l.bf16 %v1701
  %v1986 = vunpack.c.h.bf16 %v1701
  %v1987 = vunpack.c.l.bf16 %v1702
  %v1988 = vunpack.c.h.bf16 %v1702
  %v1989 = vadd.f32 %v1981, %v1930
  %v1990 = vadd.f32 %v1982, %v1932
  %v1991 = vadd.f32 %v1983, %v1973
  %v1992 = vadd.f32 %v1984, %v1975
  %v1993 = vadd.f32 %v1985, %v1934
  %v1994 = vadd.f32 %v1986, %v1936
  %v1995 = vadd.f32 %v1987, %v1977
  %v1996 = vadd.f32 %v1988, %v1979
  %v1997 = vxor.u32 %v1989, 2147483648
  %v1998 = vxor.u32 %v1990, 2147483648
  %v1999 = vxor.u32 %v1991, 2147483648
  %v2000 = vxor.u32 %v1993, 2147483648
  %v2001 = vxor.u32 %v1994, 2147483648
  %v2002 = vxor.u32 %v1995, 2147483648
  %v2003 = vmul.f32 %v1997, 1.442695
  %v2004 = vpow.pop %v2003
  %v2005 = vmul.f32 %v1998, 1.442695
  %v2006 = vpow.pop %v2005
  %v2007 = vmul.f32 %v1999, 1.442695
  %v2008 = vpow.pop %v2007
  %v2009 = vmul.f32 %v2000, 1.442695
  %v2010 = vpow.pop %v2009
  %v2011 = vmul.f32 %v2001, 1.442695
  %v2012 = vpow.pop %v2011
  %v2013 = vmul.f32 %v2002, 1.442695
  %v2014 = vpow.pop %v2013
  %v2015 = vadd.f32 %v2004, 1.0
  %v2016 = vadd.f32 %v2006, 1.0
  %v2017 = vadd.f32 %v2008, 1.0
  %v2018 = vadd.f32 %v2010, 1.0
  %v2019 = vadd.f32 %v2012, 1.0
  %v2020 = vadd.f32 %v2014, 1.0
  %v2021 = vrcp.pop %v2015
  %v2022 = vmul.f32 1.0, %v2021
  %v2023 = vrcp.pop %v2016
  %v2024 = vmul.f32 1.0, %v2023
  %v2025 = vrcp.pop %v2017
  %v2026 = vmul.f32 1.0, %v2025
  %v2027 = vrcp.pop %v2018
  %v2028 = vmul.f32 1.0, %v2027
  %v2029 = vrcp.pop %v2019
  %v2030 = vmul.f32 1.0, %v2029
  %v2031 = vrcp.pop %v2020
  %v2032 = vmul.f32 1.0, %v2031
  %v2033 = vtanh.pop %v1992
  %v2034 = vtanh.pop %v1996
  %v2035 = vmul.f32 %v2024, %v1679
  %v2036 = vmul.f32 %v2030, %v1680
  %v2037 = vmul.f32 %v2022, %v2033
  %v2038 = vmul.f32 %v2028, %v2034
  %v2039 = vadd.f32 %v2035, %v2037
  %v2040 = vadd.f32 %v2036, %v2038
  %v2041 = vtanh.pop %v2039
  %v2042 = vtanh.pop %v2040
  %v2043 = vmul.f32 %v2026, %v2041
  %v2044 = vmul.f32 %v2032, %v2042
  %v2045 = vpack.c.bf16 %v2044, %v2043
  %v2047 = vunpack.c.l.b16 %v2045
  %v2048 = vunpack.c.h.b16 %v2045
  %v2049 = vpack.c.b16 %v2047, %v2047
  %v2050 = vpack.c.b16 %v2048, %v2048
  %s2053 = scalar_lea.vmem [#allocation3], 24
  %2054 = vst [vmem:[%s2053] sm:$0xf] %v2049
  %2055 = vst [vmem:[%s2053 + $0x4] sm:$0xf] %v2050
  %s2056 = smul.u32 8, 4
  %s2057 = smul.addr %s2056, 4
  %s2058 = scalar_lea.vmem [#allocation2], %s2057
  %v2059 = vld [vmem:[%s2058] sm:$0xff]
  %v2060 = vld [vmem:[%s2058 + $0x8] sm:$0xff]
  %v2061 = vld [vmem:[%s2058 + $0x10] sm:$0xff]
  %v2062 = vld [vmem:[%s2058 + $0x18] sm:$0xff]
  %v2063 = vld [vmem:[%s3] sm:$0xff]
  %v2064 = vld [vmem:[%s3 + $0x8] sm:$0xff]
  %v2065 = vld [vmem:[%s3 + $0x10] sm:$0xff]
  %v2066 = vld [vmem:[%s3 + $0x18] sm:$0xff]
  %v2067 = vld [vmem:[%s3 + $0x20] sm:$0xff]
  %v2068 = vld [vmem:[%s3 + $0x28] sm:$0xff]
  %v2069 = vld [vmem:[%s3 + $0x30] sm:$0xff]
  %v2070 = vld [vmem:[%s3 + $0x38] sm:$0xff]
  %v2071 = vld [vmem:[%s3 + $0x40] sm:$0xff]
  %v2072 = vld [vmem:[%s3 + $0x48] sm:$0xff]
  %v2073 = vld [vmem:[%s3 + $0x50] sm:$0xff]
  %v2074 = vld [vmem:[%s3 + $0x58] sm:$0xff]
  %v2075 = vld [vmem:[%s3 + $0x60] sm:$0xff]
  %v2076 = vld [vmem:[%s3 + $0x68] sm:$0xff]
  %v2077 = vld [vmem:[%s3 + $0x70] sm:$0xff]
  %v2078 = vld [vmem:[%s3 + $0x78] sm:$0xff]
  %v2079 = vld [vmem:[%s3 + $0x80] sm:$0xff]
  %v2080 = vld [vmem:[%s3 + $0x88] sm:$0xff]
  %v2081 = vld [vmem:[%s3 + $0x90] sm:$0xff]
  %v2082 = vld [vmem:[%s3 + $0x98] sm:$0xff]
  %v2083 = vld [vmem:[%s3 + $0xa0] sm:$0xff]
  %v2084 = vld [vmem:[%s3 + $0xa8] sm:$0xff]
  %v2085 = vld [vmem:[%s3 + $0xb0] sm:$0xff]
  %v2086 = vld [vmem:[%s3 + $0xb8] sm:$0xff]
  %v2087 = vld [vmem:[%s3 + $0xc0] sm:$0xff]
  %v2088 = vld [vmem:[%s3 + $0xc8] sm:$0xff]
  %v2089 = vld [vmem:[%s3 + $0xd0] sm:$0xff]
  %v2090 = vld [vmem:[%s3 + $0xd8] sm:$0xff]
  %v2091 = vld [vmem:[%s3 + $0xe0] sm:$0xff]
  %v2092 = vld [vmem:[%s3 + $0xe8] sm:$0xff]
  %v2093 = vld [vmem:[%s3 + $0xf0] sm:$0xff]
  %v2094 = vld [vmem:[%s3 + $0xf8] sm:$0xff]
  %v2127 = vunpack.c.l.b16 %v2063
  %v2128 = vunpack.c.h.b16 %v2063
  %v2129 = vunpack.c.l.b16 %v2064
  %v2130 = vunpack.c.h.b16 %v2064
  %v2131 = vunpack.c.l.b16 %v2065
  %v2132 = vunpack.c.h.b16 %v2065
  %v2133 = vunpack.c.l.b16 %v2066
  %v2134 = vunpack.c.h.b16 %v2066
  %v2135 = vunpack.c.l.b16 %v2067
  %v2136 = vunpack.c.h.b16 %v2067
  %v2137 = vunpack.c.l.b16 %v2068
  %v2138 = vunpack.c.h.b16 %v2068
  %v2139 = vunpack.c.l.b16 %v2069
  %v2140 = vunpack.c.h.b16 %v2069
  %v2141 = vunpack.c.l.b16 %v2070
  %v2142 = vunpack.c.h.b16 %v2070
  %v2143 = vunpack.c.l.b16 %v2071
  %v2144 = vunpack.c.h.b16 %v2071
  %v2145 = vunpack.c.l.b16 %v2072
  %v2146 = vunpack.c.h.b16 %v2072
  %v2147 = vunpack.c.l.b16 %v2073
  %v2148 = vunpack.c.h.b16 %v2073
  %v2149 = vunpack.c.l.b16 %v2074
  %v2150 = vunpack.c.h.b16 %v2074
  %v2151 = vunpack.c.l.b16 %v2075
  %v2152 = vunpack.c.h.b16 %v2075
  %v2153 = vunpack.c.l.b16 %v2076
  %v2154 = vunpack.c.h.b16 %v2076
  %v2155 = vunpack.c.l.b16 %v2077
  %v2156 = vunpack.c.h.b16 %v2077
  %v2157 = vunpack.c.l.b16 %v2078
  %v2158 = vunpack.c.h.b16 %v2078
  %v2159 = vunpack.c.l.b16 %v2079
  %v2160 = vunpack.c.h.b16 %v2079
  %v2161 = vunpack.c.l.b16 %v2080
  %v2162 = vunpack.c.h.b16 %v2080
  %v2163 = vunpack.c.l.b16 %v2081
  %v2164 = vunpack.c.h.b16 %v2081
  %v2165 = vunpack.c.l.b16 %v2082
  %v2166 = vunpack.c.h.b16 %v2082
  %v2167 = vunpack.c.l.b16 %v2083
  %v2168 = vunpack.c.h.b16 %v2083
  %v2169 = vunpack.c.l.b16 %v2084
  %v2170 = vunpack.c.h.b16 %v2084
  %v2171 = vunpack.c.l.b16 %v2085
  %v2172 = vunpack.c.h.b16 %v2085
  %v2173 = vunpack.c.l.b16 %v2086
  %v2174 = vunpack.c.h.b16 %v2086
  %v2175 = vunpack.c.l.b16 %v2087
  %v2176 = vunpack.c.h.b16 %v2087
  %v2177 = vunpack.c.l.b16 %v2088
  %v2178 = vunpack.c.h.b16 %v2088
  %v2179 = vunpack.c.l.b16 %v2089
  %v2180 = vunpack.c.h.b16 %v2089
  %v2181 = vunpack.c.l.b16 %v2090
  %v2182 = vunpack.c.h.b16 %v2090
  %v2183 = vunpack.c.l.b16 %v2091
  %v2184 = vunpack.c.h.b16 %v2091
  %v2185 = vunpack.c.l.b16 %v2092
  %v2186 = vunpack.c.h.b16 %v2092
  %v2187 = vunpack.c.l.b16 %v2093
  %v2188 = vunpack.c.h.b16 %v2093
  %v2189 = vunpack.c.l.b16 %v2094
  %v2190 = vunpack.c.h.b16 %v2094
  %v2191 = vpack.c.b16 %v2131, %v2127
  %v2192 = vpack.c.b16 %v2132, %v2128
  %v2193 = vpack.c.b16 %v2133, %v2129
  %v2194 = vpack.c.b16 %v2134, %v2130
  %v2195 = vpack.c.b16 %v2139, %v2135
  %v2196 = vpack.c.b16 %v2140, %v2136
  %v2197 = vpack.c.b16 %v2141, %v2137
  %v2198 = vpack.c.b16 %v2142, %v2138
  %v2199 = vpack.c.b16 %v2147, %v2143
  %v2200 = vpack.c.b16 %v2148, %v2144
  %v2201 = vpack.c.b16 %v2149, %v2145
  %v2202 = vpack.c.b16 %v2150, %v2146
  %v2203 = vpack.c.b16 %v2155, %v2151
  %v2204 = vpack.c.b16 %v2156, %v2152
  %v2205 = vpack.c.b16 %v2157, %v2153
  %v2206 = vpack.c.b16 %v2158, %v2154
  %v2207 = vpack.c.b16 %v2163, %v2159
  %v2208 = vpack.c.b16 %v2164, %v2160
  %v2209 = vpack.c.b16 %v2165, %v2161
  %v2210 = vpack.c.b16 %v2166, %v2162
  %v2211 = vpack.c.b16 %v2171, %v2167
  %v2212 = vpack.c.b16 %v2172, %v2168
  %v2213 = vpack.c.b16 %v2173, %v2169
  %v2214 = vpack.c.b16 %v2174, %v2170
  %v2215 = vpack.c.b16 %v2179, %v2175
  %v2216 = vpack.c.b16 %v2180, %v2176
  %v2217 = vpack.c.b16 %v2181, %v2177
  %v2218 = vpack.c.b16 %v2182, %v2178
  %v2219 = vpack.c.b16 %v2187, %v2183
  %v2220 = vpack.c.b16 %v2188, %v2184
  %v2221 = vpack.c.b16 %v2189, %v2185
  %v2222 = vpack.c.b16 %v2190, %v2186
  %2255 = vmatprep.subr.bf16.mxu0 %v2220
  %2256 = vmatpush1.bf16.msra.mxu0 %v2219
  %2257 = vmatprep.subr.bf16.mxu0 %v2216
  %2258 = vmatpush1.bf16.msra.mxu0 %v2215
  %2259 = vmatprep.subr.bf16.mxu0 %v2212
  %2260 = vmatpush1.bf16.msra.mxu0 %v2211
  %2261 = vmatprep.subr.bf16.mxu0 %v2208
  %2262 = vmatpush1.bf16.msra.mxu0 %v2207
  %2263 = vmatprep.subr.bf16.mxu0 %v2204
  %2264 = vmatpush1.bf16.msra.mxu0 %v2203
  %2265 = vmatprep.subr.bf16.mxu0 %v2200
  %2266 = vmatpush1.bf16.msra.mxu0 %v2199
  %2267 = vmatprep.subr.bf16.mxu0 %v2196
  %2268 = vmatpush1.bf16.msra.mxu0 %v2195
  %2269 = vmatprep.subr.bf16.mxu0 %v2192
  %2270 = vmatpush1.bf16.msra.mxu0 %v2191
  %2271 = vmatprep.subr.bf16.mxu0 0
  %2272 = vmatpush2.bf16.msra.mxu0 0
  %2273 = vmatprep.subr.bf16.mxu0 0
  %2274 = vmatpush2.bf16.msra.mxu0 0
  %2275 = vmatprep.subr.bf16.mxu0 0
  %2276 = vmatpush2.bf16.msra.mxu0 0
  %2277 = vmatprep.subr.bf16.mxu0 0
  %2278 = vmatpush2.bf16.msra.mxu0 0
  %2279 = vmatprep.subr.bf16.mxu0 0
  %2280 = vmatpush2.bf16.msra.mxu0 0
  %2281 = vmatprep.subr.bf16.mxu0 0
  %2282 = vmatpush2.bf16.msra.mxu0 0
  %2283 = vmatprep.subr.bf16.mxu0 0
  %2284 = vmatpush2.bf16.msra.mxu0 0
  %2285 = vmatprep.subr.bf16.mxu0 0
  %2286 = vmatpush2.bf16.msra.mxu0 0
  %2287 = vmatprep.mubr.bf16.mxu0 0
  %2288 = vmatmul.mubr.bf16.gmra.mxu0 %v2045
  %v2289 = vpop.f32.mrf.mxu0
  %v2290 = vadd.f32 0.0, %v2289
  %v2291 = vpop.f32.mrf.mxu0
  %v2292 = vadd.f32 0.0, %v2291
  %v2293 = vpop.f32.mrf.mxu0
  %v2294 = vadd.f32 0.0, %v2293
  %v2295 = vpop.f32.mrf.mxu0
  %v2296 = vadd.f32 0.0, %v2295
  %2297 = vdwg.mxu0
  %2298 = vmatprep.subr.bf16.mxu0 %v2222
  %2299 = vmatpush1.bf16.msra.mxu0 %v2221
  %2300 = vmatprep.subr.bf16.mxu0 %v2218
  %2301 = vmatpush1.bf16.msra.mxu0 %v2217
  %2302 = vmatprep.subr.bf16.mxu0 %v2214
  %2303 = vmatpush1.bf16.msra.mxu0 %v2213
  %2304 = vmatprep.subr.bf16.mxu0 %v2210
  %2305 = vmatpush1.bf16.msra.mxu0 %v2209
  %2306 = vmatprep.subr.bf16.mxu0 %v2206
  %2307 = vmatpush1.bf16.msra.mxu0 %v2205
  %2308 = vmatprep.subr.bf16.mxu0 %v2202
  %2309 = vmatpush1.bf16.msra.mxu0 %v2201
  %2310 = vmatprep.subr.bf16.mxu0 %v2198
  %2311 = vmatpush1.bf16.msra.mxu0 %v2197
  %2312 = vmatprep.subr.bf16.mxu0 %v2194
  %2313 = vmatpush1.bf16.msra.mxu0 %v2193
  %2314 = vmatprep.subr.bf16.mxu0 0
  %2315 = vmatpush2.bf16.msra.mxu0 0
  %2316 = vmatprep.subr.bf16.mxu0 0
  %2317 = vmatpush2.bf16.msra.mxu0 0
  %2318 = vmatprep.subr.bf16.mxu0 0
  %2319 = vmatpush2.bf16.msra.mxu0 0
  %2320 = vmatprep.subr.bf16.mxu0 0
  %2321 = vmatpush2.bf16.msra.mxu0 0
  %2322 = vmatprep.subr.bf16.mxu0 0
  %2323 = vmatpush2.bf16.msra.mxu0 0
  %2324 = vmatprep.subr.bf16.mxu0 0
  %2325 = vmatpush2.bf16.msra.mxu0 0
  %2326 = vmatprep.subr.bf16.mxu0 0
  %2327 = vmatpush2.bf16.msra.mxu0 0
  %2328 = vmatprep.subr.bf16.mxu0 0
  %2329 = vmatpush2.bf16.msra.mxu0 0
  %2330 = vmatprep.mubr.bf16.mxu0 0
  %2331 = vmatmul.mubr.bf16.gmra.mxu0 %v2045
  %v2332 = vpop.f32.mrf.mxu0
  %v2333 = vadd.f32 0.0, %v2332
  %v2334 = vpop.f32.mrf.mxu0
  %v2335 = vadd.f32 0.0, %v2334
  %v2336 = vpop.f32.mrf.mxu0
  %v2337 = vadd.f32 0.0, %v2336
  %v2338 = vpop.f32.mrf.mxu0
  %v2339 = vadd.f32 0.0, %v2338
  %2340 = vdwg.mxu0
  %v2341 = vunpack.c.l.bf16 %v2059
  %v2342 = vunpack.c.h.bf16 %v2059
  %v2343 = vunpack.c.l.bf16 %v2060
  %v2344 = vunpack.c.h.bf16 %v2060
  %v2345 = vunpack.c.l.bf16 %v2061
  %v2346 = vunpack.c.h.bf16 %v2061
  %v2347 = vunpack.c.l.bf16 %v2062
  %v2348 = vunpack.c.h.bf16 %v2062
  %v2349 = vadd.f32 %v2341, %v2290
  %v2350 = vadd.f32 %v2342, %v2292
  %v2351 = vadd.f32 %v2343, %v2333
  %v2352 = vadd.f32 %v2344, %v2335
  %v2353 = vadd.f32 %v2345, %v2294
  %v2354 = vadd.f32 %v2346, %v2296
  %v2355 = vadd.f32 %v2347, %v2337
  %v2356 = vadd.f32 %v2348, %v2339
  %v2357 = vxor.u32 %v2349, 2147483648
  %v2358 = vxor.u32 %v2350, 2147483648
  %v2359 = vxor.u32 %v2351, 2147483648
  %v2360 = vxor.u32 %v2353, 2147483648
  %v2361 = vxor.u32 %v2354, 2147483648
  %v2362 = vxor.u32 %v2355, 2147483648
  %v2363 = vmul.f32 %v2357, 1.442695
  %v2364 = vpow.pop %v2363
  %v2365 = vmul.f32 %v2358, 1.442695
  %v2366 = vpow.pop %v2365
  %v2367 = vmul.f32 %v2359, 1.442695
  %v2368 = vpow.pop %v2367
  %v2369 = vmul.f32 %v2360, 1.442695
  %v2370 = vpow.pop %v2369
  %v2371 = vmul.f32 %v2361, 1.442695
  %v2372 = vpow.pop %v2371
  %v2373 = vmul.f32 %v2362, 1.442695
  %v2374 = vpow.pop %v2373
  %v2375 = vadd.f32 %v2364, 1.0
  %v2376 = vadd.f32 %v2366, 1.0
  %v2377 = vadd.f32 %v2368, 1.0
  %v2378 = vadd.f32 %v2370, 1.0
  %v2379 = vadd.f32 %v2372, 1.0
  %v2380 = vadd.f32 %v2374, 1.0
  %v2381 = vrcp.pop %v2375
  %v2382 = vmul.f32 1.0, %v2381
  %v2383 = vrcp.pop %v2376
  %v2384 = vmul.f32 1.0, %v2383
  %v2385 = vrcp.pop %v2377
  %v2386 = vmul.f32 1.0, %v2385
  %v2387 = vrcp.pop %v2378
  %v2388 = vmul.f32 1.0, %v2387
  %v2389 = vrcp.pop %v2379
  %v2390 = vmul.f32 1.0, %v2389
  %v2391 = vrcp.pop %v2380
  %v2392 = vmul.f32 1.0, %v2391
  %v2393 = vtanh.pop %v2352
  %v2394 = vtanh.pop %v2356
  %v2395 = vmul.f32 %v2384, %v2039
  %v2396 = vmul.f32 %v2390, %v2040
  %v2397 = vmul.f32 %v2382, %v2393
  %v2398 = vmul.f32 %v2388, %v2394
  %v2399 = vadd.f32 %v2395, %v2397
  %v2400 = vadd.f32 %v2396, %v2398
  %v2401 = vtanh.pop %v2399
  %v2402 = vtanh.pop %v2400
  %v2403 = vmul.f32 %v2386, %v2401
  %v2404 = vmul.f32 %v2392, %v2402
  %v2405 = vpack.c.bf16 %v2404, %v2403
  %v2407 = vunpack.c.l.b16 %v2405
  %v2408 = vunpack.c.h.b16 %v2405
  %v2409 = vpack.c.b16 %v2407, %v2407
  %v2410 = vpack.c.b16 %v2408, %v2408
  %s2413 = scalar_lea.vmem [#allocation3], 32
  %2414 = vst [vmem:[%s2413] sm:$0xf] %v2409
  %2415 = vst [vmem:[%s2413 + $0x4] sm:$0xf] %v2410
  %s2416 = smul.u32 10, 4
  %s2417 = smul.addr %s2416, 4
  %s2418 = scalar_lea.vmem [#allocation2], %s2417
  %v2419 = vld [vmem:[%s2418] sm:$0xff]
  %v2420 = vld [vmem:[%s2418 + $0x8] sm:$0xff]
  %v2421 = vld [vmem:[%s2418 + $0x10] sm:$0xff]
  %v2422 = vld [vmem:[%s2418 + $0x18] sm:$0xff]
  %v2423 = vld [vmem:[%s3] sm:$0xff]
  %v2424 = vld [vmem:[%s3 + $0x8] sm:$0xff]
  %v2425 = vld [vmem:[%s3 + $0x10] sm:$0xff]
  %v2426 = vld [vmem:[%s3 + $0x18] sm:$0xff]
  %v2427 = vld [vmem:[%s3 + $0x20] sm:$0xff]
  %v2428 = vld [vmem:[%s3 + $0x28] sm:$0xff]
  %v2429 = vld [vmem:[%s3 + $0x30] sm:$0xff]
  %v2430 = vld [vmem:[%s3 + $0x38] sm:$0xff]
  %v2431 = vld [vmem:[%s3 + $0x40] sm:$0xff]
  %v2432 = vld [vmem:[%s3 + $0x48] sm:$0xff]
  %v2433 = vld [vmem:[%s3 + $0x50] sm:$0xff]
  %v2434 = vld [vmem:[%s3 + $0x58] sm:$0xff]
  %v2435 = vld [vmem:[%s3 + $0x60] sm:$0xff]
  %v2436 = vld [vmem:[%s3 + $0x68] sm:$0xff]
  %v2437 = vld [vmem:[%s3 + $0x70] sm:$0xff]
  %v2438 = vld [vmem:[%s3 + $0x78] sm:$0xff]
  %v2439 = vld [vmem:[%s3 + $0x80] sm:$0xff]
  %v2440 = vld [vmem:[%s3 + $0x88] sm:$0xff]
  %v2441 = vld [vmem:[%s3 + $0x90] sm:$0xff]
  %v2442 = vld [vmem:[%s3 + $0x98] sm:$0xff]
  %v2443 = vld [vmem:[%s3 + $0xa0] sm:$0xff]
  %v2444 = vld [vmem:[%s3 + $0xa8] sm:$0xff]
  %v2445 = vld [vmem:[%s3 + $0xb0] sm:$0xff]
  %v2446 = vld [vmem:[%s3 + $0xb8] sm:$0xff]
  %v2447 = vld [vmem:[%s3 + $0xc0] sm:$0xff]
  %v2448 = vld [vmem:[%s3 + $0xc8] sm:$0xff]
  %v2449 = vld [vmem:[%s3 + $0xd0] sm:$0xff]
  %v2450 = vld [vmem:[%s3 + $0xd8] sm:$0xff]
  %v2451 = vld [vmem:[%s3 + $0xe0] sm:$0xff]
  %v2452 = vld [vmem:[%s3 + $0xe8] sm:$0xff]
  %v2453 = vld [vmem:[%s3 + $0xf0] sm:$0xff]
  %v2454 = vld [vmem:[%s3 + $0xf8] sm:$0xff]
  %v2487 = vunpack.c.l.b16 %v2423
  %v2488 = vunpack.c.h.b16 %v2423
  %v2489 = vunpack.c.l.b16 %v2424
  %v2490 = vunpack.c.h.b16 %v2424
  %v2491 = vunpack.c.l.b16 %v2425
  %v2492 = vunpack.c.h.b16 %v2425
  %v2493 = vunpack.c.l.b16 %v2426
  %v2494 = vunpack.c.h.b16 %v2426
  %v2495 = vunpack.c.l.b16 %v2427
  %v2496 = vunpack.c.h.b16 %v2427
  %v2497 = vunpack.c.l.b16 %v2428
  %v2498 = vunpack.c.h.b16 %v2428
  %v2499 = vunpack.c.l.b16 %v2429
  %v2500 = vunpack.c.h.b16 %v2429
  %v2501 = vunpack.c.l.b16 %v2430
  %v2502 = vunpack.c.h.b16 %v2430
  %v2503 = vunpack.c.l.b16 %v2431
  %v2504 = vunpack.c.h.b16 %v2431
  %v2505 = vunpack.c.l.b16 %v2432
  %v2506 = vunpack.c.h.b16 %v2432
  %v2507 = vunpack.c.l.b16 %v2433
  %v2508 = vunpack.c.h.b16 %v2433
  %v2509 = vunpack.c.l.b16 %v2434
  %v2510 = vunpack.c.h.b16 %v2434
  %v2511 = vunpack.c.l.b16 %v2435
  %v2512 = vunpack.c.h.b16 %v2435
  %v2513 = vunpack.c.l.b16 %v2436
  %v2514 = vunpack.c.h.b16 %v2436
  %v2515 = vunpack.c.l.b16 %v2437
  %v2516 = vunpack.c.h.b16 %v2437
  %v2517 = vunpack.c.l.b16 %v2438
  %v2518 = vunpack.c.h.b16 %v2438
  %v2519 = vunpack.c.l.b16 %v2439
  %v2520 = vunpack.c.h.b16 %v2439
  %v2521 = vunpack.c.l.b16 %v2440
  %v2522 = vunpack.c.h.b16 %v2440
  %v2523 = vunpack.c.l.b16 %v2441
  %v2524 = vunpack.c.h.b16 %v2441
  %v2525 = vunpack.c.l.b16 %v2442
  %v2526 = vunpack.c.h.b16 %v2442
  %v2527 = vunpack.c.l.b16 %v2443
  %v2528 = vunpack.c.h.b16 %v2443
  %v2529 = vunpack.c.l.b16 %v2444
  %v2530 = vunpack.c.h.b16 %v2444
  %v2531 = vunpack.c.l.b16 %v2445
  %v2532 = vunpack.c.h.b16 %v2445
  %v2533 = vunpack.c.l.b16 %v2446
  %v2534 = vunpack.c.h.b16 %v2446
  %v2535 = vunpack.c.l.b16 %v2447
  %v2536 = vunpack.c.h.b16 %v2447
  %v2537 = vunpack.c.l.b16 %v2448
  %v2538 = vunpack.c.h.b16 %v2448
  %v2539 = vunpack.c.l.b16 %v2449
  %v2540 = vunpack.c.h.b16 %v2449
  %v2541 = vunpack.c.l.b16 %v2450
  %v2542 = vunpack.c.h.b16 %v2450
  %v2543 = vunpack.c.l.b16 %v2451
  %v2544 = vunpack.c.h.b16 %v2451
  %v2545 = vunpack.c.l.b16 %v2452
  %v2546 = vunpack.c.h.b16 %v2452
  %v2547 = vunpack.c.l.b16 %v2453
  %v2548 = vunpack.c.h.b16 %v2453
  %v2549 = vunpack.c.l.b16 %v2454
  %v2550 = vunpack.c.h.b16 %v2454
  %v2551 = vpack.c.b16 %v2491, %v2487
  %v2552 = vpack.c.b16 %v2492, %v2488
  %v2553 = vpack.c.b16 %v2493, %v2489
  %v2554 = vpack.c.b16 %v2494, %v2490
  %v2555 = vpack.c.b16 %v2499, %v2495
  %v2556 = vpack.c.b16 %v2500, %v2496
  %v2557 = vpack.c.b16 %v2501, %v2497
  %v2558 = vpack.c.b16 %v2502, %v2498
  %v2559 = vpack.c.b16 %v2507, %v2503
  %v2560 = vpack.c.b16 %v2508, %v2504
  %v2561 = vpack.c.b16 %v2509, %v2505
  %v2562 = vpack.c.b16 %v2510, %v2506
  %v2563 = vpack.c.b16 %v2515, %v2511
  %v2564 = vpack.c.b16 %v2516, %v2512
  %v2565 = vpack.c.b16 %v2517, %v2513
  %v2566 = vpack.c.b16 %v2518, %v2514
  %v2567 = vpack.c.b16 %v2523, %v2519
  %v2568 = vpack.c.b16 %v2524, %v2520
  %v2569 = vpack.c.b16 %v2525, %v2521
  %v2570 = vpack.c.b16 %v2526, %v2522
  %v2571 = vpack.c.b16 %v2531, %v2527
  %v2572 = vpack.c.b16 %v2532, %v2528
  %v2573 = vpack.c.b16 %v2533, %v2529
  %v2574 = vpack.c.b16 %v2534, %v2530
  %v2575 = vpack.c.b16 %v2539, %v2535
  %v2576 = vpack.c.b16 %v2540, %v2536
  %v2577 = vpack.c.b16 %v2541, %v2537
  %v2578 = vpack.c.b16 %v2542, %v2538
  %v2579 = vpack.c.b16 %v2547, %v2543
  %v2580 = vpack.c.b16 %v2548, %v2544
  %v2581 = vpack.c.b16 %v2549, %v2545
  %v2582 = vpack.c.b16 %v2550, %v2546
  %2615 = vmatprep.subr.bf16.mxu0 %v2580
  %2616 = vmatpush1.bf16.msra.mxu0 %v2579
  %2617 = vmatprep.subr.bf16.mxu0 %v2576
  %2618 = vmatpush1.bf16.msra.mxu0 %v2575
  %2619 = vmatprep.subr.bf16.mxu0 %v2572
  %2620 = vmatpush1.bf16.msra.mxu0 %v2571
  %2621 = vmatprep.subr.bf16.mxu0 %v2568
  %2622 = vmatpush1.bf16.msra.mxu0 %v2567
  %2623 = vmatprep.subr.bf16.mxu0 %v2564
  %2624 = vmatpush1.bf16.msra.mxu0 %v2563
  %2625 = vmatprep.subr.bf16.mxu0 %v2560
  %2626 = vmatpush1.bf16.msra.mxu0 %v2559
  %2627 = vmatprep.subr.bf16.mxu0 %v2556
  %2628 = vmatpush1.bf16.msra.mxu0 %v2555
  %2629 = vmatprep.subr.bf16.mxu0 %v2552
  %2630 = vmatpush1.bf16.msra.mxu0 %v2551
  %2631 = vmatprep.subr.bf16.mxu0 0
  %2632 = vmatpush2.bf16.msra.mxu0 0
  %2633 = vmatprep.subr.bf16.mxu0 0
  %2634 = vmatpush2.bf16.msra.mxu0 0
  %2635 = vmatprep.subr.bf16.mxu0 0
  %2636 = vmatpush2.bf16.msra.mxu0 0
  %2637 = vmatprep.subr.bf16.mxu0 0
  %2638 = vmatpush2.bf16.msra.mxu0 0
  %2639 = vmatprep.subr.bf16.mxu0 0
  %2640 = vmatpush2.bf16.msra.mxu0 0
  %2641 = vmatprep.subr.bf16.mxu0 0
  %2642 = vmatpush2.bf16.msra.mxu0 0
  %2643 = vmatprep.subr.bf16.mxu0 0
  %2644 = vmatpush2.bf16.msra.mxu0 0
  %2645 = vmatprep.subr.bf16.mxu0 0
  %2646 = vmatpush2.bf16.msra.mxu0 0
  %2647 = vmatprep.mubr.bf16.mxu0 0
  %2648 = vmatmul.mubr.bf16.gmra.mxu0 %v2405
  %v2649 = vpop.f32.mrf.mxu0
  %v2650 = vadd.f32 0.0, %v2649
  %v2651 = vpop.f32.mrf.mxu0
  %v2652 = vadd.f32 0.0, %v2651
  %v2653 = vpop.f32.mrf.mxu0
  %v2654 = vadd.f32 0.0, %v2653
  %v2655 = vpop.f32.mrf.mxu0
  %v2656 = vadd.f32 0.0, %v2655
  %2657 = vdwg.mxu0
  %2658 = vmatprep.subr.bf16.mxu0 %v2582
  %2659 = vmatpush1.bf16.msra.mxu0 %v2581
  %2660 = vmatprep.subr.bf16.mxu0 %v2578
  %2661 = vmatpush1.bf16.msra.mxu0 %v2577
  %2662 = vmatprep.subr.bf16.mxu0 %v2574
  %2663 = vmatpush1.bf16.msra.mxu0 %v2573
  %2664 = vmatprep.subr.bf16.mxu0 %v2570
  %2665 = vmatpush1.bf16.msra.mxu0 %v2569
  %2666 = vmatprep.subr.bf16.mxu0 %v2566
  %2667 = vmatpush1.bf16.msra.mxu0 %v2565
  %2668 = vmatprep.subr.bf16.mxu0 %v2562
  %2669 = vmatpush1.bf16.msra.mxu0 %v2561
  %2670 = vmatprep.subr.bf16.mxu0 %v2558
  %2671 = vmatpush1.bf16.msra.mxu0 %v2557
  %2672 = vmatprep.subr.bf16.mxu0 %v2554
  %2673 = vmatpush1.bf16.msra.mxu0 %v2553
  %2674 = vmatprep.subr.bf16.mxu0 0
  %2675 = vmatpush2.bf16.msra.mxu0 0
  %2676 = vmatprep.subr.bf16.mxu0 0
  %2677 = vmatpush2.bf16.msra.mxu0 0
  %2678 = vmatprep.subr.bf16.mxu0 0
  %2679 = vmatpush2.bf16.msra.mxu0 0
  %2680 = vmatprep.subr.bf16.mxu0 0
  %2681 = vmatpush2.bf16.msra.mxu0 0
  %2682 = vmatprep.subr.bf16.mxu0 0
  %2683 = vmatpush2.bf16.msra.mxu0 0
  %2684 = vmatprep.subr.bf16.mxu0 0
  %2685 = vmatpush2.bf16.msra.mxu0 0
  %2686 = vmatprep.subr.bf16.mxu0 0
  %2687 = vmatpush2.bf16.msra.mxu0 0
  %2688 = vmatprep.subr.bf16.mxu0 0
  %2689 = vmatpush2.bf16.msra.mxu0 0
  %2690 = vmatprep.mubr.bf16.mxu0 0
  %2691 = vmatmul.mubr.bf16.gmra.mxu0 %v2405
  %v2692 = vpop.f32.mrf.mxu0
  %v2693 = vadd.f32 0.0, %v2692
  %v2694 = vpop.f32.mrf.mxu0
  %v2695 = vadd.f32 0.0, %v2694
  %v2696 = vpop.f32.mrf.mxu0
  %v2697 = vadd.f32 0.0, %v2696
  %v2698 = vpop.f32.mrf.mxu0
  %v2699 = vadd.f32 0.0, %v2698
  %2700 = vdwg.mxu0
  %v2701 = vunpack.c.l.bf16 %v2419
  %v2702 = vunpack.c.h.bf16 %v2419
  %v2703 = vunpack.c.l.bf16 %v2420
  %v2704 = vunpack.c.h.bf16 %v2420
  %v2705 = vunpack.c.l.bf16 %v2421
  %v2706 = vunpack.c.h.bf16 %v2421
  %v2707 = vunpack.c.l.bf16 %v2422
  %v2708 = vunpack.c.h.bf16 %v2422
  %v2709 = vadd.f32 %v2701, %v2650
  %v2710 = vadd.f32 %v2702, %v2652
  %v2711 = vadd.f32 %v2703, %v2693
  %v2712 = vadd.f32 %v2704, %v2695
  %v2713 = vadd.f32 %v2705, %v2654
  %v2714 = vadd.f32 %v2706, %v2656
  %v2715 = vadd.f32 %v2707, %v2697
  %v2716 = vadd.f32 %v2708, %v2699
  %v2717 = vxor.u32 %v2709, 2147483648
  %v2718 = vxor.u32 %v2710, 2147483648
  %v2719 = vxor.u32 %v2711, 2147483648
  %v2720 = vxor.u32 %v2713, 2147483648
  %v2721 = vxor.u32 %v2714, 2147483648
  %v2722 = vxor.u32 %v2715, 2147483648
  %v2723 = vmul.f32 %v2717, 1.442695
  %v2724 = vpow.pop %v2723
  %v2725 = vmul.f32 %v2718, 1.442695
  %v2726 = vpow.pop %v2725
  %v2727 = vmul.f32 %v2719, 1.442695
  %v2728 = vpow.pop %v2727
  %v2729 = vmul.f32 %v2720, 1.442695
  %v2730 = vpow.pop %v2729
  %v2731 = vmul.f32 %v2721, 1.442695
  %v2732 = vpow.pop %v2731
  %v2733 = vmul.f32 %v2722, 1.442695
  %v2734 = vpow.pop %v2733
  %v2735 = vadd.f32 %v2724, 1.0
  %v2736 = vadd.f32 %v2726, 1.0
  %v2737 = vadd.f32 %v2728, 1.0
  %v2738 = vadd.f32 %v2730, 1.0
  %v2739 = vadd.f32 %v2732, 1.0
  %v2740 = vadd.f32 %v2734, 1.0
  %v2741 = vrcp.pop %v2735
  %v2742 = vmul.f32 1.0, %v2741
  %v2743 = vrcp.pop %v2736
  %v2744 = vmul.f32 1.0, %v2743
  %v2745 = vrcp.pop %v2737
  %v2746 = vmul.f32 1.0, %v2745
  %v2747 = vrcp.pop %v2738
  %v2748 = vmul.f32 1.0, %v2747
  %v2749 = vrcp.pop %v2739
  %v2750 = vmul.f32 1.0, %v2749
  %v2751 = vrcp.pop %v2740
  %v2752 = vmul.f32 1.0, %v2751
  %v2753 = vtanh.pop %v2712
  %v2754 = vtanh.pop %v2716
  %v2755 = vmul.f32 %v2744, %v2399
  %v2756 = vmul.f32 %v2750, %v2400
  %v2757 = vmul.f32 %v2742, %v2753
  %v2758 = vmul.f32 %v2748, %v2754
  %v2759 = vadd.f32 %v2755, %v2757
  %v2760 = vadd.f32 %v2756, %v2758
  %v2761 = vtanh.pop %v2759
  %v2762 = vtanh.pop %v2760
  %v2763 = vmul.f32 %v2746, %v2761
  %v2764 = vmul.f32 %v2752, %v2762
  %v2765 = vpack.c.bf16 %v2764, %v2763
  %v2767 = vunpack.c.l.b16 %v2765
  %v2768 = vunpack.c.h.b16 %v2765
  %v2769 = vpack.c.b16 %v2767, %v2767
  %v2770 = vpack.c.b16 %v2768, %v2768
  %s2773 = scalar_lea.vmem [#allocation3], 40
  %2774 = vst [vmem:[%s2773] sm:$0xf] %v2769
  %2775 = vst [vmem:[%s2773 + $0x4] sm:$0xf] %v2770
  %s2776 = smul.u32 12, 4
  %s2777 = smul.addr %s2776, 4
  %s2778 = scalar_lea.vmem [#allocation2], %s2777
  %v2779 = vld [vmem:[%s2778] sm:$0xff]
  %v2780 = vld [vmem:[%s2778 + $0x8] sm:$0xff]
  %v2781 = vld [vmem:[%s2778 + $0x10] sm:$0xff]
  %v2782 = vld [vmem:[%s2778 + $0x18] sm:$0xff]
  %v2783 = vld [vmem:[%s3] sm:$0xff]
  %v2784 = vld [vmem:[%s3 + $0x8] sm:$0xff]
  %v2785 = vld [vmem:[%s3 + $0x10] sm:$0xff]
  %v2786 = vld [vmem:[%s3 + $0x18] sm:$0xff]
  %v2787 = vld [vmem:[%s3 + $0x20] sm:$0xff]
  %v2788 = vld [vmem:[%s3 + $0x28] sm:$0xff]
  %v2789 = vld [vmem:[%s3 + $0x30] sm:$0xff]
  %v2790 = vld [vmem:[%s3 + $0x38] sm:$0xff]
  %v2791 = vld [vmem:[%s3 + $0x40] sm:$0xff]
  %v2792 = vld [vmem:[%s3 + $0x48] sm:$0xff]
  %v2793 = vld [vmem:[%s3 + $0x50] sm:$0xff]
  %v2794 = vld [vmem:[%s3 + $0x58] sm:$0xff]
  %v2795 = vld [vmem:[%s3 + $0x60] sm:$0xff]
  %v2796 = vld [vmem:[%s3 + $0x68] sm:$0xff]
  %v2797 = vld [vmem:[%s3 + $0x70] sm:$0xff]
  %v2798 = vld [vmem:[%s3 + $0x78] sm:$0xff]
  %v2799 = vld [vmem:[%s3 + $0x80] sm:$0xff]
  %v2800 = vld [vmem:[%s3 + $0x88] sm:$0xff]
  %v2801 = vld [vmem:[%s3 + $0x90] sm:$0xff]
  %v2802 = vld [vmem:[%s3 + $0x98] sm:$0xff]
  %v2803 = vld [vmem:[%s3 + $0xa0] sm:$0xff]
  %v2804 = vld [vmem:[%s3 + $0xa8] sm:$0xff]
  %v2805 = vld [vmem:[%s3 + $0xb0] sm:$0xff]
  %v2806 = vld [vmem:[%s3 + $0xb8] sm:$0xff]
  %v2807 = vld [vmem:[%s3 + $0xc0] sm:$0xff]
  %v2808 = vld [vmem:[%s3 + $0xc8] sm:$0xff]
  %v2809 = vld [vmem:[%s3 + $0xd0] sm:$0xff]
  %v2810 = vld [vmem:[%s3 + $0xd8] sm:$0xff]
  %v2811 = vld [vmem:[%s3 + $0xe0] sm:$0xff]
  %v2812 = vld [vmem:[%s3 + $0xe8] sm:$0xff]
  %v2813 = vld [vmem:[%s3 + $0xf0] sm:$0xff]
  %v2814 = vld [vmem:[%s3 + $0xf8] sm:$0xff]
  %v2847 = vunpack.c.l.b16 %v2783
  %v2848 = vunpack.c.h.b16 %v2783
  %v2849 = vunpack.c.l.b16 %v2784
  %v2850 = vunpack.c.h.b16 %v2784
  %v2851 = vunpack.c.l.b16 %v2785
  %v2852 = vunpack.c.h.b16 %v2785
  %v2853 = vunpack.c.l.b16 %v2786
  %v2854 = vunpack.c.h.b16 %v2786
  %v2855 = vunpack.c.l.b16 %v2787
  %v2856 = vunpack.c.h.b16 %v2787
  %v2857 = vunpack.c.l.b16 %v2788
  %v2858 = vunpack.c.h.b16 %v2788
  %v2859 = vunpack.c.l.b16 %v2789
  %v2860 = vunpack.c.h.b16 %v2789
  %v2861 = vunpack.c.l.b16 %v2790
  %v2862 = vunpack.c.h.b16 %v2790
  %v2863 = vunpack.c.l.b16 %v2791
  %v2864 = vunpack.c.h.b16 %v2791
  %v2865 = vunpack.c.l.b16 %v2792
  %v2866 = vunpack.c.h.b16 %v2792
  %v2867 = vunpack.c.l.b16 %v2793
  %v2868 = vunpack.c.h.b16 %v2793
  %v2869 = vunpack.c.l.b16 %v2794
  %v2870 = vunpack.c.h.b16 %v2794
  %v2871 = vunpack.c.l.b16 %v2795
  %v2872 = vunpack.c.h.b16 %v2795
  %v2873 = vunpack.c.l.b16 %v2796
  %v2874 = vunpack.c.h.b16 %v2796
  %v2875 = vunpack.c.l.b16 %v2797
  %v2876 = vunpack.c.h.b16 %v2797
  %v2877 = vunpack.c.l.b16 %v2798
  %v2878 = vunpack.c.h.b16 %v2798
  %v2879 = vunpack.c.l.b16 %v2799
  %v2880 = vunpack.c.h.b16 %v2799
  %v2881 = vunpack.c.l.b16 %v2800
  %v2882 = vunpack.c.h.b16 %v2800
  %v2883 = vunpack.c.l.b16 %v2801
  %v2884 = vunpack.c.h.b16 %v2801
  %v2885 = vunpack.c.l.b16 %v2802
  %v2886 = vunpack.c.h.b16 %v2802
  %v2887 = vunpack.c.l.b16 %v2803
  %v2888 = vunpack.c.h.b16 %v2803
  %v2889 = vunpack.c.l.b16 %v2804
  %v2890 = vunpack.c.h.b16 %v2804
  %v2891 = vunpack.c.l.b16 %v2805
  %v2892 = vunpack.c.h.b16 %v2805
  %v2893 = vunpack.c.l.b16 %v2806
  %v2894 = vunpack.c.h.b16 %v2806
  %v2895 = vunpack.c.l.b16 %v2807
  %v2896 = vunpack.c.h.b16 %v2807
  %v2897 = vunpack.c.l.b16 %v2808
  %v2898 = vunpack.c.h.b16 %v2808
  %v2899 = vunpack.c.l.b16 %v2809
  %v2900 = vunpack.c.h.b16 %v2809
  %v2901 = vunpack.c.l.b16 %v2810
  %v2902 = vunpack.c.h.b16 %v2810
  %v2903 = vunpack.c.l.b16 %v2811
  %v2904 = vunpack.c.h.b16 %v2811
  %v2905 = vunpack.c.l.b16 %v2812
  %v2906 = vunpack.c.h.b16 %v2812
  %v2907 = vunpack.c.l.b16 %v2813
  %v2908 = vunpack.c.h.b16 %v2813
  %v2909 = vunpack.c.l.b16 %v2814
  %v2910 = vunpack.c.h.b16 %v2814
  %v2911 = vpack.c.b16 %v2851, %v2847
  %v2912 = vpack.c.b16 %v2852, %v2848
  %v2913 = vpack.c.b16 %v2853, %v2849
  %v2914 = vpack.c.b16 %v2854, %v2850
  %v2915 = vpack.c.b16 %v2859, %v2855
  %v2916 = vpack.c.b16 %v2860, %v2856
  %v2917 = vpack.c.b16 %v2861, %v2857
  %v2918 = vpack.c.b16 %v2862, %v2858
  %v2919 = vpack.c.b16 %v2867, %v2863
  %v2920 = vpack.c.b16 %v2868, %v2864
  %v2921 = vpack.c.b16 %v2869, %v2865
  %v2922 = vpack.c.b16 %v2870, %v2866
  %v2923 = vpack.c.b16 %v2875, %v2871
  %v2924 = vpack.c.b16 %v2876, %v2872
  %v2925 = vpack.c.b16 %v2877, %v2873
  %v2926 = vpack.c.b16 %v2878, %v2874
  %v2927 = vpack.c.b16 %v2883, %v2879
  %v2928 = vpack.c.b16 %v2884, %v2880
  %v2929 = vpack.c.b16 %v2885, %v2881
  %v2930 = vpack.c.b16 %v2886, %v2882
  %v2931 = vpack.c.b16 %v2891, %v2887
  %v2932 = vpack.c.b16 %v2892, %v2888
  %v2933 = vpack.c.b16 %v2893, %v2889
  %v2934 = vpack.c.b16 %v2894, %v2890
  %v2935 = vpack.c.b16 %v2899, %v2895
  %v2936 = vpack.c.b16 %v2900, %v2896
  %v2937 = vpack.c.b16 %v2901, %v2897
  %v2938 = vpack.c.b16 %v2902, %v2898
  %v2939 = vpack.c.b16 %v2907, %v2903
  %v2940 = vpack.c.b16 %v2908, %v2904
  %v2941 = vpack.c.b16 %v2909, %v2905
  %v2942 = vpack.c.b16 %v2910, %v2906
  %2975 = vmatprep.subr.bf16.mxu0 %v2940
  %2976 = vmatpush1.bf16.msra.mxu0 %v2939
  %2977 = vmatprep.subr.bf16.mxu0 %v2936
  %2978 = vmatpush1.bf16.msra.mxu0 %v2935
  %2979 = vmatprep.subr.bf16.mxu0 %v2932
  %2980 = vmatpush1.bf16.msra.mxu0 %v2931
  %2981 = vmatprep.subr.bf16.mxu0 %v2928
  %2982 = vmatpush1.bf16.msra.mxu0 %v2927
  %2983 = vmatprep.subr.bf16.mxu0 %v2924
  %2984 = vmatpush1.bf16.msra.mxu0 %v2923
  %2985 = vmatprep.subr.bf16.mxu0 %v2920
  %2986 = vmatpush1.bf16.msra.mxu0 %v2919
  %2987 = vmatprep.subr.bf16.mxu0 %v2916
  %2988 = vmatpush1.bf16.msra.mxu0 %v2915
  %2989 = vmatprep.subr.bf16.mxu0 %v2912
  %2990 = vmatpush1.bf16.msra.mxu0 %v2911
  %2991 = vmatprep.subr.bf16.mxu0 0
  %2992 = vmatpush2.bf16.msra.mxu0 0
  %2993 = vmatprep.subr.bf16.mxu0 0
  %2994 = vmatpush2.bf16.msra.mxu0 0
  %2995 = vmatprep.subr.bf16.mxu0 0
  %2996 = vmatpush2.bf16.msra.mxu0 0
  %2997 = vmatprep.subr.bf16.mxu0 0
  %2998 = vmatpush2.bf16.msra.mxu0 0
  %2999 = vmatprep.subr.bf16.mxu0 0
  %3000 = vmatpush2.bf16.msra.mxu0 0
  %3001 = vmatprep.subr.bf16.mxu0 0
  %3002 = vmatpush2.bf16.msra.mxu0 0
  %3003 = vmatprep.subr.bf16.mxu0 0
  %3004 = vmatpush2.bf16.msra.mxu0 0
  %3005 = vmatprep.subr.bf16.mxu0 0
  %3006 = vmatpush2.bf16.msra.mxu0 0
  %3007 = vmatprep.mubr.bf16.mxu0 0
  %3008 = vmatmul.mubr.bf16.gmra.mxu0 %v2765
  %v3009 = vpop.f32.mrf.mxu0
  %v3010 = vadd.f32 0.0, %v3009
  %v3011 = vpop.f32.mrf.mxu0
  %v3012 = vadd.f32 0.0, %v3011
  %v3013 = vpop.f32.mrf.mxu0
  %v3014 = vadd.f32 0.0, %v3013
  %v3015 = vpop.f32.mrf.mxu0
  %v3016 = vadd.f32 0.0, %v3015
  %3017 = vdwg.mxu0
  %3018 = vmatprep.subr.bf16.mxu0 %v2942
  %3019 = vmatpush1.bf16.msra.mxu0 %v2941
  %3020 = vmatprep.subr.bf16.mxu0 %v2938
  %3021 = vmatpush1.bf16.msra.mxu0 %v2937
  %3022 = vmatprep.subr.bf16.mxu0 %v2934
  %3023 = vmatpush1.bf16.msra.mxu0 %v2933
  %3024 = vmatprep.subr.bf16.mxu0 %v2930
  %3025 = vmatpush1.bf16.msra.mxu0 %v2929
  %3026 = vmatprep.subr.bf16.mxu0 %v2926
  %3027 = vmatpush1.bf16.msra.mxu0 %v2925
  %3028 = vmatprep.subr.bf16.mxu0 %v2922
  %3029 = vmatpush1.bf16.msra.mxu0 %v2921
  %3030 = vmatprep.subr.bf16.mxu0 %v2918
  %3031 = vmatpush1.bf16.msra.mxu0 %v2917
  %3032 = vmatprep.subr.bf16.mxu0 %v2914
  %3033 = vmatpush1.bf16.msra.mxu0 %v2913
  %3034 = vmatprep.subr.bf16.mxu0 0
  %3035 = vmatpush2.bf16.msra.mxu0 0
  %3036 = vmatprep.subr.bf16.mxu0 0
  %3037 = vmatpush2.bf16.msra.mxu0 0
  %3038 = vmatprep.subr.bf16.mxu0 0
  %3039 = vmatpush2.bf16.msra.mxu0 0
  %3040 = vmatprep.subr.bf16.mxu0 0
  %3041 = vmatpush2.bf16.msra.mxu0 0
  %3042 = vmatprep.subr.bf16.mxu0 0
  %3043 = vmatpush2.bf16.msra.mxu0 0
  %3044 = vmatprep.subr.bf16.mxu0 0
  %3045 = vmatpush2.bf16.msra.mxu0 0
  %3046 = vmatprep.subr.bf16.mxu0 0
  %3047 = vmatpush2.bf16.msra.mxu0 0
  %3048 = vmatprep.subr.bf16.mxu0 0
  %3049 = vmatpush2.bf16.msra.mxu0 0
  %3050 = vmatprep.mubr.bf16.mxu0 0
  %3051 = vmatmul.mubr.bf16.gmra.mxu0 %v2765
  %v3052 = vpop.f32.mrf.mxu0
  %v3053 = vadd.f32 0.0, %v3052
  %v3054 = vpop.f32.mrf.mxu0
  %v3055 = vadd.f32 0.0, %v3054
  %v3056 = vpop.f32.mrf.mxu0
  %v3057 = vadd.f32 0.0, %v3056
  %v3058 = vpop.f32.mrf.mxu0
  %v3059 = vadd.f32 0.0, %v3058
  %3060 = vdwg.mxu0
  %v3061 = vunpack.c.l.bf16 %v2779
  %v3062 = vunpack.c.h.bf16 %v2779
  %v3063 = vunpack.c.l.bf16 %v2780
  %v3064 = vunpack.c.h.bf16 %v2780
  %v3065 = vunpack.c.l.bf16 %v2781
  %v3066 = vunpack.c.h.bf16 %v2781
  %v3067 = vunpack.c.l.bf16 %v2782
  %v3068 = vunpack.c.h.bf16 %v2782
  %v3069 = vadd.f32 %v3061, %v3010
  %v3070 = vadd.f32 %v3062, %v3012
  %v3071 = vadd.f32 %v3063, %v3053
  %v3072 = vadd.f32 %v3064, %v3055
  %v3073 = vadd.f32 %v3065, %v3014
  %v3074 = vadd.f32 %v3066, %v3016
  %v3075 = vadd.f32 %v3067, %v3057
  %v3076 = vadd.f32 %v3068, %v3059
  %v3077 = vxor.u32 %v3069, 2147483648
  %v3078 = vxor.u32 %v3070, 2147483648
  %v3079 = vxor.u32 %v3071, 2147483648
  %v3080 = vxor.u32 %v3073, 2147483648
  %v3081 = vxor.u32 %v3074, 2147483648
  %v3082 = vxor.u32 %v3075, 2147483648
  %v3083 = vmul.f32 %v3077, 1.442695
  %v3084 = vpow.pop %v3083
  %v3085 = vmul.f32 %v3078, 1.442695
  %v3086 = vpow.pop %v3085
  %v3087 = vmul.f32 %v3079, 1.442695
  %v3088 = vpow.pop %v3087
  %v3089 = vmul.f32 %v3080, 1.442695
  %v3090 = vpow.pop %v3089
  %v3091 = vmul.f32 %v3081, 1.442695
  %v3092 = vpow.pop %v3091
  %v3093 = vmul.f32 %v3082, 1.442695
  %v3094 = vpow.pop %v3093
  %v3095 = vadd.f32 %v3084, 1.0
  %v3096 = vadd.f32 %v3086, 1.0
  %v3097 = vadd.f32 %v3088, 1.0
  %v3098 = vadd.f32 %v3090, 1.0
  %v3099 = vadd.f32 %v3092, 1.0
  %v3100 = vadd.f32 %v3094, 1.0
  %v3101 = vrcp.pop %v3095
  %v3102 = vmul.f32 1.0, %v3101
  %v3103 = vrcp.pop %v3096
  %v3104 = vmul.f32 1.0, %v3103
  %v3105 = vrcp.pop %v3097
  %v3106 = vmul.f32 1.0, %v3105
  %v3107 = vrcp.pop %v3098
  %v3108 = vmul.f32 1.0, %v3107
  %v3109 = vrcp.pop %v3099
  %v3110 = vmul.f32 1.0, %v3109
  %v3111 = vrcp.pop %v3100
  %v3112 = vmul.f32 1.0, %v3111
  %v3113 = vtanh.pop %v3072
  %v3114 = vtanh.pop %v3076
  %v3115 = vmul.f32 %v3104, %v2759
  %v3116 = vmul.f32 %v3110, %v2760
  %v3117 = vmul.f32 %v3102, %v3113
  %v3118 = vmul.f32 %v3108, %v3114
  %v3119 = vadd.f32 %v3115, %v3117
  %v3120 = vadd.f32 %v3116, %v3118
  %v3121 = vtanh.pop %v3119
  %v3122 = vtanh.pop %v3120
  %v3123 = vmul.f32 %v3106, %v3121
  %v3124 = vmul.f32 %v3112, %v3122
  %v3125 = vpack.c.bf16 %v3124, %v3123
  %v3127 = vunpack.c.l.b16 %v3125
  %v3128 = vunpack.c.h.b16 %v3125
  %v3129 = vpack.c.b16 %v3127, %v3127
  %v3130 = vpack.c.b16 %v3128, %v3128
  %s3133 = scalar_lea.vmem [#allocation3], 48
  %3134 = vst [vmem:[%s3133] sm:$0xf] %v3129
  %3135 = vst [vmem:[%s3133 + $0x4] sm:$0xf] %v3130
  %s3136 = smul.u32 14, 4
  %s3137 = smul.addr %s3136, 4
  %s3138 = scalar_lea.vmem [#allocation2], %s3137
  %v3139 = vld [vmem:[%s3138] sm:$0xff]
  %v3140 = vld [vmem:[%s3138 + $0x8] sm:$0xff]
  %v3141 = vld [vmem:[%s3138 + $0x10] sm:$0xff]
  %v3142 = vld [vmem:[%s3138 + $0x18] sm:$0xff]
  %v3143 = vld [vmem:[%s3] sm:$0xff]
  %v3144 = vld [vmem:[%s3 + $0x8] sm:$0xff]
  %v3145 = vld [vmem:[%s3 + $0x10] sm:$0xff]
  %v3146 = vld [vmem:[%s3 + $0x18] sm:$0xff]
  %v3147 = vld [vmem:[%s3 + $0x20] sm:$0xff]
  %v3148 = vld [vmem:[%s3 + $0x28] sm:$0xff]
  %v3149 = vld [vmem:[%s3 + $0x30] sm:$0xff]
  %v3150 = vld [vmem:[%s3 + $0x38] sm:$0xff]
  %v3151 = vld [vmem:[%s3 + $0x40] sm:$0xff]
  %v3152 = vld [vmem:[%s3 + $0x48] sm:$0xff]
  %v3153 = vld [vmem:[%s3 + $0x50] sm:$0xff]
  %v3154 = vld [vmem:[%s3 + $0x58] sm:$0xff]
  %v3155 = vld [vmem:[%s3 + $0x60] sm:$0xff]
  %v3156 = vld [vmem:[%s3 + $0x68] sm:$0xff]
  %v3157 = vld [vmem:[%s3 + $0x70] sm:$0xff]
  %v3158 = vld [vmem:[%s3 + $0x78] sm:$0xff]
  %v3159 = vld [vmem:[%s3 + $0x80] sm:$0xff]
  %v3160 = vld [vmem:[%s3 + $0x88] sm:$0xff]
  %v3161 = vld [vmem:[%s3 + $0x90] sm:$0xff]
  %v3162 = vld [vmem:[%s3 + $0x98] sm:$0xff]
  %v3163 = vld [vmem:[%s3 + $0xa0] sm:$0xff]
  %v3164 = vld [vmem:[%s3 + $0xa8] sm:$0xff]
  %v3165 = vld [vmem:[%s3 + $0xb0] sm:$0xff]
  %v3166 = vld [vmem:[%s3 + $0xb8] sm:$0xff]
  %v3167 = vld [vmem:[%s3 + $0xc0] sm:$0xff]
  %v3168 = vld [vmem:[%s3 + $0xc8] sm:$0xff]
  %v3169 = vld [vmem:[%s3 + $0xd0] sm:$0xff]
  %v3170 = vld [vmem:[%s3 + $0xd8] sm:$0xff]
  %v3171 = vld [vmem:[%s3 + $0xe0] sm:$0xff]
  %v3172 = vld [vmem:[%s3 + $0xe8] sm:$0xff]
  %v3173 = vld [vmem:[%s3 + $0xf0] sm:$0xff]
  %v3174 = vld [vmem:[%s3 + $0xf8] sm:$0xff]
  %v3207 = vunpack.c.l.b16 %v3143
  %v3208 = vunpack.c.h.b16 %v3143
  %v3209 = vunpack.c.l.b16 %v3144
  %v3210 = vunpack.c.h.b16 %v3144
  %v3211 = vunpack.c.l.b16 %v3145
  %v3212 = vunpack.c.h.b16 %v3145
  %v3213 = vunpack.c.l.b16 %v3146
  %v3214 = vunpack.c.h.b16 %v3146
  %v3215 = vunpack.c.l.b16 %v3147
  %v3216 = vunpack.c.h.b16 %v3147
  %v3217 = vunpack.c.l.b16 %v3148
  %v3218 = vunpack.c.h.b16 %v3148
  %v3219 = vunpack.c.l.b16 %v3149
  %v3220 = vunpack.c.h.b16 %v3149
  %v3221 = vunpack.c.l.b16 %v3150
  %v3222 = vunpack.c.h.b16 %v3150
  %v3223 = vunpack.c.l.b16 %v3151
  %v3224 = vunpack.c.h.b16 %v3151
  %v3225 = vunpack.c.l.b16 %v3152
  %v3226 = vunpack.c.h.b16 %v3152
  %v3227 = vunpack.c.l.b16 %v3153
  %v3228 = vunpack.c.h.b16 %v3153
  %v3229 = vunpack.c.l.b16 %v3154
  %v3230 = vunpack.c.h.b16 %v3154
  %v3231 = vunpack.c.l.b16 %v3155
  %v3232 = vunpack.c.h.b16 %v3155
  %v3233 = vunpack.c.l.b16 %v3156
  %v3234 = vunpack.c.h.b16 %v3156
  %v3235 = vunpack.c.l.b16 %v3157
  %v3236 = vunpack.c.h.b16 %v3157
  %v3237 = vunpack.c.l.b16 %v3158
  %v3238 = vunpack.c.h.b16 %v3158
  %v3239 = vunpack.c.l.b16 %v3159
  %v3240 = vunpack.c.h.b16 %v3159
  %v3241 = vunpack.c.l.b16 %v3160
  %v3242 = vunpack.c.h.b16 %v3160
  %v3243 = vunpack.c.l.b16 %v3161
  %v3244 = vunpack.c.h.b16 %v3161
  %v3245 = vunpack.c.l.b16 %v3162
  %v3246 = vunpack.c.h.b16 %v3162
  %v3247 = vunpack.c.l.b16 %v3163
  %v3248 = vunpack.c.h.b16 %v3163
  %v3249 = vunpack.c.l.b16 %v3164
  %v3250 = vunpack.c.h.b16 %v3164
  %v3251 = vunpack.c.l.b16 %v3165
  %v3252 = vunpack.c.h.b16 %v3165
  %v3253 = vunpack.c.l.b16 %v3166
  %v3254 = vunpack.c.h.b16 %v3166
  %v3255 = vunpack.c.l.b16 %v3167
  %v3256 = vunpack.c.h.b16 %v3167
  %v3257 = vunpack.c.l.b16 %v3168
  %v3258 = vunpack.c.h.b16 %v3168
  %v3259 = vunpack.c.l.b16 %v3169
  %v3260 = vunpack.c.h.b16 %v3169
  %v3261 = vunpack.c.l.b16 %v3170
  %v3262 = vunpack.c.h.b16 %v3170
  %v3263 = vunpack.c.l.b16 %v3171
  %v3264 = vunpack.c.h.b16 %v3171
  %v3265 = vunpack.c.l.b16 %v3172
  %v3266 = vunpack.c.h.b16 %v3172
  %v3267 = vunpack.c.l.b16 %v3173
  %v3268 = vunpack.c.h.b16 %v3173
  %v3269 = vunpack.c.l.b16 %v3174
  %v3270 = vunpack.c.h.b16 %v3174
  %v3271 = vpack.c.b16 %v3211, %v3207
  %v3272 = vpack.c.b16 %v3212, %v3208
  %v3273 = vpack.c.b16 %v3213, %v3209
  %v3274 = vpack.c.b16 %v3214, %v3210
  %v3275 = vpack.c.b16 %v3219, %v3215
  %v3276 = vpack.c.b16 %v3220, %v3216
  %v3277 = vpack.c.b16 %v3221, %v3217
  %v3278 = vpack.c.b16 %v3222, %v3218
  %v3279 = vpack.c.b16 %v3227, %v3223
  %v3280 = vpack.c.b16 %v3228, %v3224
  %v3281 = vpack.c.b16 %v3229, %v3225
  %v3282 = vpack.c.b16 %v3230, %v3226
  %v3283 = vpack.c.b16 %v3235, %v3231
  %v3284 = vpack.c.b16 %v3236, %v3232
  %v3285 = vpack.c.b16 %v3237, %v3233
  %v3286 = vpack.c.b16 %v3238, %v3234
  %v3287 = vpack.c.b16 %v3243, %v3239
  %v3288 = vpack.c.b16 %v3244, %v3240
  %v3289 = vpack.c.b16 %v3245, %v3241
  %v3290 = vpack.c.b16 %v3246, %v3242
  %v3291 = vpack.c.b16 %v3251, %v3247
  %v3292 = vpack.c.b16 %v3252, %v3248
  %v3293 = vpack.c.b16 %v3253, %v3249
  %v3294 = vpack.c.b16 %v3254, %v3250
  %v3295 = vpack.c.b16 %v3259, %v3255
  %v3296 = vpack.c.b16 %v3260, %v3256
  %v3297 = vpack.c.b16 %v3261, %v3257
  %v3298 = vpack.c.b16 %v3262, %v3258
  %v3299 = vpack.c.b16 %v3267, %v3263
  %v3300 = vpack.c.b16 %v3268, %v3264
  %v3301 = vpack.c.b16 %v3269, %v3265
  %v3302 = vpack.c.b16 %v3270, %v3266
  %3335 = vmatprep.subr.bf16.mxu0 %v3300
  %3336 = vmatpush1.bf16.msra.mxu0 %v3299
  %3337 = vmatprep.subr.bf16.mxu0 %v3296
  %3338 = vmatpush1.bf16.msra.mxu0 %v3295
  %3339 = vmatprep.subr.bf16.mxu0 %v3292
  %3340 = vmatpush1.bf16.msra.mxu0 %v3291
  %3341 = vmatprep.subr.bf16.mxu0 %v3288
  %3342 = vmatpush1.bf16.msra.mxu0 %v3287
  %3343 = vmatprep.subr.bf16.mxu0 %v3284
  %3344 = vmatpush1.bf16.msra.mxu0 %v3283
  %3345 = vmatprep.subr.bf16.mxu0 %v3280
  %3346 = vmatpush1.bf16.msra.mxu0 %v3279
  %3347 = vmatprep.subr.bf16.mxu0 %v3276
  %3348 = vmatpush1.bf16.msra.mxu0 %v3275
  %3349 = vmatprep.subr.bf16.mxu0 %v3272
  %3350 = vmatpush1.bf16.msra.mxu0 %v3271
  %3351 = vmatprep.subr.bf16.mxu0 0
  %3352 = vmatpush2.bf16.msra.mxu0 0
  %3353 = vmatprep.subr.bf16.mxu0 0
  %3354 = vmatpush2.bf16.msra.mxu0 0
  %3355 = vmatprep.subr.bf16.mxu0 0
  %3356 = vmatpush2.bf16.msra.mxu0 0
  %3357 = vmatprep.subr.bf16.mxu0 0
  %3358 = vmatpush2.bf16.msra.mxu0 0
  %3359 = vmatprep.subr.bf16.mxu0 0
  %3360 = vmatpush2.bf16.msra.mxu0 0
  %3361 = vmatprep.subr.bf16.mxu0 0
  %3362 = vmatpush2.bf16.msra.mxu0 0
  %3363 = vmatprep.subr.bf16.mxu0 0
  %3364 = vmatpush2.bf16.msra.mxu0 0
  %3365 = vmatprep.subr.bf16.mxu0 0
  %3366 = vmatpush2.bf16.msra.mxu0 0
  %3367 = vmatprep.mubr.bf16.mxu0 0
  %3368 = vmatmul.mubr.bf16.gmra.mxu0 %v3125
  %v3369 = vpop.f32.mrf.mxu0
  %v3370 = vadd.f32 0.0, %v3369
  %v3371 = vpop.f32.mrf.mxu0
  %v3372 = vadd.f32 0.0, %v3371
  %v3373 = vpop.f32.mrf.mxu0
  %v3374 = vadd.f32 0.0, %v3373
  %v3375 = vpop.f32.mrf.mxu0
  %v3376 = vadd.f32 0.0, %v3375
  %3377 = vdwg.mxu0
  %3378 = vmatprep.subr.bf16.mxu0 %v3302
  %3379 = vmatpush1.bf16.msra.mxu0 %v3301
  %3380 = vmatprep.subr.bf16.mxu0 %v3298
  %3381 = vmatpush1.bf16.msra.mxu0 %v3297
  %3382 = vmatprep.subr.bf16.mxu0 %v3294
  %3383 = vmatpush1.bf16.msra.mxu0 %v3293
  %3384 = vmatprep.subr.bf16.mxu0 %v3290
  %3385 = vmatpush1.bf16.msra.mxu0 %v3289
  %3386 = vmatprep.subr.bf16.mxu0 %v3286
  %3387 = vmatpush1.bf16.msra.mxu0 %v3285
  %3388 = vmatprep.subr.bf16.mxu0 %v3282
  %3389 = vmatpush1.bf16.msra.mxu0 %v3281
  %3390 = vmatprep.subr.bf16.mxu0 %v3278
  %3391 = vmatpush1.bf16.msra.mxu0 %v3277
  %3392 = vmatprep.subr.bf16.mxu0 %v3274
  %3393 = vmatpush1.bf16.msra.mxu0 %v3273
  %3394 = vmatprep.subr.bf16.mxu0 0
  %3395 = vmatpush2.bf16.msra.mxu0 0
  %3396 = vmatprep.subr.bf16.mxu0 0
  %3397 = vmatpush2.bf16.msra.mxu0 0
  %3398 = vmatprep.subr.bf16.mxu0 0
  %3399 = vmatpush2.bf16.msra.mxu0 0
  %3400 = vmatprep.subr.bf16.mxu0 0
  %3401 = vmatpush2.bf16.msra.mxu0 0
  %3402 = vmatprep.subr.bf16.mxu0 0
  %3403 = vmatpush2.bf16.msra.mxu0 0
  %3404 = vmatprep.subr.bf16.mxu0 0
  %3405 = vmatpush2.bf16.msra.mxu0 0
  %3406 = vmatprep.subr.bf16.mxu0 0
  %3407 = vmatpush2.bf16.msra.mxu0 0
  %3408 = vmatprep.subr.bf16.mxu0 0
  %3409 = vmatpush2.bf16.msra.mxu0 0
  %3410 = vmatprep.mubr.bf16.mxu0 0
  %3411 = vmatmul.mubr.bf16.gmra.mxu0 %v3125
  %v3412 = vpop.f32.mrf.mxu0
  %v3413 = vadd.f32 0.0, %v3412
  %v3414 = vpop.f32.mrf.mxu0
  %v3415 = vadd.f32 0.0, %v3414
  %v3416 = vpop.f32.mrf.mxu0
  %v3417 = vadd.f32 0.0, %v3416
  %v3418 = vpop.f32.mrf.mxu0
  %v3419 = vadd.f32 0.0, %v3418
  %3420 = vdwg.mxu0
  %v3421 = vunpack.c.l.bf16 %v3139
  %v3422 = vunpack.c.h.bf16 %v3139
  %v3423 = vunpack.c.l.bf16 %v3140
  %v3424 = vunpack.c.h.bf16 %v3140
  %v3425 = vunpack.c.l.bf16 %v3141
  %v3426 = vunpack.c.h.bf16 %v3141
  %v3427 = vunpack.c.l.bf16 %v3142
  %v3428 = vunpack.c.h.bf16 %v3142
  %v3429 = vadd.f32 %v3421, %v3370
  %v3430 = vadd.f32 %v3422, %v3372
  %v3431 = vadd.f32 %v3423, %v3413
  %v3432 = vadd.f32 %v3424, %v3415
  %v3433 = vadd.f32 %v3425, %v3374
  %v3434 = vadd.f32 %v3426, %v3376
  %v3435 = vadd.f32 %v3427, %v3417
  %v3436 = vadd.f32 %v3428, %v3419
  %v3437 = vxor.u32 %v3429, 2147483648
  %v3438 = vxor.u32 %v3430, 2147483648
  %v3439 = vxor.u32 %v3431, 2147483648
  %v3440 = vxor.u32 %v3433, 2147483648
  %v3441 = vxor.u32 %v3434, 2147483648
  %v3442 = vxor.u32 %v3435, 2147483648
  %v3443 = vmul.f32 %v3437, 1.442695
  %v3444 = vpow.pop %v3443
  %v3445 = vmul.f32 %v3438, 1.442695
  %v3446 = vpow.pop %v3445
  %v3447 = vmul.f32 %v3439, 1.442695
  %v3448 = vpow.pop %v3447
  %v3449 = vmul.f32 %v3440, 1.442695
  %v3450 = vpow.pop %v3449
  %v3451 = vmul.f32 %v3441, 1.442695
  %v3452 = vpow.pop %v3451
  %v3453 = vmul.f32 %v3442, 1.442695
  %v3454 = vpow.pop %v3453
  %v3455 = vadd.f32 %v3444, 1.0
  %v3456 = vadd.f32 %v3446, 1.0
  %v3457 = vadd.f32 %v3448, 1.0
  %v3458 = vadd.f32 %v3450, 1.0
  %v3459 = vadd.f32 %v3452, 1.0
  %v3460 = vadd.f32 %v3454, 1.0
  %v3461 = vrcp.pop %v3455
  %v3462 = vmul.f32 1.0, %v3461
  %v3463 = vrcp.pop %v3456
  %v3464 = vmul.f32 1.0, %v3463
  %v3465 = vrcp.pop %v3457
  %v3466 = vmul.f32 1.0, %v3465
  %v3467 = vrcp.pop %v3458
  %v3468 = vmul.f32 1.0, %v3467
  %v3469 = vrcp.pop %v3459
  %v3470 = vmul.f32 1.0, %v3469
  %v3471 = vrcp.pop %v3460
  %v3472 = vmul.f32 1.0, %v3471
  %v3473 = vtanh.pop %v3432
  %v3474 = vtanh.pop %v3436
  %v3475 = vmul.f32 %v3464, %v3119
  %v3476 = vmul.f32 %v3470, %v3120
  %v3477 = vmul.f32 %v3462, %v3473
  %v3478 = vmul.f32 %v3468, %v3474
  %v3479 = vadd.f32 %v3475, %v3477
  %v3480 = vadd.f32 %v3476, %v3478
  %v3481 = vtanh.pop %v3479
  %v3482 = vtanh.pop %v3480
  %v3483 = vmul.f32 %v3466, %v3481
  %v3484 = vmul.f32 %v3472, %v3482
  %v3485 = vpack.c.bf16 %v3484, %v3483
  %v3487 = vunpack.c.l.b16 %v3485
  %v3488 = vunpack.c.h.b16 %v3485
  %v3489 = vpack.c.b16 %v3487, %v3487
  %v3490 = vpack.c.b16 %v3488, %v3488
  %s3493 = scalar_lea.vmem [#allocation3], 56
  %3494 = vst [vmem:[%s3493] sm:$0xf] %v3489
  %3495 = vst [vmem:[%s3493 + $0x4] sm:$0xf] %v3490
  %v3496 = vld [vmem:[#allocation3] sm:$0xf]
  %v3497 = vld [vmem:[#allocation3 + $0x4] sm:$0xf]
  %v3498 = vld [vmem:[#allocation3 + $0x8] sm:$0xf]
  %v3499 = vld [vmem:[#allocation3 + $0xc] sm:$0xf]
  %v3500 = vld [vmem:[#allocation3 + $0x10] sm:$0xf]
  %v3501 = vld [vmem:[#allocation3 + $0x14] sm:$0xf]
  %v3502 = vld [vmem:[#allocation3 + $0x18] sm:$0xf]
  %v3503 = vld [vmem:[#allocation3 + $0x1c] sm:$0xf]
  %v3504 = vld [vmem:[#allocation3 + $0x20] sm:$0xf]
  %v3505 = vld [vmem:[#allocation3 + $0x24] sm:$0xf]
  %v3506 = vld [vmem:[#allocation3 + $0x28] sm:$0xf]
  %v3507 = vld [vmem:[#allocation3 + $0x2c] sm:$0xf]
  %v3508 = vld [vmem:[#allocation3 + $0x30] sm:$0xf]
  %v3509 = vld [vmem:[#allocation3 + $0x34] sm:$0xf]
  %v3510 = vld [vmem:[#allocation3 + $0x38] sm:$0xf]
  %v3511 = vld [vmem:[#allocation3 + $0x3c] sm:$0xf]
  %v3512 = vld [vmem:[%s5] sm:$0xff]
  %v3513 = vld [vmem:[%s5 + $0x8] sm:$0xff]
  %v3514 = vld [vmem:[%s5 + $0x10] sm:$0xff]
  %v3515 = vld [vmem:[%s5 + $0x18] sm:$0xff]
  %v3516 = vld [vmem:[%s5 + $0x20] sm:$0xff]
  %v3517 = vld [vmem:[%s5 + $0x28] sm:$0xff]
  %v3518 = vld [vmem:[%s5 + $0x30] sm:$0xff]
  %v3519 = vld [vmem:[%s5 + $0x38] sm:$0xff]
  %v3520 = vld [vmem:[%s5 + $0x40] sm:$0xff]
  %v3521 = vld [vmem:[%s5 + $0x48] sm:$0xff]
  %v3522 = vld [vmem:[%s5 + $0x50] sm:$0xff]
  %v3523 = vld [vmem:[%s5 + $0x58] sm:$0xff]
  %v3524 = vld [vmem:[%s5 + $0x60] sm:$0xff]
  %v3525 = vld [vmem:[%s5 + $0x68] sm:$0xff]
  %v3526 = vld [vmem:[%s5 + $0x70] sm:$0xff]
  %v3527 = vld [vmem:[%s5 + $0x78] sm:$0xff]
  %v3528 = vld [vmem:[%s5 + $0x80] sm:$0xff]
  %v3529 = vld [vmem:[%s5 + $0x88] sm:$0xff]
  %v3530 = vld [vmem:[%s5 + $0x90] sm:$0xff]
  %v3531 = vld [vmem:[%s5 + $0x98] sm:$0xff]
  %v3532 = vld [vmem:[%s5 + $0xa0] sm:$0xff]
  %v3533 = vld [vmem:[%s5 + $0xa8] sm:$0xff]
  %v3534 = vld [vmem:[%s5 + $0xb0] sm:$0xff]
  %v3535 = vld [vmem:[%s5 + $0xb8] sm:$0xff]
  %v3536 = vld [vmem:[%s5 + $0xc0] sm:$0xff]
  %v3537 = vld [vmem:[%s5 + $0xc8] sm:$0xff]
  %v3538 = vld [vmem:[%s5 + $0xd0] sm:$0xff]
  %v3539 = vld [vmem:[%s5 + $0xd8] sm:$0xff]
  %v3540 = vld [vmem:[%s5 + $0xe0] sm:$0xff]
  %v3541 = vld [vmem:[%s5 + $0xe8] sm:$0xff]
  %v3542 = vld [vmem:[%s5 + $0xf0] sm:$0xff]
  %v3543 = vld [vmem:[%s5 + $0xf8] sm:$0xff]
  %v3544 = vld [vmem:[%s7] sm:$0xf]
  %v3546 = vlaneseq
  %v3547 = vshrl.u32 %v3546, 7
  %v3548 = vsub.s32 0, %v3547
  %v3549 = vrot.slane %v3544, %v3548
  %v3550 = vlaneseq
  %v3551 = vshrl.u32 %v3550, 7
  %v3552 = vsub.s32 1, %v3551
  %v3553 = vrot.slane %v3544, %v3552
  %v3554 = vlaneseq
  %v3555 = vshrl.u32 %v3554, 7
  %v3556 = vsub.s32 2, %v3555
  %v3557 = vrot.slane %v3544, %v3556
  %v3558 = vlaneseq
  %v3559 = vshrl.u32 %v3558, 7
  %v3560 = vsub.s32 3, %v3559
  %v3561 = vrot.slane %v3544, %v3560
  %v3582 = vunpack.c.l.b16 %v3496
  %v3583 = vunpack.c.l.b16 %v3497
  %v3584 = vunpack.c.l.b16 %v3498
  %v3585 = vunpack.c.l.b16 %v3499
  %v3586 = vunpack.c.l.b16 %v3500
  %v3587 = vunpack.c.l.b16 %v3501
  %v3588 = vunpack.c.l.b16 %v3502
  %v3589 = vunpack.c.l.b16 %v3503
  %v3590 = vunpack.c.l.b16 %v3504
  %v3591 = vunpack.c.l.b16 %v3505
  %v3592 = vunpack.c.l.b16 %v3506
  %v3593 = vunpack.c.l.b16 %v3507
  %v3594 = vunpack.c.l.b16 %v3508
  %v3595 = vunpack.c.l.b16 %v3509
  %v3596 = vunpack.c.l.b16 %v3510
  %v3597 = vunpack.c.l.b16 %v3511
  %v3598 = vpack.c.b16 %v3583, %v3582
  %v3599 = vpack.c.b16 %v3585, %v3584
  %v3600 = vpack.c.b16 %v3587, %v3586
  %v3601 = vpack.c.b16 %v3589, %v3588
  %v3602 = vpack.c.b16 %v3591, %v3590
  %v3603 = vpack.c.b16 %v3593, %v3592
  %v3604 = vpack.c.b16 %v3595, %v3594
  %v3605 = vpack.c.b16 %v3597, %v3596
  %v3646 = vunpack.c.l.b16 %v3512
  %v3647 = vunpack.c.h.b16 %v3512
  %v3648 = vunpack.c.l.b16 %v3513
  %v3649 = vunpack.c.h.b16 %v3513
  %v3650 = vunpack.c.l.b16 %v3514
  %v3651 = vunpack.c.h.b16 %v3514
  %v3652 = vunpack.c.l.b16 %v3515
  %v3653 = vunpack.c.h.b16 %v3515
  %v3654 = vunpack.c.l.b16 %v3516
  %v3655 = vunpack.c.h.b16 %v3516
  %v3656 = vunpack.c.l.b16 %v3517
  %v3657 = vunpack.c.h.b16 %v3517
  %v3658 = vunpack.c.l.b16 %v3518
  %v3659 = vunpack.c.h.b16 %v3518
  %v3660 = vunpack.c.l.b16 %v3519
  %v3661 = vunpack.c.h.b16 %v3519
  %v3662 = vunpack.c.l.b16 %v3520
  %v3663 = vunpack.c.h.b16 %v3520
  %v3664 = vunpack.c.l.b16 %v3521
  %v3665 = vunpack.c.h.b16 %v3521
  %v3666 = vunpack.c.l.b16 %v3522
  %v3667 = vunpack.c.h.b16 %v3522
  %v3668 = vunpack.c.l.b16 %v3523
  %v3669 = vunpack.c.h.b16 %v3523
  %v3670 = vunpack.c.l.b16 %v3524
  %v3671 = vunpack.c.h.b16 %v3524
  %v3672 = vunpack.c.l.b16 %v3525
  %v3673 = vunpack.c.h.b16 %v3525
  %v3674 = vunpack.c.l.b16 %v3526
  %v3675 = vunpack.c.h.b16 %v3526
  %v3676 = vunpack.c.l.b16 %v3527
  %v3677 = vunpack.c.h.b16 %v3527
  %v3678 = vunpack.c.l.b16 %v3528
  %v3679 = vunpack.c.h.b16 %v3528
  %v3680 = vunpack.c.l.b16 %v3529
  %v3681 = vunpack.c.h.b16 %v3529
  %v3682 = vunpack.c.l.b16 %v3530
  %v3683 = vunpack.c.h.b16 %v3530
  %v3684 = vunpack.c.l.b16 %v3531
  %v3685 = vunpack.c.h.b16 %v3531
  %v3686 = vunpack.c.l.b16 %v3532
  %v3687 = vunpack.c.h.b16 %v3532
  %v3688 = vunpack.c.l.b16 %v3533
  %v3689 = vunpack.c.h.b16 %v3533
  %v3690 = vunpack.c.l.b16 %v3534
  %v3691 = vunpack.c.h.b16 %v3534
  %v3692 = vunpack.c.l.b16 %v3535
  %v3693 = vunpack.c.h.b16 %v3535
  %v3694 = vunpack.c.l.b16 %v3536
  %v3695 = vunpack.c.h.b16 %v3536
  %v3696 = vunpack.c.l.b16 %v3537
  %v3697 = vunpack.c.h.b16 %v3537
  %v3698 = vunpack.c.l.b16 %v3538
  %v3699 = vunpack.c.h.b16 %v3538
  %v3700 = vunpack.c.l.b16 %v3539
  %v3701 = vunpack.c.h.b16 %v3539
  %v3702 = vunpack.c.l.b16 %v3540
  %v3703 = vunpack.c.h.b16 %v3540
  %v3704 = vunpack.c.l.b16 %v3541
  %v3705 = vunpack.c.h.b16 %v3541
  %v3706 = vunpack.c.l.b16 %v3542
  %v3707 = vunpack.c.h.b16 %v3542
  %v3708 = vunpack.c.l.b16 %v3543
  %v3709 = vunpack.c.h.b16 %v3543
  %v3710 = vpack.c.b16 %v3650, %v3646
  %v3711 = vpack.c.b16 %v3651, %v3647
  %v3712 = vpack.c.b16 %v3652, %v3648
  %v3713 = vpack.c.b16 %v3653, %v3649
  %v3714 = vpack.c.b16 %v3658, %v3654
  %v3715 = vpack.c.b16 %v3659, %v3655
  %v3716 = vpack.c.b16 %v3660, %v3656
  %v3717 = vpack.c.b16 %v3661, %v3657
  %v3718 = vpack.c.b16 %v3666, %v3662
  %v3719 = vpack.c.b16 %v3667, %v3663
  %v3720 = vpack.c.b16 %v3668, %v3664
  %v3721 = vpack.c.b16 %v3669, %v3665
  %v3722 = vpack.c.b16 %v3674, %v3670
  %v3723 = vpack.c.b16 %v3675, %v3671
  %v3724 = vpack.c.b16 %v3676, %v3672
  %v3725 = vpack.c.b16 %v3677, %v3673
  %v3726 = vpack.c.b16 %v3682, %v3678
  %v3727 = vpack.c.b16 %v3683, %v3679
  %v3728 = vpack.c.b16 %v3684, %v3680
  %v3729 = vpack.c.b16 %v3685, %v3681
  %v3730 = vpack.c.b16 %v3690, %v3686
  %v3731 = vpack.c.b16 %v3691, %v3687
  %v3732 = vpack.c.b16 %v3692, %v3688
  %v3733 = vpack.c.b16 %v3693, %v3689
  %v3734 = vpack.c.b16 %v3698, %v3694
  %v3735 = vpack.c.b16 %v3699, %v3695
  %v3736 = vpack.c.b16 %v3700, %v3696
  %v3737 = vpack.c.b16 %v3701, %v3697
  %v3738 = vpack.c.b16 %v3706, %v3702
  %v3739 = vpack.c.b16 %v3707, %v3703
  %v3740 = vpack.c.b16 %v3708, %v3704
  %v3741 = vpack.c.b16 %v3709, %v3705
  %3774 = vmatprep.subr.bf16.mxu0 %v3739
  %3775 = vmatpush1.bf16.msra.mxu0 %v3738
  %3776 = vmatprep.subr.bf16.mxu0 %v3735
  %3777 = vmatpush1.bf16.msra.mxu0 %v3734
  %3778 = vmatprep.subr.bf16.mxu0 %v3731
  %3779 = vmatpush1.bf16.msra.mxu0 %v3730
  %3780 = vmatprep.subr.bf16.mxu0 %v3727
  %3781 = vmatpush1.bf16.msra.mxu0 %v3726
  %3782 = vmatprep.subr.bf16.mxu0 %v3723
  %3783 = vmatpush1.bf16.msra.mxu0 %v3722
  %3784 = vmatprep.subr.bf16.mxu0 %v3719
  %3785 = vmatpush1.bf16.msra.mxu0 %v3718
  %3786 = vmatprep.subr.bf16.mxu0 %v3715
  %3787 = vmatpush1.bf16.msra.mxu0 %v3714
  %3788 = vmatprep.subr.bf16.mxu0 %v3711
  %3789 = vmatpush1.bf16.msra.mxu0 %v3710
  %3790 = vmatprep.subr.bf16.mxu0 0
  %3791 = vmatpush2.bf16.msra.mxu0 0
  %3792 = vmatprep.subr.bf16.mxu0 0
  %3793 = vmatpush2.bf16.msra.mxu0 0
  %3794 = vmatprep.subr.bf16.mxu0 0
  %3795 = vmatpush2.bf16.msra.mxu0 0
  %3796 = vmatprep.subr.bf16.mxu0 0
  %3797 = vmatpush2.bf16.msra.mxu0 0
  %3798 = vmatprep.subr.bf16.mxu0 0
  %3799 = vmatpush2.bf16.msra.mxu0 0
  %3800 = vmatprep.subr.bf16.mxu0 0
  %3801 = vmatpush2.bf16.msra.mxu0 0
  %3802 = vmatprep.subr.bf16.mxu0 0
  %3803 = vmatpush2.bf16.msra.mxu0 0
  %3804 = vmatprep.subr.bf16.mxu0 0
  %3805 = vmatpush2.bf16.msra.mxu0 0
  %3806 = vmatprep.mubr.bf16.mxu0 0
  %3807 = vmatmul.mubr.bf16.gmra.mxu0 %v3598
  %v3808 = vpop.f32.mrf.mxu0
  %v3809 = vadd.f32 %v3549, %v3808
  %v3810 = vpop.f32.mrf.mxu0
  %v3811 = vadd.f32 %v3553, %v3810
  %v3812 = vpop.f32.mrf.mxu0
  %v3813 = vadd.f32 %v3549, %v3812
  %v3814 = vpop.f32.mrf.mxu0
  %v3815 = vadd.f32 %v3553, %v3814
  %3816 = vmatprep.mubr.bf16.mxu0 0
  %3817 = vmatmul.mubr.bf16.gmra.mxu0 %v3599
  %v3818 = vpop.f32.mrf.mxu0
  %v3819 = vadd.f32 %v3549, %v3818
  %v3820 = vpop.f32.mrf.mxu0
  %v3821 = vadd.f32 %v3553, %v3820
  %v3822 = vpop.f32.mrf.mxu0
  %v3823 = vadd.f32 %v3549, %v3822
  %v3824 = vpop.f32.mrf.mxu0
  %v3825 = vadd.f32 %v3553, %v3824
  %3826 = vmatprep.mubr.bf16.mxu0 0
  %3827 = vmatmul.mubr.bf16.gmra.mxu0 %v3600
  %v3828 = vpop.f32.mrf.mxu0
  %v3829 = vadd.f32 %v3549, %v3828
  %v3830 = vpop.f32.mrf.mxu0
  %v3831 = vadd.f32 %v3553, %v3830
  %v3832 = vpop.f32.mrf.mxu0
  %v3833 = vadd.f32 %v3549, %v3832
  %v3834 = vpop.f32.mrf.mxu0
  %v3835 = vadd.f32 %v3553, %v3834
  %3836 = vmatprep.mubr.bf16.mxu0 0
  %3837 = vmatmul.mubr.bf16.gmra.mxu0 %v3601
  %v3838 = vpop.f32.mrf.mxu0
  %v3839 = vadd.f32 %v3549, %v3838
  %v3840 = vpop.f32.mrf.mxu0
  %v3841 = vadd.f32 %v3553, %v3840
  %v3842 = vpop.f32.mrf.mxu0
  %v3843 = vadd.f32 %v3549, %v3842
  %v3844 = vpop.f32.mrf.mxu0
  %v3845 = vadd.f32 %v3553, %v3844
  %3846 = vmatprep.mubr.bf16.mxu0 0
  %3847 = vmatmul.mubr.bf16.gmra.mxu0 %v3602
  %v3848 = vpop.f32.mrf.mxu0
  %v3849 = vadd.f32 %v3549, %v3848
  %v3850 = vpop.f32.mrf.mxu0
  %v3851 = vadd.f32 %v3553, %v3850
  %v3852 = vpop.f32.mrf.mxu0
  %v3853 = vadd.f32 %v3549, %v3852
  %v3854 = vpop.f32.mrf.mxu0
  %v3855 = vadd.f32 %v3553, %v3854
  %3856 = vmatprep.mubr.bf16.mxu0 0
  %3857 = vmatmul.mubr.bf16.gmra.mxu0 %v3603
  %v3858 = vpop.f32.mrf.mxu0
  %v3859 = vadd.f32 %v3549, %v3858
  %v3860 = vpop.f32.mrf.mxu0
  %v3861 = vadd.f32 %v3553, %v3860
  %v3862 = vpop.f32.mrf.mxu0
  %v3863 = vadd.f32 %v3549, %v3862
  %v3864 = vpop.f32.mrf.mxu0
  %v3865 = vadd.f32 %v3553, %v3864
  %3866 = vmatprep.mubr.bf16.mxu0 0
  %3867 = vmatmul.mubr.bf16.gmra.mxu0 %v3604
  %v3868 = vpop.f32.mrf.mxu0
  %v3869 = vadd.f32 %v3549, %v3868
  %v3870 = vpop.f32.mrf.mxu0
  %v3871 = vadd.f32 %v3553, %v3870
  %v3872 = vpop.f32.mrf.mxu0
  %v3873 = vadd.f32 %v3549, %v3872
  %v3874 = vpop.f32.mrf.mxu0
  %v3875 = vadd.f32 %v3553, %v3874
  %3876 = vmatprep.mubr.bf16.mxu0 0
  %3877 = vmatmul.mubr.bf16.gmra.mxu0 %v3605
  %v3878 = vpop.f32.mrf.mxu0
  %v3879 = vadd.f32 %v3549, %v3878
  %v3880 = vpop.f32.mrf.mxu0
  %v3881 = vadd.f32 %v3553, %v3880
  %v3882 = vpop.f32.mrf.mxu0
  %v3883 = vadd.f32 %v3549, %v3882
  %v3884 = vpop.f32.mrf.mxu0
  %v3885 = vadd.f32 %v3553, %v3884
  %3886 = vdwg.mxu0
  %3887 = vmatprep.subr.bf16.mxu0 %v3741
  %3888 = vmatpush1.bf16.msra.mxu0 %v3740
  %3889 = vmatprep.subr.bf16.mxu0 %v3737
  %3890 = vmatpush1.bf16.msra.mxu0 %v3736
  %3891 = vmatprep.subr.bf16.mxu0 %v3733
  %3892 = vmatpush1.bf16.msra.mxu0 %v3732
  %3893 = vmatprep.subr.bf16.mxu0 %v3729
  %3894 = vmatpush1.bf16.msra.mxu0 %v3728
  %3895 = vmatprep.subr.bf16.mxu0 %v3725
  %3896 = vmatpush1.bf16.msra.mxu0 %v3724
  %3897 = vmatprep.subr.bf16.mxu0 %v3721
  %3898 = vmatpush1.bf16.msra.mxu0 %v3720
  %3899 = vmatprep.subr.bf16.mxu0 %v3717
  %3900 = vmatpush1.bf16.msra.mxu0 %v3716
  %3901 = vmatprep.subr.bf16.mxu0 %v3713
  %3902 = vmatpush1.bf16.msra.mxu0 %v3712
  %3903 = vmatprep.subr.bf16.mxu0 0
  %3904 = vmatpush2.bf16.msra.mxu0 0
  %3905 = vmatprep.subr.bf16.mxu0 0
  %3906 = vmatpush2.bf16.msra.mxu0 0
  %3907 = vmatprep.subr.bf16.mxu0 0
  %3908 = vmatpush2.bf16.msra.mxu0 0
  %3909 = vmatprep.subr.bf16.mxu0 0
  %3910 = vmatpush2.bf16.msra.mxu0 0
  %3911 = vmatprep.subr.bf16.mxu0 0
  %3912 = vmatpush2.bf16.msra.mxu0 0
  %3913 = vmatprep.subr.bf16.mxu0 0
  %3914 = vmatpush2.bf16.msra.mxu0 0
  %3915 = vmatprep.subr.bf16.mxu0 0
  %3916 = vmatpush2.bf16.msra.mxu0 0
  %3917 = vmatprep.subr.bf16.mxu0 0
  %3918 = vmatpush2.bf16.msra.mxu0 0
  %3919 = vmatprep.mubr.bf16.mxu0 0
  %3920 = vmatmul.mubr.bf16.gmra.mxu0 %v3598
  %v3921 = vpop.f32.mrf.mxu0
  %v3922 = vadd.f32 %v3557, %v3921
  %v3923 = vpop.f32.mrf.mxu0
  %v3924 = vadd.f32 %v3561, %v3923
  %v3925 = vpop.f32.mrf.mxu0
  %v3926 = vadd.f32 %v3557, %v3925
  %v3927 = vpop.f32.mrf.mxu0
  %v3928 = vadd.f32 %v3561, %v3927
  %3929 = vmatprep.mubr.bf16.mxu0 0
  %3930 = vmatmul.mubr.bf16.gmra.mxu0 %v3599
  %v3931 = vpop.f32.mrf.mxu0
  %v3932 = vadd.f32 %v3557, %v3931
  %v3933 = vpop.f32.mrf.mxu0
  %v3934 = vadd.f32 %v3561, %v3933
  %v3935 = vpop.f32.mrf.mxu0
  %v3936 = vadd.f32 %v3557, %v3935
  %v3937 = vpop.f32.mrf.mxu0
  %v3938 = vadd.f32 %v3561, %v3937
  %3939 = vmatprep.mubr.bf16.mxu0 0
  %3940 = vmatmul.mubr.bf16.gmra.mxu0 %v3600
  %v3941 = vpop.f32.mrf.mxu0
  %v3942 = vadd.f32 %v3557, %v3941
  %v3943 = vpop.f32.mrf.mxu0
  %v3944 = vadd.f32 %v3561, %v3943
  %v3945 = vpop.f32.mrf.mxu0
  %v3946 = vadd.f32 %v3557, %v3945
  %v3947 = vpop.f32.mrf.mxu0
  %v3948 = vadd.f32 %v3561, %v3947
  %3949 = vmatprep.mubr.bf16.mxu0 0
  %3950 = vmatmul.mubr.bf16.gmra.mxu0 %v3601
  %v3951 = vpop.f32.mrf.mxu0
  %v3952 = vadd.f32 %v3557, %v3951
  %v3953 = vpop.f32.mrf.mxu0
  %v3954 = vadd.f32 %v3561, %v3953
  %v3955 = vpop.f32.mrf.mxu0
  %v3956 = vadd.f32 %v3557, %v3955
  %v3957 = vpop.f32.mrf.mxu0
  %v3958 = vadd.f32 %v3561, %v3957
  %3959 = vmatprep.mubr.bf16.mxu0 0
  %3960 = vmatmul.mubr.bf16.gmra.mxu0 %v3602
  %v3961 = vpop.f32.mrf.mxu0
  %v3962 = vadd.f32 %v3557, %v3961
  %v3963 = vpop.f32.mrf.mxu0
  %v3964 = vadd.f32 %v3561, %v3963
  %v3965 = vpop.f32.mrf.mxu0
  %v3966 = vadd.f32 %v3557, %v3965
  %v3967 = vpop.f32.mrf.mxu0
  %v3968 = vadd.f32 %v3561, %v3967
  %3969 = vmatprep.mubr.bf16.mxu0 0
  %3970 = vmatmul.mubr.bf16.gmra.mxu0 %v3603
  %v3971 = vpop.f32.mrf.mxu0
  %v3972 = vadd.f32 %v3557, %v3971
  %v3973 = vpop.f32.mrf.mxu0
  %v3974 = vadd.f32 %v3561, %v3973
  %v3975 = vpop.f32.mrf.mxu0
  %v3976 = vadd.f32 %v3557, %v3975
  %v3977 = vpop.f32.mrf.mxu0
  %v3978 = vadd.f32 %v3561, %v3977
  %3979 = vmatprep.mubr.bf16.mxu0 0
  %3980 = vmatmul.mubr.bf16.gmra.mxu0 %v3604
  %v3981 = vpop.f32.mrf.mxu0
  %v3982 = vadd.f32 %v3557, %v3981
  %v3983 = vpop.f32.mrf.mxu0
  %v3984 = vadd.f32 %v3561, %v3983
  %v3985 = vpop.f32.mrf.mxu0
  %v3986 = vadd.f32 %v3557, %v3985
  %v3987 = vpop.f32.mrf.mxu0
  %v3988 = vadd.f32 %v3561, %v3987
  %3989 = vmatprep.mubr.bf16.mxu0 0
  %3990 = vmatmul.mubr.bf16.gmra.mxu0 %v3605
  %v3991 = vpop.f32.mrf.mxu0
  %v3992 = vadd.f32 %v3557, %v3991
  %v3993 = vpop.f32.mrf.mxu0
  %v3994 = vadd.f32 %v3561, %v3993
  %v3995 = vpop.f32.mrf.mxu0
  %v3996 = vadd.f32 %v3557, %v3995
  %v3997 = vpop.f32.mrf.mxu0
  %v3998 = vadd.f32 %v3561, %v3997
  %3999 = vdwg.mxu0
  %v4000 = vpack.c.bf16 %v3813, %v3809
  %v4001 = vpack.c.bf16 %v3815, %v3811
  %v4002 = vpack.c.bf16 %v3926, %v3922
  %v4003 = vpack.c.bf16 %v3928, %v3924
  %v4004 = vpack.c.bf16 %v3823, %v3819
  %v4005 = vpack.c.bf16 %v3825, %v3821
  %v4006 = vpack.c.bf16 %v3936, %v3932
  %v4007 = vpack.c.bf16 %v3938, %v3934
  %v4008 = vpack.c.bf16 %v3833, %v3829
  %v4009 = vpack.c.bf16 %v3835, %v3831
  %v4010 = vpack.c.bf16 %v3946, %v3942
  %v4011 = vpack.c.bf16 %v3948, %v3944
  %v4012 = vpack.c.bf16 %v3843, %v3839
  %v4013 = vpack.c.bf16 %v3845, %v3841
  %v4014 = vpack.c.bf16 %v3956, %v3952
  %v4015 = vpack.c.bf16 %v3958, %v3954
  %v4016 = vpack.c.bf16 %v3853, %v3849
  %v4017 = vpack.c.bf16 %v3855, %v3851
  %v4018 = vpack.c.bf16 %v3966, %v3962
  %v4019 = vpack.c.bf16 %v3968, %v3964
  %v4020 = vpack.c.bf16 %v3863, %v3859
  %v4021 = vpack.c.bf16 %v3865, %v3861
  %v4022 = vpack.c.bf16 %v3976, %v3972
  %v4023 = vpack.c.bf16 %v3978, %v3974
  %v4024 = vpack.c.bf16 %v3873, %v3869
  %v4025 = vpack.c.bf16 %v3875, %v3871
  %v4026 = vpack.c.bf16 %v3986, %v3982
  %v4027 = vpack.c.bf16 %v3988, %v3984
  %v4028 = vpack.c.bf16 %v3883, %v3879
  %v4029 = vpack.c.bf16 %v3885, %v3881
  %v4030 = vpack.c.bf16 %v3996, %v3992
  %v4031 = vpack.c.bf16 %v3998, %v3994
  %v4064 = vunpack.c.l.b16 %v4000
  %v4065 = vunpack.c.l.b16 %v4001
  %v4066 = vunpack.c.l.b16 %v4002
  %v4067 = vunpack.c.l.b16 %v4003
  %v4068 = vunpack.c.h.b16 %v4000
  %v4069 = vunpack.c.h.b16 %v4001
  %v4070 = vunpack.c.h.b16 %v4002
  %v4071 = vunpack.c.h.b16 %v4003
  %v4072 = vunpack.c.l.b16 %v4004
  %v4073 = vunpack.c.l.b16 %v4005
  %v4074 = vunpack.c.l.b16 %v4006
  %v4075 = vunpack.c.l.b16 %v4007
  %v4076 = vunpack.c.h.b16 %v4004
  %v4077 = vunpack.c.h.b16 %v4005
  %v4078 = vunpack.c.h.b16 %v4006
  %v4079 = vunpack.c.h.b16 %v4007
  %v4080 = vunpack.c.l.b16 %v4008
  %v4081 = vunpack.c.l.b16 %v4009
  %v4082 = vunpack.c.l.b16 %v4010
  %v4083 = vunpack.c.l.b16 %v4011
  %v4084 = vunpack.c.h.b16 %v4008
  %v4085 = vunpack.c.h.b16 %v4009
  %v4086 = vunpack.c.h.b16 %v4010
  %v4087 = vunpack.c.h.b16 %v4011
  %v4088 = vunpack.c.l.b16 %v4012
  %v4089 = vunpack.c.l.b16 %v4013
  %v4090 = vunpack.c.l.b16 %v4014
  %v4091 = vunpack.c.l.b16 %v4015
  %v4092 = vunpack.c.h.b16 %v4012
  %v4093 = vunpack.c.h.b16 %v4013
  %v4094 = vunpack.c.h.b16 %v4014
  %v4095 = vunpack.c.h.b16 %v4015
  %v4096 = vunpack.c.l.b16 %v4016
  %v4097 = vunpack.c.l.b16 %v4017
  %v4098 = vunpack.c.l.b16 %v4018
  %v4099 = vunpack.c.l.b16 %v4019
  %v4100 = vunpack.c.h.b16 %v4016
  %v4101 = vunpack.c.h.b16 %v4017
  %v4102 = vunpack.c.h.b16 %v4018
  %v4103 = vunpack.c.h.b16 %v4019
  %v4104 = vunpack.c.l.b16 %v4020
  %v4105 = vunpack.c.l.b16 %v4021
  %v4106 = vunpack.c.l.b16 %v4022
  %v4107 = vunpack.c.l.b16 %v4023
  %v4108 = vunpack.c.h.b16 %v4020
  %v4109 = vunpack.c.h.b16 %v4021
  %v4110 = vunpack.c.h.b16 %v4022
  %v4111 = vunpack.c.h.b16 %v4023
  %v4112 = vunpack.c.l.b16 %v4024
  %v4113 = vunpack.c.l.b16 %v4025
  %v4114 = vunpack.c.l.b16 %v4026
  %v4115 = vunpack.c.l.b16 %v4027
  %v4116 = vunpack.c.h.b16 %v4024
  %v4117 = vunpack.c.h.b16 %v4025
  %v4118 = vunpack.c.h.b16 %v4026
  %v4119 = vunpack.c.h.b16 %v4027
  %v4120 = vunpack.c.l.b16 %v4028
  %v4121 = vunpack.c.l.b16 %v4029
  %v4122 = vunpack.c.l.b16 %v4030
  %v4123 = vunpack.c.l.b16 %v4031
  %v4124 = vunpack.c.h.b16 %v4028
  %v4125 = vunpack.c.h.b16 %v4029
  %v4126 = vunpack.c.h.b16 %v4030
  %v4127 = vunpack.c.h.b16 %v4031
  %v4128 = vpack.c.b16 %v4065, %v4064
  %v4129 = vpack.c.b16 %v4067, %v4066
  %v4130 = vpack.c.b16 %v4069, %v4068
  %v4131 = vpack.c.b16 %v4071, %v4070
  %v4132 = vpack.c.b16 %v4073, %v4072
  %v4133 = vpack.c.b16 %v4075, %v4074
  %v4134 = vpack.c.b16 %v4077, %v4076
  %v4135 = vpack.c.b16 %v4079, %v4078
  %v4136 = vpack.c.b16 %v4081, %v4080
  %v4137 = vpack.c.b16 %v4083, %v4082
  %v4138 = vpack.c.b16 %v4085, %v4084
  %v4139 = vpack.c.b16 %v4087, %v4086
  %v4140 = vpack.c.b16 %v4089, %v4088
  %v4141 = vpack.c.b16 %v4091, %v4090
  %v4142 = vpack.c.b16 %v4093, %v4092
  %v4143 = vpack.c.b16 %v4095, %v4094
  %v4144 = vpack.c.b16 %v4097, %v4096
  %v4145 = vpack.c.b16 %v4099, %v4098
  %v4146 = vpack.c.b16 %v4101, %v4100
  %v4147 = vpack.c.b16 %v4103, %v4102
  %v4148 = vpack.c.b16 %v4105, %v4104
  %v4149 = vpack.c.b16 %v4107, %v4106
  %v4150 = vpack.c.b16 %v4109, %v4108
  %v4151 = vpack.c.b16 %v4111, %v4110
  %v4152 = vpack.c.b16 %v4113, %v4112
  %v4153 = vpack.c.b16 %v4115, %v4114
  %v4154 = vpack.c.b16 %v4117, %v4116
  %v4155 = vpack.c.b16 %v4119, %v4118
  %v4156 = vpack.c.b16 %v4121, %v4120
  %v4157 = vpack.c.b16 %v4123, %v4122
  %v4158 = vpack.c.b16 %v4125, %v4124
  %v4159 = vpack.c.b16 %v4127, %v4126
  %4192 = vst [vmem:[#allocation2] sm:$0xff] %v4128
  %4193 = vst [vmem:[#allocation2 + $0x8] sm:$0xff] %v4129
  %4194 = vst [vmem:[#allocation2 + $0x10] sm:$0xff] %v4130
  %4195 = vst [vmem:[#allocation2 + $0x18] sm:$0xff] %v4131
  %4196 = vst [vmem:[#allocation2 + $0x20] sm:$0xff] %v4132
  %4197 = vst [vmem:[#allocation2 + $0x28] sm:$0xff] %v4133
  %4198 = vst [vmem:[#allocation2 + $0x30] sm:$0xff] %v4134
  %4199 = vst [vmem:[#allocation2 + $0x38] sm:$0xff] %v4135
  %4200 = vst [vmem:[#allocation2 + $0x40] sm:$0xff] %v4136
  %4201 = vst [vmem:[#allocation2 + $0x48] sm:$0xff] %v4137
  %4202 = vst [vmem:[#allocation2 + $0x50] sm:$0xff] %v4138
  %4203 = vst [vmem:[#allocation2 + $0x58] sm:$0xff] %v4139
  %4204 = vst [vmem:[#allocation2 + $0x60] sm:$0xff] %v4140
  %4205 = vst [vmem:[#allocation2 + $0x68] sm:$0xff] %v4141
  %4206 = vst [vmem:[#allocation2 + $0x70] sm:$0xff] %v4142
  %4207 = vst [vmem:[#allocation2 + $0x78] sm:$0xff] %v4143
  %4208 = vst [vmem:[#allocation2 + $0x80] sm:$0xff] %v4144
  %4209 = vst [vmem:[#allocation2 + $0x88] sm:$0xff] %v4145
  %4210 = vst [vmem:[#allocation2 + $0x90] sm:$0xff] %v4146
  %4211 = vst [vmem:[#allocation2 + $0x98] sm:$0xff] %v4147
  %4212 = vst [vmem:[#allocation2 + $0xa0] sm:$0xff] %v4148
  %4213 = vst [vmem:[#allocation2 + $0xa8] sm:$0xff] %v4149
  %4214 = vst [vmem:[#allocation2 + $0xb0] sm:$0xff] %v4150
  %4215 = vst [vmem:[#allocation2 + $0xb8] sm:$0xff] %v4151
  %4216 = vst [vmem:[#allocation2 + $0xc0] sm:$0xff] %v4152
  %4217 = vst [vmem:[#allocation2 + $0xc8] sm:$0xff] %v4153
  %4218 = vst [vmem:[#allocation2 + $0xd0] sm:$0xff] %v4154
  %4219 = vst [vmem:[#allocation2 + $0xd8] sm:$0xff] %v4155
  %4220 = vst [vmem:[#allocation2 + $0xe0] sm:$0xff] %v4156
  %4221 = vst [vmem:[#allocation2 + $0xe8] sm:$0xff] %v4157
  %4222 = vst [vmem:[#allocation2 + $0xf0] sm:$0xff] %v4158
  %4223 = vst [vmem:[#allocation2 + $0xf8] sm:$0xff] %v4159
  %v4224 = vld [vmem:[%s619] sm:$0xff]
  %v4225 = vld [vmem:[%s619 + $0x8] sm:$0xff]
  %v4226 = vld [vmem:[%s619 + $0x10] sm:$0xff]
  %v4227 = vld [vmem:[%s619 + $0x18] sm:$0xff]
  %v4228 = vld [vmem:[%s6] sm:$0xff]
  %v4229 = vld [vmem:[%s6 + $0x8] sm:$0xff]
  %v4230 = vld [vmem:[%s6 + $0x10] sm:$0xff]
  %v4231 = vld [vmem:[%s6 + $0x18] sm:$0xff]
  %v4232 = vld [vmem:[%s6 + $0x20] sm:$0xff]
  %v4233 = vld [vmem:[%s6 + $0x28] sm:$0xff]
  %v4234 = vld [vmem:[%s6 + $0x30] sm:$0xff]
  %v4235 = vld [vmem:[%s6 + $0x38] sm:$0xff]
  %v4236 = vld [vmem:[%s6 + $0x40] sm:$0xff]
  %v4237 = vld [vmem:[%s6 + $0x48] sm:$0xff]
  %v4238 = vld [vmem:[%s6 + $0x50] sm:$0xff]
  %v4239 = vld [vmem:[%s6 + $0x58] sm:$0xff]
  %v4240 = vld [vmem:[%s6 + $0x60] sm:$0xff]
  %v4241 = vld [vmem:[%s6 + $0x68] sm:$0xff]
  %v4242 = vld [vmem:[%s6 + $0x70] sm:$0xff]
  %v4243 = vld [vmem:[%s6 + $0x78] sm:$0xff]
  %v4244 = vld [vmem:[%s6 + $0x80] sm:$0xff]
  %v4245 = vld [vmem:[%s6 + $0x88] sm:$0xff]
  %v4246 = vld [vmem:[%s6 + $0x90] sm:$0xff]
  %v4247 = vld [vmem:[%s6 + $0x98] sm:$0xff]
  %v4248 = vld [vmem:[%s6 + $0xa0] sm:$0xff]
  %v4249 = vld [vmem:[%s6 + $0xa8] sm:$0xff]
  %v4250 = vld [vmem:[%s6 + $0xb0] sm:$0xff]
  %v4251 = vld [vmem:[%s6 + $0xb8] sm:$0xff]
  %v4252 = vld [vmem:[%s6 + $0xc0] sm:$0xff]
  %v4253 = vld [vmem:[%s6 + $0xc8] sm:$0xff]
  %v4254 = vld [vmem:[%s6 + $0xd0] sm:$0xff]
  %v4255 = vld [vmem:[%s6 + $0xd8] sm:$0xff]
  %v4256 = vld [vmem:[%s6 + $0xe0] sm:$0xff]
  %v4257 = vld [vmem:[%s6 + $0xe8] sm:$0xff]
  %v4258 = vld [vmem:[%s6 + $0xf0] sm:$0xff]
  %v4259 = vld [vmem:[%s6 + $0xf8] sm:$0xff]
  %v4292 = vunpack.c.l.b16 %v4228
  %v4293 = vunpack.c.h.b16 %v4228
  %v4294 = vunpack.c.l.b16 %v4229
  %v4295 = vunpack.c.h.b16 %v4229
  %v4296 = vunpack.c.l.b16 %v4230
  %v4297 = vunpack.c.h.b16 %v4230
  %v4298 = vunpack.c.l.b16 %v4231
  %v4299 = vunpack.c.h.b16 %v4231
  %v4300 = vunpack.c.l.b16 %v4232
  %v4301 = vunpack.c.h.b16 %v4232
  %v4302 = vunpack.c.l.b16 %v4233
  %v4303 = vunpack.c.h.b16 %v4233
  %v4304 = vunpack.c.l.b16 %v4234
  %v4305 = vunpack.c.h.b16 %v4234
  %v4306 = vunpack.c.l.b16 %v4235
  %v4307 = vunpack.c.h.b16 %v4235
  %v4308 = vunpack.c.l.b16 %v4236
  %v4309 = vunpack.c.h.b16 %v4236
  %v4310 = vunpack.c.l.b16 %v4237
  %v4311 = vunpack.c.h.b16 %v4237
  %v4312 = vunpack.c.l.b16 %v4238
  %v4313 = vunpack.c.h.b16 %v4238
  %v4314 = vunpack.c.l.b16 %v4239
  %v4315 = vunpack.c.h.b16 %v4239
  %v4316 = vunpack.c.l.b16 %v4240
  %v4317 = vunpack.c.h.b16 %v4240
  %v4318 = vunpack.c.l.b16 %v4241
  %v4319 = vunpack.c.h.b16 %v4241
  %v4320 = vunpack.c.l.b16 %v4242
  %v4321 = vunpack.c.h.b16 %v4242
  %v4322 = vunpack.c.l.b16 %v4243
  %v4323 = vunpack.c.h.b16 %v4243
  %v4324 = vunpack.c.l.b16 %v4244
  %v4325 = vunpack.c.h.b16 %v4244
  %v4326 = vunpack.c.l.b16 %v4245
  %v4327 = vunpack.c.h.b16 %v4245
  %v4328 = vunpack.c.l.b16 %v4246
  %v4329 = vunpack.c.h.b16 %v4246
  %v4330 = vunpack.c.l.b16 %v4247
  %v4331 = vunpack.c.h.b16 %v4247
  %v4332 = vunpack.c.l.b16 %v4248
  %v4333 = vunpack.c.h.b16 %v4248
  %v4334 = vunpack.c.l.b16 %v4249
  %v4335 = vunpack.c.h.b16 %v4249
  %v4336 = vunpack.c.l.b16 %v4250
  %v4337 = vunpack.c.h.b16 %v4250
  %v4338 = vunpack.c.l.b16 %v4251
  %v4339 = vunpack.c.h.b16 %v4251
  %v4340 = vunpack.c.l.b16 %v4252
  %v4341 = vunpack.c.h.b16 %v4252
  %v4342 = vunpack.c.l.b16 %v4253
  %v4343 = vunpack.c.h.b16 %v4253
  %v4344 = vunpack.c.l.b16 %v4254
  %v4345 = vunpack.c.h.b16 %v4254
  %v4346 = vunpack.c.l.b16 %v4255
  %v4347 = vunpack.c.h.b16 %v4255
  %v4348 = vunpack.c.l.b16 %v4256
  %v4349 = vunpack.c.h.b16 %v4256
  %v4350 = vunpack.c.l.b16 %v4257
  %v4351 = vunpack.c.h.b16 %v4257
  %v4352 = vunpack.c.l.b16 %v4258
  %v4353 = vunpack.c.h.b16 %v4258
  %v4354 = vunpack.c.l.b16 %v4259
  %v4355 = vunpack.c.h.b16 %v4259
  %v4356 = vpack.c.b16 %v4296, %v4292
  %v4357 = vpack.c.b16 %v4297, %v4293
  %v4358 = vpack.c.b16 %v4298, %v4294
  %v4359 = vpack.c.b16 %v4299, %v4295
  %v4360 = vpack.c.b16 %v4304, %v4300
  %v4361 = vpack.c.b16 %v4305, %v4301
  %v4362 = vpack.c.b16 %v4306, %v4302
  %v4363 = vpack.c.b16 %v4307, %v4303
  %v4364 = vpack.c.b16 %v4312, %v4308
  %v4365 = vpack.c.b16 %v4313, %v4309
  %v4366 = vpack.c.b16 %v4314, %v4310
  %v4367 = vpack.c.b16 %v4315, %v4311
  %v4368 = vpack.c.b16 %v4320, %v4316
  %v4369 = vpack.c.b16 %v4321, %v4317
  %v4370 = vpack.c.b16 %v4322, %v4318
  %v4371 = vpack.c.b16 %v4323, %v4319
  %v4372 = vpack.c.b16 %v4328, %v4324
  %v4373 = vpack.c.b16 %v4329, %v4325
  %v4374 = vpack.c.b16 %v4330, %v4326
  %v4375 = vpack.c.b16 %v4331, %v4327
  %v4376 = vpack.c.b16 %v4336, %v4332
  %v4377 = vpack.c.b16 %v4337, %v4333
  %v4378 = vpack.c.b16 %v4338, %v4334
  %v4379 = vpack.c.b16 %v4339, %v4335
  %v4380 = vpack.c.b16 %v4344, %v4340
  %v4381 = vpack.c.b16 %v4345, %v4341
  %v4382 = vpack.c.b16 %v4346, %v4342
  %v4383 = vpack.c.b16 %v4347, %v4343
  %v4384 = vpack.c.b16 %v4352, %v4348
  %v4385 = vpack.c.b16 %v4353, %v4349
  %v4386 = vpack.c.b16 %v4354, %v4350
  %v4387 = vpack.c.b16 %v4355, %v4351
  %4420 = vmatprep.subr.bf16.mxu0 %v4385
  %4421 = vmatpush1.bf16.msra.mxu0 %v4384
  %4422 = vmatprep.subr.bf16.mxu0 %v4381
  %4423 = vmatpush1.bf16.msra.mxu0 %v4380
  %4424 = vmatprep.subr.bf16.mxu0 %v4377
  %4425 = vmatpush1.bf16.msra.mxu0 %v4376
  %4426 = vmatprep.subr.bf16.mxu0 %v4373
  %4427 = vmatpush1.bf16.msra.mxu0 %v4372
  %4428 = vmatprep.subr.bf16.mxu0 %v4369
  %4429 = vmatpush1.bf16.msra.mxu0 %v4368
  %4430 = vmatprep.subr.bf16.mxu0 %v4365
  %4431 = vmatpush1.bf16.msra.mxu0 %v4364
  %4432 = vmatprep.subr.bf16.mxu0 %v4361
  %4433 = vmatpush1.bf16.msra.mxu0 %v4360
  %4434 = vmatprep.subr.bf16.mxu0 %v4357
  %4435 = vmatpush1.bf16.msra.mxu0 %v4356
  %4436 = vmatprep.subr.bf16.mxu0 0
  %4437 = vmatpush2.bf16.msra.mxu0 0
  %4438 = vmatprep.subr.bf16.mxu0 0
  %4439 = vmatpush2.bf16.msra.mxu0 0
  %4440 = vmatprep.subr.bf16.mxu0 0
  %4441 = vmatpush2.bf16.msra.mxu0 0
  %4442 = vmatprep.subr.bf16.mxu0 0
  %4443 = vmatpush2.bf16.msra.mxu0 0
  %4444 = vmatprep.subr.bf16.mxu0 0
  %4445 = vmatpush2.bf16.msra.mxu0 0
  %4446 = vmatprep.subr.bf16.mxu0 0
  %4447 = vmatpush2.bf16.msra.mxu0 0
  %4448 = vmatprep.subr.bf16.mxu0 0
  %4449 = vmatpush2.bf16.msra.mxu0 0
  %4450 = vmatprep.subr.bf16.mxu0 0
  %4451 = vmatpush2.bf16.msra.mxu0 0
  %4452 = vmatprep.mubr.bf16.mxu0 0
  %4453 = vmatmul.mubr.bf16.gmra.mxu0 0
  %v4454 = vpop.f32.mrf.mxu0
  %v4455 = vadd.f32 0.0, %v4454
  %v4456 = vpop.f32.mrf.mxu0
  %v4457 = vadd.f32 0.0, %v4456
  %v4458 = vpop.f32.mrf.mxu0
  %v4459 = vadd.f32 0.0, %v4458
  %v4460 = vpop.f32.mrf.mxu0
  %v4461 = vadd.f32 0.0, %v4460
  %4462 = vdwg.mxu0
  %4463 = vmatprep.subr.bf16.mxu0 %v4387
  %4464 = vmatpush1.bf16.msra.mxu0 %v4386
  %4465 = vmatprep.subr.bf16.mxu0 %v4383
  %4466 = vmatpush1.bf16.msra.mxu0 %v4382
  %4467 = vmatprep.subr.bf16.mxu0 %v4379
  %4468 = vmatpush1.bf16.msra.mxu0 %v4378
  %4469 = vmatprep.subr.bf16.mxu0 %v4375
  %4470 = vmatpush1.bf16.msra.mxu0 %v4374
  %4471 = vmatprep.subr.bf16.mxu0 %v4371
  %4472 = vmatpush1.bf16.msra.mxu0 %v4370
  %4473 = vmatprep.subr.bf16.mxu0 %v4367
  %4474 = vmatpush1.bf16.msra.mxu0 %v4366
  %4475 = vmatprep.subr.bf16.mxu0 %v4363
  %4476 = vmatpush1.bf16.msra.mxu0 %v4362
  %4477 = vmatprep.subr.bf16.mxu0 %v4359
  %4478 = vmatpush1.bf16.msra.mxu0 %v4358
  %4479 = vmatprep.subr.bf16.mxu0 0
  %4480 = vmatpush2.bf16.msra.mxu0 0
  %4481 = vmatprep.subr.bf16.mxu0 0
  %4482 = vmatpush2.bf16.msra.mxu0 0
  %4483 = vmatprep.subr.bf16.mxu0 0
  %4484 = vmatpush2.bf16.msra.mxu0 0
  %4485 = vmatprep.subr.bf16.mxu0 0
  %4486 = vmatpush2.bf16.msra.mxu0 0
  %4487 = vmatprep.subr.bf16.mxu0 0
  %4488 = vmatpush2.bf16.msra.mxu0 0
  %4489 = vmatprep.subr.bf16.mxu0 0
  %4490 = vmatpush2.bf16.msra.mxu0 0
  %4491 = vmatprep.subr.bf16.mxu0 0
  %4492 = vmatpush2.bf16.msra.mxu0 0
  %4493 = vmatprep.subr.bf16.mxu0 0
  %4494 = vmatpush2.bf16.msra.mxu0 0
  %4495 = vmatprep.mubr.bf16.mxu0 0
  %4496 = vmatmul.mubr.bf16.gmra.mxu0 0
  %v4497 = vpop.f32.mrf.mxu0
  %v4498 = vadd.f32 0.0, %v4497
  %v4499 = vpop.f32.mrf.mxu0
  %v4500 = vadd.f32 0.0, %v4499
  %v4501 = vpop.f32.mrf.mxu0
  %v4502 = vadd.f32 0.0, %v4501
  %v4503 = vpop.f32.mrf.mxu0
  %v4504 = vadd.f32 0.0, %v4503
  %4505 = vdwg.mxu0
  %v4506 = vunpack.c.l.bf16 %v4224
  %v4507 = vunpack.c.h.bf16 %v4224
  %v4508 = vunpack.c.l.bf16 %v4225
  %v4509 = vunpack.c.h.bf16 %v4225
  %v4510 = vunpack.c.l.bf16 %v4226
  %v4511 = vunpack.c.h.bf16 %v4226
  %v4512 = vunpack.c.l.bf16 %v4227
  %v4513 = vunpack.c.h.bf16 %v4227
  %v4514 = vadd.f32 %v4506, %v4455
  %v4515 = vadd.f32 %v4507, %v4457
  %v4516 = vadd.f32 %v4508, %v4498
  %v4517 = vadd.f32 %v4509, %v4500
  %v4518 = vadd.f32 %v4510, %v4459
  %v4519 = vadd.f32 %v4511, %v4461
  %v4520 = vadd.f32 %v4512, %v4502
  %v4521 = vadd.f32 %v4513, %v4504
  %v4522 = vxor.u32 %v4514, 2147483648
  %v4523 = vxor.u32 %v4515, 2147483648
  %v4524 = vxor.u32 %v4516, 2147483648
  %v4525 = vxor.u32 %v4518, 2147483648
  %v4526 = vxor.u32 %v4519, 2147483648
  %v4527 = vxor.u32 %v4520, 2147483648
  %v4528 = vmul.f32 %v4522, 1.442695
  %v4529 = vpow.pop %v4528
  %v4530 = vmul.f32 %v4523, 1.442695
  %v4531 = vpow.pop %v4530
  %v4532 = vmul.f32 %v4524, 1.442695
  %v4533 = vpow.pop %v4532
  %v4534 = vmul.f32 %v4525, 1.442695
  %v4535 = vpow.pop %v4534
  %v4536 = vmul.f32 %v4526, 1.442695
  %v4537 = vpow.pop %v4536
  %v4538 = vmul.f32 %v4527, 1.442695
  %v4539 = vpow.pop %v4538
  %v4540 = vadd.f32 %v4529, 1.0
  %v4541 = vadd.f32 %v4531, 1.0
  %v4542 = vadd.f32 %v4533, 1.0
  %v4543 = vadd.f32 %v4535, 1.0
  %v4544 = vadd.f32 %v4537, 1.0
  %v4545 = vadd.f32 %v4539, 1.0
  %v4546 = vrcp.pop %v4540
  %v4547 = vmul.f32 1.0, %v4546
  %v4548 = vrcp.pop %v4541
  %v4549 = vmul.f32 1.0, %v4548
  %v4550 = vrcp.pop %v4542
  %v4551 = vmul.f32 1.0, %v4550
  %v4552 = vrcp.pop %v4543
  %v4553 = vmul.f32 1.0, %v4552
  %v4554 = vrcp.pop %v4544
  %v4555 = vmul.f32 1.0, %v4554
  %v4556 = vrcp.pop %v4545
  %v4557 = vmul.f32 1.0, %v4556
  %v4558 = vtanh.pop %v4517
  %v4559 = vtanh.pop %v4521
  %v4560 = vmul.f32 %v4549, 0.0
  %v4561 = vmul.f32 %v4555, 0.0
  %v4562 = vmul.f32 %v4547, %v4558
  %v4563 = vmul.f32 %v4553, %v4559
  %v4564 = vadd.f32 %v4560, %v4562
  %v4565 = vadd.f32 %v4561, %v4563
  %v4566 = vtanh.pop %v4564
  %v4567 = vtanh.pop %v4565
  %v4568 = vmul.f32 %v4551, %v4566
  %v4569 = vmul.f32 %v4557, %v4567
  %v4570 = vpack.c.bf16 %v4569, %v4568
  %v4571 = vld [vmem:[%s978] sm:$0xff]
  %v4572 = vld [vmem:[%s978 + $0x8] sm:$0xff]
  %v4573 = vld [vmem:[%s978 + $0x10] sm:$0xff]
  %v4574 = vld [vmem:[%s978 + $0x18] sm:$0xff]
  %4575 = vmatprep.subr.bf16.mxu0 %v4385
  %4576 = vmatpush1.bf16.msra.mxu0 %v4384
  %4577 = vmatprep.subr.bf16.mxu0 %v4381
  %4578 = vmatpush1.bf16.msra.mxu0 %v4380
  %4579 = vmatprep.subr.bf16.mxu0 %v4377
  %4580 = vmatpush1.bf16.msra.mxu0 %v4376
  %4581 = vmatprep.subr.bf16.mxu0 %v4373
  %4582 = vmatpush1.bf16.msra.mxu0 %v4372
  %4583 = vmatprep.subr.bf16.mxu0 %v4369
  %4584 = vmatpush1.bf16.msra.mxu0 %v4368
  %4585 = vmatprep.subr.bf16.mxu0 %v4365
  %4586 = vmatpush1.bf16.msra.mxu0 %v4364
  %4587 = vmatprep.subr.bf16.mxu0 %v4361
  %4588 = vmatpush1.bf16.msra.mxu0 %v4360
  %4589 = vmatprep.subr.bf16.mxu0 %v4357
  %4590 = vmatpush1.bf16.msra.mxu0 %v4356
  %4591 = vmatprep.subr.bf16.mxu0 0
  %4592 = vmatpush2.bf16.msra.mxu0 0
  %4593 = vmatprep.subr.bf16.mxu0 0
  %4594 = vmatpush2.bf16.msra.mxu0 0
  %4595 = vmatprep.subr.bf16.mxu0 0
  %4596 = vmatpush2.bf16.msra.mxu0 0
  %4597 = vmatprep.subr.bf16.mxu0 0
  %4598 = vmatpush2.bf16.msra.mxu0 0
  %4599 = vmatprep.subr.bf16.mxu0 0
  %4600 = vmatpush2.bf16.msra.mxu0 0
  %4601 = vmatprep.subr.bf16.mxu0 0
  %4602 = vmatpush2.bf16.msra.mxu0 0
  %4603 = vmatprep.subr.bf16.mxu0 0
  %4604 = vmatpush2.bf16.msra.mxu0 0
  %4605 = vmatprep.subr.bf16.mxu0 0
  %4606 = vmatpush2.bf16.msra.mxu0 0
  %4607 = vmatprep.mubr.bf16.mxu0 0
  %4608 = vmatmul.mubr.bf16.gmra.mxu0 %v4570
  %v4609 = vpop.f32.mrf.mxu0
  %v4610 = vadd.f32 0.0, %v4609
  %v4611 = vpop.f32.mrf.mxu0
  %v4612 = vadd.f32 0.0, %v4611
  %v4613 = vpop.f32.mrf.mxu0
  %v4614 = vadd.f32 0.0, %v4613
  %v4615 = vpop.f32.mrf.mxu0
  %v4616 = vadd.f32 0.0, %v4615
  %4617 = vdwg.mxu0
  %4618 = vmatprep.subr.bf16.mxu0 %v4387
  %4619 = vmatpush1.bf16.msra.mxu0 %v4386
  %4620 = vmatprep.subr.bf16.mxu0 %v4383
  %4621 = vmatpush1.bf16.msra.mxu0 %v4382
  %4622 = vmatprep.subr.bf16.mxu0 %v4379
  %4623 = vmatpush1.bf16.msra.mxu0 %v4378
  %4624 = vmatprep.subr.bf16.mxu0 %v4375
  %4625 = vmatpush1.bf16.msra.mxu0 %v4374
  %4626 = vmatprep.subr.bf16.mxu0 %v4371
  %4627 = vmatpush1.bf16.msra.mxu0 %v4370
  %4628 = vmatprep.subr.bf16.mxu0 %v4367
  %4629 = vmatpush1.bf16.msra.mxu0 %v4366
  %4630 = vmatprep.subr.bf16.mxu0 %v4363
  %4631 = vmatpush1.bf16.msra.mxu0 %v4362
  %4632 = vmatprep.subr.bf16.mxu0 %v4359
  %4633 = vmatpush1.bf16.msra.mxu0 %v4358
  %4634 = vmatprep.subr.bf16.mxu0 0
  %4635 = vmatpush2.bf16.msra.mxu0 0
  %4636 = vmatprep.subr.bf16.mxu0 0
  %4637 = vmatpush2.bf16.msra.mxu0 0
  %4638 = vmatprep.subr.bf16.mxu0 0
  %4639 = vmatpush2.bf16.msra.mxu0 0
  %4640 = vmatprep.subr.bf16.mxu0 0
  %4641 = vmatpush2.bf16.msra.mxu0 0
  %4642 = vmatprep.subr.bf16.mxu0 0
  %4643 = vmatpush2.bf16.msra.mxu0 0
  %4644 = vmatprep.subr.bf16.mxu0 0
  %4645 = vmatpush2.bf16.msra.mxu0 0
  %4646 = vmatprep.subr.bf16.mxu0 0
  %4647 = vmatpush2.bf16.msra.mxu0 0
  %4648 = vmatprep.subr.bf16.mxu0 0
  %4649 = vmatpush2.bf16.msra.mxu0 0
  %4650 = vmatprep.mubr.bf16.mxu0 0
  %4651 = vmatmul.mubr.bf16.gmra.mxu0 %v4570
  %v4652 = vpop.f32.mrf.mxu0
  %v4653 = vadd.f32 0.0, %v4652
  %v4654 = vpop.f32.mrf.mxu0
  %v4655 = vadd.f32 0.0, %v4654
  %v4656 = vpop.f32.mrf.mxu0
  %v4657 = vadd.f32 0.0, %v4656
  %v4658 = vpop.f32.mrf.mxu0
  %v4659 = vadd.f32 0.0, %v4658
  %4660 = vdwg.mxu0
  %v4661 = vunpack.c.l.bf16 %v4571
  %v4662 = vunpack.c.h.bf16 %v4571
  %v4663 = vunpack.c.l.bf16 %v4572
  %v4664 = vunpack.c.h.bf16 %v4572
  %v4665 = vunpack.c.l.bf16 %v4573
  %v4666 = vunpack.c.h.bf16 %v4573
  %v4667 = vunpack.c.l.bf16 %v4574
  %v4668 = vunpack.c.h.bf16 %v4574
  %v4669 = vadd.f32 %v4661, %v4610
  %v4670 = vadd.f32 %v4662, %v4612
  %v4671 = vadd.f32 %v4663, %v4653
  %v4672 = vadd.f32 %v4664, %v4655
  %v4673 = vadd.f32 %v4665, %v4614
  %v4674 = vadd.f32 %v4666, %v4616
  %v4675 = vadd.f32 %v4667, %v4657
  %v4676 = vadd.f32 %v4668, %v4659
  %v4677 = vxor.u32 %v4669, 2147483648
  %v4678 = vxor.u32 %v4670, 2147483648
  %v4679 = vxor.u32 %v4671, 2147483648
  %v4680 = vxor.u32 %v4673, 2147483648
  %v4681 = vxor.u32 %v4674, 2147483648
  %v4682 = vxor.u32 %v4675, 2147483648
  %v4683 = vmul.f32 %v4677, 1.442695
  %v4684 = vpow.pop %v4683
  %v4685 = vmul.f32 %v4678, 1.442695
  %v4686 = vpow.pop %v4685
  %v4687 = vmul.f32 %v4679, 1.442695
  %v4688 = vpow.pop %v4687
  %v4689 = vmul.f32 %v4680, 1.442695
  %v4690 = vpow.pop %v4689
  %v4691 = vmul.f32 %v4681, 1.442695
  %v4692 = vpow.pop %v4691
  %v4693 = vmul.f32 %v4682, 1.442695
  %v4694 = vpow.pop %v4693
  %v4695 = vadd.f32 %v4684, 1.0
  %v4696 = vadd.f32 %v4686, 1.0
  %v4697 = vadd.f32 %v4688, 1.0
  %v4698 = vadd.f32 %v4690, 1.0
  %v4699 = vadd.f32 %v4692, 1.0
  %v4700 = vadd.f32 %v4694, 1.0
  %v4701 = vrcp.pop %v4695
  %v4702 = vmul.f32 1.0, %v4701
  %v4703 = vrcp.pop %v4696
  %v4704 = vmul.f32 1.0, %v4703
  %v4705 = vrcp.pop %v4697
  %v4706 = vmul.f32 1.0, %v4705
  %v4707 = vrcp.pop %v4698
  %v4708 = vmul.f32 1.0, %v4707
  %v4709 = vrcp.pop %v4699
  %v4710 = vmul.f32 1.0, %v4709
  %v4711 = vrcp.pop %v4700
  %v4712 = vmul.f32 1.0, %v4711
  %v4713 = vtanh.pop %v4672
  %v4714 = vtanh.pop %v4676
  %v4715 = vmul.f32 %v4704, %v4564
  %v4716 = vmul.f32 %v4710, %v4565
  %v4717 = vmul.f32 %v4702, %v4713
  %v4718 = vmul.f32 %v4708, %v4714
  %v4719 = vadd.f32 %v4715, %v4717
  %v4720 = vadd.f32 %v4716, %v4718
  %v4721 = vtanh.pop %v4719
  %v4722 = vtanh.pop %v4720
  %v4723 = vmul.f32 %v4706, %v4721
  %v4724 = vmul.f32 %v4712, %v4722
  %v4725 = vpack.c.bf16 %v4724, %v4723
  %v4726 = vld [vmem:[%s1338] sm:$0xff]
  %v4727 = vld [vmem:[%s1338 + $0x8] sm:$0xff]
  %v4728 = vld [vmem:[%s1338 + $0x10] sm:$0xff]
  %v4729 = vld [vmem:[%s1338 + $0x18] sm:$0xff]
  %4730 = vmatprep.subr.bf16.mxu0 %v4385
  %4731 = vmatpush1.bf16.msra.mxu0 %v4384
  %4732 = vmatprep.subr.bf16.mxu0 %v4381
  %4733 = vmatpush1.bf16.msra.mxu0 %v4380
  %4734 = vmatprep.subr.bf16.mxu0 %v4377
  %4735 = vmatpush1.bf16.msra.mxu0 %v4376
  %4736 = vmatprep.subr.bf16.mxu0 %v4373
  %4737 = vmatpush1.bf16.msra.mxu0 %v4372
  %4738 = vmatprep.subr.bf16.mxu0 %v4369
  %4739 = vmatpush1.bf16.msra.mxu0 %v4368
  %4740 = vmatprep.subr.bf16.mxu0 %v4365
  %4741 = vmatpush1.bf16.msra.mxu0 %v4364
  %4742 = vmatprep.subr.bf16.mxu0 %v4361
  %4743 = vmatpush1.bf16.msra.mxu0 %v4360
  %4744 = vmatprep.subr.bf16.mxu0 %v4357
  %4745 = vmatpush1.bf16.msra.mxu0 %v4356
  %4746 = vmatprep.subr.bf16.mxu0 0
  %4747 = vmatpush2.bf16.msra.mxu0 0
  %4748 = vmatprep.subr.bf16.mxu0 0
  %4749 = vmatpush2.bf16.msra.mxu0 0
  %4750 = vmatprep.subr.bf16.mxu0 0
  %4751 = vmatpush2.bf16.msra.mxu0 0
  %4752 = vmatprep.subr.bf16.mxu0 0
  %4753 = vmatpush2.bf16.msra.mxu0 0
  %4754 = vmatprep.subr.bf16.mxu0 0
  %4755 = vmatpush2.bf16.msra.mxu0 0
  %4756 = vmatprep.subr.bf16.mxu0 0
  %4757 = vmatpush2.bf16.msra.mxu0 0
  %4758 = vmatprep.subr.bf16.mxu0 0
  %4759 = vmatpush2.bf16.msra.mxu0 0
  %4760 = vmatprep.subr.bf16.mxu0 0
  %4761 = vmatpush2.bf16.msra.mxu0 0
  %4762 = vmatprep.mubr.bf16.mxu0 0
  %4763 = vmatmul.mubr.bf16.gmra.mxu0 %v4725
  %v4764 = vpop.f32.mrf.mxu0
  %v4765 = vadd.f32 0.0, %v4764
  %v4766 = vpop.f32.mrf.mxu0
  %v4767 = vadd.f32 0.0, %v4766
  %v4768 = vpop.f32.mrf.mxu0
  %v4769 = vadd.f32 0.0, %v4768
  %v4770 = vpop.f32.mrf.mxu0
  %v4771 = vadd.f32 0.0, %v4770
  %4772 = vdwg.mxu0
  %4773 = vmatprep.subr.bf16.mxu0 %v4387
  %4774 = vmatpush1.bf16.msra.mxu0 %v4386
  %4775 = vmatprep.subr.bf16.mxu0 %v4383
  %4776 = vmatpush1.bf16.msra.mxu0 %v4382
  %4777 = vmatprep.subr.bf16.mxu0 %v4379
  %4778 = vmatpush1.bf16.msra.mxu0 %v4378
  %4779 = vmatprep.subr.bf16.mxu0 %v4375
  %4780 = vmatpush1.bf16.msra.mxu0 %v4374
  %4781 = vmatprep.subr.bf16.mxu0 %v4371
  %4782 = vmatpush1.bf16.msra.mxu0 %v4370
  %4783 = vmatprep.subr.bf16.mxu0 %v4367
  %4784 = vmatpush1.bf16.msra.mxu0 %v4366
  %4785 = vmatprep.subr.bf16.mxu0 %v4363
  %4786 = vmatpush1.bf16.msra.mxu0 %v4362
  %4787 = vmatprep.subr.bf16.mxu0 %v4359
  %4788 = vmatpush1.bf16.msra.mxu0 %v4358
  %4789 = vmatprep.subr.bf16.mxu0 0
  %4790 = vmatpush2.bf16.msra.mxu0 0
  %4791 = vmatprep.subr.bf16.mxu0 0
  %4792 = vmatpush2.bf16.msra.mxu0 0
  %4793 = vmatprep.subr.bf16.mxu0 0
  %4794 = vmatpush2.bf16.msra.mxu0 0
  %4795 = vmatprep.subr.bf16.mxu0 0
  %4796 = vmatpush2.bf16.msra.mxu0 0
  %4797 = vmatprep.subr.bf16.mxu0 0
  %4798 = vmatpush2.bf16.msra.mxu0 0
  %4799 = vmatprep.subr.bf16.mxu0 0
  %4800 = vmatpush2.bf16.msra.mxu0 0
  %4801 = vmatprep.subr.bf16.mxu0 0
  %4802 = vmatpush2.bf16.msra.mxu0 0
  %4803 = vmatprep.subr.bf16.mxu0 0
  %4804 = vmatpush2.bf16.msra.mxu0 0
  %4805 = vmatprep.mubr.bf16.mxu0 0
  %4806 = vmatmul.mubr.bf16.gmra.mxu0 %v4725
  %v4807 = vpop.f32.mrf.mxu0
  %v4808 = vadd.f32 0.0, %v4807
  %v4809 = vpop.f32.mrf.mxu0
  %v4810 = vadd.f32 0.0, %v4809
  %v4811 = vpop.f32.mrf.mxu0
  %v4812 = vadd.f32 0.0, %v4811
  %v4813 = vpop.f32.mrf.mxu0
  %v4814 = vadd.f32 0.0, %v4813
  %4815 = vdwg.mxu0
  %v4816 = vunpack.c.l.bf16 %v4726
  %v4817 = vunpack.c.h.bf16 %v4726
  %v4818 = vunpack.c.l.bf16 %v4727
  %v4819 = vunpack.c.h.bf16 %v4727
  %v4820 = vunpack.c.l.bf16 %v4728
  %v4821 = vunpack.c.h.bf16 %v4728
  %v4822 = vunpack.c.l.bf16 %v4729
  %v4823 = vunpack.c.h.bf16 %v4729
  %v4824 = vadd.f32 %v4816, %v4765
  %v4825 = vadd.f32 %v4817, %v4767
  %v4826 = vadd.f32 %v4818, %v4808
  %v4827 = vadd.f32 %v4819, %v4810
  %v4828 = vadd.f32 %v4820, %v4769
  %v4829 = vadd.f32 %v4821, %v4771
  %v4830 = vadd.f32 %v4822, %v4812
  %v4831 = vadd.f32 %v4823, %v4814
  %v4832 = vxor.u32 %v4824, 2147483648
  %v4833 = vxor.u32 %v4825, 2147483648
  %v4834 = vxor.u32 %v4826, 2147483648
  %v4835 = vxor.u32 %v4828, 2147483648
  %v4836 = vxor.u32 %v4829, 2147483648
  %v4837 = vxor.u32 %v4830, 2147483648
  %v4838 = vmul.f32 %v4832, 1.442695
  %v4839 = vpow.pop %v4838
  %v4840 = vmul.f32 %v4833, 1.442695
  %v4841 = vpow.pop %v4840
  %v4842 = vmul.f32 %v4834, 1.442695
  %v4843 = vpow.pop %v4842
  %v4844 = vmul.f32 %v4835, 1.442695
  %v4845 = vpow.pop %v4844
  %v4846 = vmul.f32 %v4836, 1.442695
  %v4847 = vpow.pop %v4846
  %v4848 = vmul.f32 %v4837, 1.442695
  %v4849 = vpow.pop %v4848
  %v4850 = vadd.f32 %v4839, 1.0
  %v4851 = vadd.f32 %v4841, 1.0
  %v4852 = vadd.f32 %v4843, 1.0
  %v4853 = vadd.f32 %v4845, 1.0
  %v4854 = vadd.f32 %v4847, 1.0
  %v4855 = vadd.f32 %v4849, 1.0
  %v4856 = vrcp.pop %v4850
  %v4857 = vmul.f32 1.0, %v4856
  %v4858 = vrcp.pop %v4851
  %v4859 = vmul.f32 1.0, %v4858
  %v4860 = vrcp.pop %v4852
  %v4861 = vmul.f32 1.0, %v4860
  %v4862 = vrcp.pop %v4853
  %v4863 = vmul.f32 1.0, %v4862
  %v4864 = vrcp.pop %v4854
  %v4865 = vmul.f32 1.0, %v4864
  %v4866 = vrcp.pop %v4855
  %v4867 = vmul.f32 1.0, %v4866
  %v4868 = vtanh.pop %v4827
  %v4869 = vtanh.pop %v4831
  %v4870 = vmul.f32 %v4859, %v4719
  %v4871 = vmul.f32 %v4865, %v4720
  %v4872 = vmul.f32 %v4857, %v4868
  %v4873 = vmul.f32 %v4863, %v4869
  %v4874 = vadd.f32 %v4870, %v4872
  %v4875 = vadd.f32 %v4871, %v4873
  %v4876 = vtanh.pop %v4874
  %v4877 = vtanh.pop %v4875
  %v4878 = vmul.f32 %v4861, %v4876
  %v4879 = vmul.f32 %v4867, %v4877
  %v4880 = vpack.c.bf16 %v4879, %v4878
  %v4881 = vld [vmem:[%s1698] sm:$0xff]
  %v4882 = vld [vmem:[%s1698 + $0x8] sm:$0xff]
  %v4883 = vld [vmem:[%s1698 + $0x10] sm:$0xff]
  %v4884 = vld [vmem:[%s1698 + $0x18] sm:$0xff]
  %4885 = vmatprep.subr.bf16.mxu0 %v4385
  %4886 = vmatpush1.bf16.msra.mxu0 %v4384
  %4887 = vmatprep.subr.bf16.mxu0 %v4381
  %4888 = vmatpush1.bf16.msra.mxu0 %v4380
  %4889 = vmatprep.subr.bf16.mxu0 %v4377
  %4890 = vmatpush1.bf16.msra.mxu0 %v4376
  %4891 = vmatprep.subr.bf16.mxu0 %v4373
  %4892 = vmatpush1.bf16.msra.mxu0 %v4372
  %4893 = vmatprep.subr.bf16.mxu0 %v4369
  %4894 = vmatpush1.bf16.msra.mxu0 %v4368
  %4895 = vmatprep.subr.bf16.mxu0 %v4365
  %4896 = vmatpush1.bf16.msra.mxu0 %v4364
  %4897 = vmatprep.subr.bf16.mxu0 %v4361
  %4898 = vmatpush1.bf16.msra.mxu0 %v4360
  %4899 = vmatprep.subr.bf16.mxu0 %v4357
  %4900 = vmatpush1.bf16.msra.mxu0 %v4356
  %4901 = vmatprep.subr.bf16.mxu0 0
  %4902 = vmatpush2.bf16.msra.mxu0 0
  %4903 = vmatprep.subr.bf16.mxu0 0
  %4904 = vmatpush2.bf16.msra.mxu0 0
  %4905 = vmatprep.subr.bf16.mxu0 0
  %4906 = vmatpush2.bf16.msra.mxu0 0
  %4907 = vmatprep.subr.bf16.mxu0 0
  %4908 = vmatpush2.bf16.msra.mxu0 0
  %4909 = vmatprep.subr.bf16.mxu0 0
  %4910 = vmatpush2.bf16.msra.mxu0 0
  %4911 = vmatprep.subr.bf16.mxu0 0
  %4912 = vmatpush2.bf16.msra.mxu0 0
  %4913 = vmatprep.subr.bf16.mxu0 0
  %4914 = vmatpush2.bf16.msra.mxu0 0
  %4915 = vmatprep.subr.bf16.mxu0 0
  %4916 = vmatpush2.bf16.msra.mxu0 0
  %4917 = vmatprep.mubr.bf16.mxu0 0
  %4918 = vmatmul.mubr.bf16.gmra.mxu0 %v4880
  %v4919 = vpop.f32.mrf.mxu0
  %v4920 = vadd.f32 0.0, %v4919
  %v4921 = vpop.f32.mrf.mxu0
  %v4922 = vadd.f32 0.0, %v4921
  %v4923 = vpop.f32.mrf.mxu0
  %v4924 = vadd.f32 0.0, %v4923
  %v4925 = vpop.f32.mrf.mxu0
  %v4926 = vadd.f32 0.0, %v4925
  %4927 = vdwg.mxu0
  %4928 = vmatprep.subr.bf16.mxu0 %v4387
  %4929 = vmatpush1.bf16.msra.mxu0 %v4386
  %4930 = vmatprep.subr.bf16.mxu0 %v4383
  %4931 = vmatpush1.bf16.msra.mxu0 %v4382
  %4932 = vmatprep.subr.bf16.mxu0 %v4379
  %4933 = vmatpush1.bf16.msra.mxu0 %v4378
  %4934 = vmatprep.subr.bf16.mxu0 %v4375
  %4935 = vmatpush1.bf16.msra.mxu0 %v4374
  %4936 = vmatprep.subr.bf16.mxu0 %v4371
  %4937 = vmatpush1.bf16.msra.mxu0 %v4370
  %4938 = vmatprep.subr.bf16.mxu0 %v4367
  %4939 = vmatpush1.bf16.msra.mxu0 %v4366
  %4940 = vmatprep.subr.bf16.mxu0 %v4363
  %4941 = vmatpush1.bf16.msra.mxu0 %v4362
  %4942 = vmatprep.subr.bf16.mxu0 %v4359
  %4943 = vmatpush1.bf16.msra.mxu0 %v4358
  %4944 = vmatprep.subr.bf16.mxu0 0
  %4945 = vmatpush2.bf16.msra.mxu0 0
  %4946 = vmatprep.subr.bf16.mxu0 0
  %4947 = vmatpush2.bf16.msra.mxu0 0
  %4948 = vmatprep.subr.bf16.mxu0 0
  %4949 = vmatpush2.bf16.msra.mxu0 0
  %4950 = vmatprep.subr.bf16.mxu0 0
  %4951 = vmatpush2.bf16.msra.mxu0 0
  %4952 = vmatprep.subr.bf16.mxu0 0
  %4953 = vmatpush2.bf16.msra.mxu0 0
  %4954 = vmatprep.subr.bf16.mxu0 0
  %4955 = vmatpush2.bf16.msra.mxu0 0
  %4956 = vmatprep.subr.bf16.mxu0 0
  %4957 = vmatpush2.bf16.msra.mxu0 0
  %4958 = vmatprep.subr.bf16.mxu0 0
  %4959 = vmatpush2.bf16.msra.mxu0 0
  %4960 = vmatprep.mubr.bf16.mxu0 0
  %4961 = vmatmul.mubr.bf16.gmra.mxu0 %v4880
  %v4962 = vpop.f32.mrf.mxu0
  %v4963 = vadd.f32 0.0, %v4962
  %v4964 = vpop.f32.mrf.mxu0
  %v4965 = vadd.f32 0.0, %v4964
  %v4966 = vpop.f32.mrf.mxu0
  %v4967 = vadd.f32 0.0, %v4966
  %v4968 = vpop.f32.mrf.mxu0
  %v4969 = vadd.f32 0.0, %v4968
  %4970 = vdwg.mxu0
  %v4971 = vunpack.c.l.bf16 %v4881
  %v4972 = vunpack.c.h.bf16 %v4881
  %v4973 = vunpack.c.l.bf16 %v4882
  %v4974 = vunpack.c.h.bf16 %v4882
  %v4975 = vunpack.c.l.bf16 %v4883
  %v4976 = vunpack.c.h.bf16 %v4883
  %v4977 = vunpack.c.l.bf16 %v4884
  %v4978 = vunpack.c.h.bf16 %v4884
  %v4979 = vadd.f32 %v4971, %v4920
  %v4980 = vadd.f32 %v4972, %v4922
  %v4981 = vadd.f32 %v4973, %v4963
  %v4982 = vadd.f32 %v4974, %v4965
  %v4983 = vadd.f32 %v4975, %v4924
  %v4984 = vadd.f32 %v4976, %v4926
  %v4985 = vadd.f32 %v4977, %v4967
  %v4986 = vadd.f32 %v4978, %v4969
  %v4987 = vxor.u32 %v4979, 2147483648
  %v4988 = vxor.u32 %v4980, 2147483648
  %v4989 = vxor.u32 %v4981, 2147483648
  %v4990 = vxor.u32 %v4983, 2147483648
  %v4991 = vxor.u32 %v4984, 2147483648
  %v4992 = vxor.u32 %v4985, 2147483648
  %v4993 = vmul.f32 %v4987, 1.442695
  %v4994 = vpow.pop %v4993
  %v4995 = vmul.f32 %v4988, 1.442695
  %v4996 = vpow.pop %v4995
  %v4997 = vmul.f32 %v4989, 1.442695
  %v4998 = vpow.pop %v4997
  %v4999 = vmul.f32 %v4990, 1.442695
  %v5000 = vpow.pop %v4999
  %v5001 = vmul.f32 %v4991, 1.442695
  %v5002 = vpow.pop %v5001
  %v5003 = vmul.f32 %v4992, 1.442695
  %v5004 = vpow.pop %v5003
  %v5005 = vadd.f32 %v4994, 1.0
  %v5006 = vadd.f32 %v4996, 1.0
  %v5007 = vadd.f32 %v4998, 1.0
  %v5008 = vadd.f32 %v5000, 1.0
  %v5009 = vadd.f32 %v5002, 1.0
  %v5010 = vadd.f32 %v5004, 1.0
  %v5011 = vrcp.pop %v5005
  %v5012 = vmul.f32 1.0, %v5011
  %v5013 = vrcp.pop %v5006
  %v5014 = vmul.f32 1.0, %v5013
  %v5015 = vrcp.pop %v5007
  %v5016 = vmul.f32 1.0, %v5015
  %v5017 = vrcp.pop %v5008
  %v5018 = vmul.f32 1.0, %v5017
  %v5019 = vrcp.pop %v5009
  %v5020 = vmul.f32 1.0, %v5019
  %v5021 = vrcp.pop %v5010
  %v5022 = vmul.f32 1.0, %v5021
  %v5023 = vtanh.pop %v4982
  %v5024 = vtanh.pop %v4986
  %v5025 = vmul.f32 %v5014, %v4874
  %v5026 = vmul.f32 %v5020, %v4875
  %v5027 = vmul.f32 %v5012, %v5023
  %v5028 = vmul.f32 %v5018, %v5024
  %v5029 = vadd.f32 %v5025, %v5027
  %v5030 = vadd.f32 %v5026, %v5028
  %v5031 = vtanh.pop %v5029
  %v5032 = vtanh.pop %v5030
  %v5033 = vmul.f32 %v5016, %v5031
  %v5034 = vmul.f32 %v5022, %v5032
  %v5035 = vpack.c.bf16 %v5034, %v5033
  %v5036 = vld [vmem:[%s2058] sm:$0xff]
  %v5037 = vld [vmem:[%s2058 + $0x8] sm:$0xff]
  %v5038 = vld [vmem:[%s2058 + $0x10] sm:$0xff]
  %v5039 = vld [vmem:[%s2058 + $0x18] sm:$0xff]
  %5040 = vmatprep.subr.bf16.mxu0 %v4385
  %5041 = vmatpush1.bf16.msra.mxu0 %v4384
  %5042 = vmatprep.subr.bf16.mxu0 %v4381
  %5043 = vmatpush1.bf16.msra.mxu0 %v4380
  %5044 = vmatprep.subr.bf16.mxu0 %v4377
  %5045 = vmatpush1.bf16.msra.mxu0 %v4376
  %5046 = vmatprep.subr.bf16.mxu0 %v4373
  %5047 = vmatpush1.bf16.msra.mxu0 %v4372
  %5048 = vmatprep.subr.bf16.mxu0 %v4369
  %5049 = vmatpush1.bf16.msra.mxu0 %v4368
  %5050 = vmatprep.subr.bf16.mxu0 %v4365
  %5051 = vmatpush1.bf16.msra.mxu0 %v4364
  %5052 = vmatprep.subr.bf16.mxu0 %v4361
  %5053 = vmatpush1.bf16.msra.mxu0 %v4360
  %5054 = vmatprep.subr.bf16.mxu0 %v4357
  %5055 = vmatpush1.bf16.msra.mxu0 %v4356
  %5056 = vmatprep.subr.bf16.mxu0 0
  %5057 = vmatpush2.bf16.msra.mxu0 0
  %5058 = vmatprep.subr.bf16.mxu0 0
  %5059 = vmatpush2.bf16.msra.mxu0 0
  %5060 = vmatprep.subr.bf16.mxu0 0
  %5061 = vmatpush2.bf16.msra.mxu0 0
  %5062 = vmatprep.subr.bf16.mxu0 0
  %5063 = vmatpush2.bf16.msra.mxu0 0
  %5064 = vmatprep.subr.bf16.mxu0 0
  %5065 = vmatpush2.bf16.msra.mxu0 0
  %5066 = vmatprep.subr.bf16.mxu0 0
  %5067 = vmatpush2.bf16.msra.mxu0 0
  %5068 = vmatprep.subr.bf16.mxu0 0
  %5069 = vmatpush2.bf16.msra.mxu0 0
  %5070 = vmatprep.subr.bf16.mxu0 0
  %5071 = vmatpush2.bf16.msra.mxu0 0
  %5072 = vmatprep.mubr.bf16.mxu0 0
  %5073 = vmatmul.mubr.bf16.gmra.mxu0 %v5035
  %v5074 = vpop.f32.mrf.mxu0
  %v5075 = vadd.f32 0.0, %v5074
  %v5076 = vpop.f32.mrf.mxu0
  %v5077 = vadd.f32 0.0, %v5076
  %v5078 = vpop.f32.mrf.mxu0
  %v5079 = vadd.f32 0.0, %v5078
  %v5080 = vpop.f32.mrf.mxu0
  %v5081 = vadd.f32 0.0, %v5080
  %5082 = vdwg.mxu0
  %5083 = vmatprep.subr.bf16.mxu0 %v4387
  %5084 = vmatpush1.bf16.msra.mxu0 %v4386
  %5085 = vmatprep.subr.bf16.mxu0 %v4383
  %5086 = vmatpush1.bf16.msra.mxu0 %v4382
  %5087 = vmatprep.subr.bf16.mxu0 %v4379
  %5088 = vmatpush1.bf16.msra.mxu0 %v4378
  %5089 = vmatprep.subr.bf16.mxu0 %v4375
  %5090 = vmatpush1.bf16.msra.mxu0 %v4374
  %5091 = vmatprep.subr.bf16.mxu0 %v4371
  %5092 = vmatpush1.bf16.msra.mxu0 %v4370
  %5093 = vmatprep.subr.bf16.mxu0 %v4367
  %5094 = vmatpush1.bf16.msra.mxu0 %v4366
  %5095 = vmatprep.subr.bf16.mxu0 %v4363
  %5096 = vmatpush1.bf16.msra.mxu0 %v4362
  %5097 = vmatprep.subr.bf16.mxu0 %v4359
  %5098 = vmatpush1.bf16.msra.mxu0 %v4358
  %5099 = vmatprep.subr.bf16.mxu0 0
  %5100 = vmatpush2.bf16.msra.mxu0 0
  %5101 = vmatprep.subr.bf16.mxu0 0
  %5102 = vmatpush2.bf16.msra.mxu0 0
  %5103 = vmatprep.subr.bf16.mxu0 0
  %5104 = vmatpush2.bf16.msra.mxu0 0
  %5105 = vmatprep.subr.bf16.mxu0 0
  %5106 = vmatpush2.bf16.msra.mxu0 0
  %5107 = vmatprep.subr.bf16.mxu0 0
  %5108 = vmatpush2.bf16.msra.mxu0 0
  %5109 = vmatprep.subr.bf16.mxu0 0
  %5110 = vmatpush2.bf16.msra.mxu0 0
  %5111 = vmatprep.subr.bf16.mxu0 0
  %5112 = vmatpush2.bf16.msra.mxu0 0
  %5113 = vmatprep.subr.bf16.mxu0 0
  %5114 = vmatpush2.bf16.msra.mxu0 0
  %5115 = vmatprep.mubr.bf16.mxu0 0
  %5116 = vmatmul.mubr.bf16.gmra.mxu0 %v5035
  %v5117 = vpop.f32.mrf.mxu0
  %v5118 = vadd.f32 0.0, %v5117
  %v5119 = vpop.f32.mrf.mxu0
  %v5120 = vadd.f32 0.0, %v5119
  %v5121 = vpop.f32.mrf.mxu0
  %v5122 = vadd.f32 0.0, %v5121
  %v5123 = vpop.f32.mrf.mxu0
  %v5124 = vadd.f32 0.0, %v5123
  %5125 = vdwg.mxu0
  %v5126 = vunpack.c.l.bf16 %v5036
  %v5127 = vunpack.c.h.bf16 %v5036
  %v5128 = vunpack.c.l.bf16 %v5037
  %v5129 = vunpack.c.h.bf16 %v5037
  %v5130 = vunpack.c.l.bf16 %v5038
  %v5131 = vunpack.c.h.bf16 %v5038
  %v5132 = vunpack.c.l.bf16 %v5039
  %v5133 = vunpack.c.h.bf16 %v5039
  %v5134 = vadd.f32 %v5126, %v5075
  %v5135 = vadd.f32 %v5127, %v5077
  %v5136 = vadd.f32 %v5128, %v5118
  %v5137 = vadd.f32 %v5129, %v5120
  %v5138 = vadd.f32 %v5130, %v5079
  %v5139 = vadd.f32 %v5131, %v5081
  %v5140 = vadd.f32 %v5132, %v5122
  %v5141 = vadd.f32 %v5133, %v5124
  %v5142 = vxor.u32 %v5134, 2147483648
  %v5143 = vxor.u32 %v5135, 2147483648
  %v5144 = vxor.u32 %v5136, 2147483648
  %v5145 = vxor.u32 %v5138, 2147483648
  %v5146 = vxor.u32 %v5139, 2147483648
  %v5147 = vxor.u32 %v5140, 2147483648
  %v5148 = vmul.f32 %v5142, 1.442695
  %v5149 = vpow.pop %v5148
  %v5150 = vmul.f32 %v5143, 1.442695
  %v5151 = vpow.pop %v5150
  %v5152 = vmul.f32 %v5144, 1.442695
  %v5153 = vpow.pop %v5152
  %v5154 = vmul.f32 %v5145, 1.442695
  %v5155 = vpow.pop %v5154
  %v5156 = vmul.f32 %v5146, 1.442695
  %v5157 = vpow.pop %v5156
  %v5158 = vmul.f32 %v5147, 1.442695
  %v5159 = vpow.pop %v5158
  %v5160 = vadd.f32 %v5149, 1.0
  %v5161 = vadd.f32 %v5151, 1.0
  %v5162 = vadd.f32 %v5153, 1.0
  %v5163 = vadd.f32 %v5155, 1.0
  %v5164 = vadd.f32 %v5157, 1.0
  %v5165 = vadd.f32 %v5159, 1.0
  %v5166 = vrcp.pop %v5160
  %v5167 = vmul.f32 1.0, %v5166
  %v5168 = vrcp.pop %v5161
  %v5169 = vmul.f32 1.0, %v5168
  %v5170 = vrcp.pop %v5162
  %v5171 = vmul.f32 1.0, %v5170
  %v5172 = vrcp.pop %v5163
  %v5173 = vmul.f32 1.0, %v5172
  %v5174 = vrcp.pop %v5164
  %v5175 = vmul.f32 1.0, %v5174
  %v5176 = vrcp.pop %v5165
  %v5177 = vmul.f32 1.0, %v5176
  %v5178 = vtanh.pop %v5137
  %v5179 = vtanh.pop %v5141
  %v5180 = vmul.f32 %v5169, %v5029
  %v5181 = vmul.f32 %v5175, %v5030
  %v5182 = vmul.f32 %v5167, %v5178
  %v5183 = vmul.f32 %v5173, %v5179
  %v5184 = vadd.f32 %v5180, %v5182
  %v5185 = vadd.f32 %v5181, %v5183
  %v5186 = vtanh.pop %v5184
  %v5187 = vtanh.pop %v5185
  %v5188 = vmul.f32 %v5171, %v5186
  %v5189 = vmul.f32 %v5177, %v5187
  %v5190 = vpack.c.bf16 %v5189, %v5188
  %v5191 = vld [vmem:[%s2418] sm:$0xff]
  %v5192 = vld [vmem:[%s2418 + $0x8] sm:$0xff]
  %v5193 = vld [vmem:[%s2418 + $0x10] sm:$0xff]
  %v5194 = vld [vmem:[%s2418 + $0x18] sm:$0xff]
  %5195 = vmatprep.subr.bf16.mxu0 %v4385
  %5196 = vmatpush1.bf16.msra.mxu0 %v4384
  %5197 = vmatprep.subr.bf16.mxu0 %v4381
  %5198 = vmatpush1.bf16.msra.mxu0 %v4380
  %5199 = vmatprep.subr.bf16.mxu0 %v4377
  %5200 = vmatpush1.bf16.msra.mxu0 %v4376
  %5201 = vmatprep.subr.bf16.mxu0 %v4373
  %5202 = vmatpush1.bf16.msra.mxu0 %v4372
  %5203 = vmatprep.subr.bf16.mxu0 %v4369
  %5204 = vmatpush1.bf16.msra.mxu0 %v4368
  %5205 = vmatprep.subr.bf16.mxu0 %v4365
  %5206 = vmatpush1.bf16.msra.mxu0 %v4364
  %5207 = vmatprep.subr.bf16.mxu0 %v4361
  %5208 = vmatpush1.bf16.msra.mxu0 %v4360
  %5209 = vmatprep.subr.bf16.mxu0 %v4357
  %5210 = vmatpush1.bf16.msra.mxu0 %v4356
  %5211 = vmatprep.subr.bf16.mxu0 0
  %5212 = vmatpush2.bf16.msra.mxu0 0
  %5213 = vmatprep.subr.bf16.mxu0 0
  %5214 = vmatpush2.bf16.msra.mxu0 0
  %5215 = vmatprep.subr.bf16.mxu0 0
  %5216 = vmatpush2.bf16.msra.mxu0 0
  %5217 = vmatprep.subr.bf16.mxu0 0
  %5218 = vmatpush2.bf16.msra.mxu0 0
  %5219 = vmatprep.subr.bf16.mxu0 0
  %5220 = vmatpush2.bf16.msra.mxu0 0
  %5221 = vmatprep.subr.bf16.mxu0 0
  %5222 = vmatpush2.bf16.msra.mxu0 0
  %5223 = vmatprep.subr.bf16.mxu0 0
  %5224 = vmatpush2.bf16.msra.mxu0 0
  %5225 = vmatprep.subr.bf16.mxu0 0
  %5226 = vmatpush2.bf16.msra.mxu0 0
  %5227 = vmatprep.mubr.bf16.mxu0 0
  %5228 = vmatmul.mubr.bf16.gmra.mxu0 %v5190
  %v5229 = vpop.f32.mrf.mxu0
  %v5230 = vadd.f32 0.0, %v5229
  %v5231 = vpop.f32.mrf.mxu0
  %v5232 = vadd.f32 0.0, %v5231
  %v5233 = vpop.f32.mrf.mxu0
  %v5234 = vadd.f32 0.0, %v5233
  %v5235 = vpop.f32.mrf.mxu0
  %v5236 = vadd.f32 0.0, %v5235
  %5237 = vdwg.mxu0
  %5238 = vmatprep.subr.bf16.mxu0 %v4387
  %5239 = vmatpush1.bf16.msra.mxu0 %v4386
  %5240 = vmatprep.subr.bf16.mxu0 %v4383
  %5241 = vmatpush1.bf16.msra.mxu0 %v4382
  %5242 = vmatprep.subr.bf16.mxu0 %v4379
  %5243 = vmatpush1.bf16.msra.mxu0 %v4378
  %5244 = vmatprep.subr.bf16.mxu0 %v4375
  %5245 = vmatpush1.bf16.msra.mxu0 %v4374
  %5246 = vmatprep.subr.bf16.mxu0 %v4371
  %5247 = vmatpush1.bf16.msra.mxu0 %v4370
  %5248 = vmatprep.subr.bf16.mxu0 %v4367
  %5249 = vmatpush1.bf16.msra.mxu0 %v4366
  %5250 = vmatprep.subr.bf16.mxu0 %v4363
  %5251 = vmatpush1.bf16.msra.mxu0 %v4362
  %5252 = vmatprep.subr.bf16.mxu0 %v4359
  %5253 = vmatpush1.bf16.msra.mxu0 %v4358
  %5254 = vmatprep.subr.bf16.mxu0 0
  %5255 = vmatpush2.bf16.msra.mxu0 0
  %5256 = vmatprep.subr.bf16.mxu0 0
  %5257 = vmatpush2.bf16.msra.mxu0 0
  %5258 = vmatprep.subr.bf16.mxu0 0
  %5259 = vmatpush2.bf16.msra.mxu0 0
  %5260 = vmatprep.subr.bf16.mxu0 0
  %5261 = vmatpush2.bf16.msra.mxu0 0
  %5262 = vmatprep.subr.bf16.mxu0 0
  %5263 = vmatpush2.bf16.msra.mxu0 0
  %5264 = vmatprep.subr.bf16.mxu0 0
  %5265 = vmatpush2.bf16.msra.mxu0 0
  %5266 = vmatprep.subr.bf16.mxu0 0
  %5267 = vmatpush2.bf16.msra.mxu0 0
  %5268 = vmatprep.subr.bf16.mxu0 0
  %5269 = vmatpush2.bf16.msra.mxu0 0
  %5270 = vmatprep.mubr.bf16.mxu0 0
  %5271 = vmatmul.mubr.bf16.gmra.mxu0 %v5190
  %v5272 = vpop.f32.mrf.mxu0
  %v5273 = vadd.f32 0.0, %v5272
  %v5274 = vpop.f32.mrf.mxu0
  %v5275 = vadd.f32 0.0, %v5274
  %v5276 = vpop.f32.mrf.mxu0
  %v5277 = vadd.f32 0.0, %v5276
  %v5278 = vpop.f32.mrf.mxu0
  %v5279 = vadd.f32 0.0, %v5278
  %5280 = vdwg.mxu0
  %v5281 = vunpack.c.l.bf16 %v5191
  %v5282 = vunpack.c.h.bf16 %v5191
  %v5283 = vunpack.c.l.bf16 %v5192
  %v5284 = vunpack.c.h.bf16 %v5192
  %v5285 = vunpack.c.l.bf16 %v5193
  %v5286 = vunpack.c.h.bf16 %v5193
  %v5287 = vunpack.c.l.bf16 %v5194
  %v5288 = vunpack.c.h.bf16 %v5194
  %v5289 = vadd.f32 %v5281, %v5230
  %v5290 = vadd.f32 %v5282, %v5232
  %v5291 = vadd.f32 %v5283, %v5273
  %v5292 = vadd.f32 %v5284, %v5275
  %v5293 = vadd.f32 %v5285, %v5234
  %v5294 = vadd.f32 %v5286, %v5236
  %v5295 = vadd.f32 %v5287, %v5277
  %v5296 = vadd.f32 %v5288, %v5279
  %v5297 = vxor.u32 %v5289, 2147483648
  %v5298 = vxor.u32 %v5290, 2147483648
  %v5299 = vxor.u32 %v5291, 2147483648
  %v5300 = vxor.u32 %v5293, 2147483648
  %v5301 = vxor.u32 %v5294, 2147483648
  %v5302 = vxor.u32 %v5295, 2147483648
  %v5303 = vmul.f32 %v5297, 1.442695
  %v5304 = vpow.pop %v5303
  %v5305 = vmul.f32 %v5298, 1.442695
  %v5306 = vpow.pop %v5305
  %v5307 = vmul.f32 %v5299, 1.442695
  %v5308 = vpow.pop %v5307
  %v5309 = vmul.f32 %v5300, 1.442695
  %v5310 = vpow.pop %v5309
  %v5311 = vmul.f32 %v5301, 1.442695
  %v5312 = vpow.pop %v5311
  %v5313 = vmul.f32 %v5302, 1.442695
  %v5314 = vpow.pop %v5313
  %v5315 = vadd.f32 %v5304, 1.0
  %v5316 = vadd.f32 %v5306, 1.0
  %v5317 = vadd.f32 %v5308, 1.0
  %v5318 = vadd.f32 %v5310, 1.0
  %v5319 = vadd.f32 %v5312, 1.0
  %v5320 = vadd.f32 %v5314, 1.0
  %v5321 = vrcp.pop %v5315
  %v5322 = vmul.f32 1.0, %v5321
  %v5323 = vrcp.pop %v5316
  %v5324 = vmul.f32 1.0, %v5323
  %v5325 = vrcp.pop %v5317
  %v5326 = vmul.f32 1.0, %v5325
  %v5327 = vrcp.pop %v5318
  %v5328 = vmul.f32 1.0, %v5327
  %v5329 = vrcp.pop %v5319
  %v5330 = vmul.f32 1.0, %v5329
  %v5331 = vrcp.pop %v5320
  %v5332 = vmul.f32 1.0, %v5331
  %v5333 = vtanh.pop %v5292
  %v5334 = vtanh.pop %v5296
  %v5335 = vmul.f32 %v5324, %v5184
  %v5336 = vmul.f32 %v5330, %v5185
  %v5337 = vmul.f32 %v5322, %v5333
  %v5338 = vmul.f32 %v5328, %v5334
  %v5339 = vadd.f32 %v5335, %v5337
  %v5340 = vadd.f32 %v5336, %v5338
  %v5341 = vtanh.pop %v5339
  %v5342 = vtanh.pop %v5340
  %v5343 = vmul.f32 %v5326, %v5341
  %v5344 = vmul.f32 %v5332, %v5342
  %v5345 = vpack.c.bf16 %v5344, %v5343
  %v5346 = vld [vmem:[%s2778] sm:$0xff]
  %v5347 = vld [vmem:[%s2778 + $0x8] sm:$0xff]
  %v5348 = vld [vmem:[%s2778 + $0x10] sm:$0xff]
  %v5349 = vld [vmem:[%s2778 + $0x18] sm:$0xff]
  %5350 = vmatprep.subr.bf16.mxu0 %v4385
  %5351 = vmatpush1.bf16.msra.mxu0 %v4384
  %5352 = vmatprep.subr.bf16.mxu0 %v4381
  %5353 = vmatpush1.bf16.msra.mxu0 %v4380
  %5354 = vmatprep.subr.bf16.mxu0 %v4377
  %5355 = vmatpush1.bf16.msra.mxu0 %v4376
  %5356 = vmatprep.subr.bf16.mxu0 %v4373
  %5357 = vmatpush1.bf16.msra.mxu0 %v4372
  %5358 = vmatprep.subr.bf16.mxu0 %v4369
  %5359 = vmatpush1.bf16.msra.mxu0 %v4368
  %5360 = vmatprep.subr.bf16.mxu0 %v4365
  %5361 = vmatpush1.bf16.msra.mxu0 %v4364
  %5362 = vmatprep.subr.bf16.mxu0 %v4361
  %5363 = vmatpush1.bf16.msra.mxu0 %v4360
  %5364 = vmatprep.subr.bf16.mxu0 %v4357
  %5365 = vmatpush1.bf16.msra.mxu0 %v4356
  %5366 = vmatprep.subr.bf16.mxu0 0
  %5367 = vmatpush2.bf16.msra.mxu0 0
  %5368 = vmatprep.subr.bf16.mxu0 0
  %5369 = vmatpush2.bf16.msra.mxu0 0
  %5370 = vmatprep.subr.bf16.mxu0 0
  %5371 = vmatpush2.bf16.msra.mxu0 0
  %5372 = vmatprep.subr.bf16.mxu0 0
  %5373 = vmatpush2.bf16.msra.mxu0 0
  %5374 = vmatprep.subr.bf16.mxu0 0
  %5375 = vmatpush2.bf16.msra.mxu0 0
  %5376 = vmatprep.subr.bf16.mxu0 0
  %5377 = vmatpush2.bf16.msra.mxu0 0
  %5378 = vmatprep.subr.bf16.mxu0 0
  %5379 = vmatpush2.bf16.msra.mxu0 0
  %5380 = vmatprep.subr.bf16.mxu0 0
  %5381 = vmatpush2.bf16.msra.mxu0 0
  %5382 = vmatprep.mubr.bf16.mxu0 0
  %5383 = vmatmul.mubr.bf16.gmra.mxu0 %v5345
  %v5384 = vpop.f32.mrf.mxu0
  %v5385 = vadd.f32 0.0, %v5384
  %v5386 = vpop.f32.mrf.mxu0
  %v5387 = vadd.f32 0.0, %v5386
  %v5388 = vpop.f32.mrf.mxu0
  %v5389 = vadd.f32 0.0, %v5388
  %v5390 = vpop.f32.mrf.mxu0
  %v5391 = vadd.f32 0.0, %v5390
  %5392 = vdwg.mxu0
  %5393 = vmatprep.subr.bf16.mxu0 %v4387
  %5394 = vmatpush1.bf16.msra.mxu0 %v4386
  %5395 = vmatprep.subr.bf16.mxu0 %v4383
  %5396 = vmatpush1.bf16.msra.mxu0 %v4382
  %5397 = vmatprep.subr.bf16.mxu0 %v4379
  %5398 = vmatpush1.bf16.msra.mxu0 %v4378
  %5399 = vmatprep.subr.bf16.mxu0 %v4375
  %5400 = vmatpush1.bf16.msra.mxu0 %v4374
  %5401 = vmatprep.subr.bf16.mxu0 %v4371
  %5402 = vmatpush1.bf16.msra.mxu0 %v4370
  %5403 = vmatprep.subr.bf16.mxu0 %v4367
  %5404 = vmatpush1.bf16.msra.mxu0 %v4366
  %5405 = vmatprep.subr.bf16.mxu0 %v4363
  %5406 = vmatpush1.bf16.msra.mxu0 %v4362
  %5407 = vmatprep.subr.bf16.mxu0 %v4359
  %5408 = vmatpush1.bf16.msra.mxu0 %v4358
  %5409 = vmatprep.subr.bf16.mxu0 0
  %5410 = vmatpush2.bf16.msra.mxu0 0
  %5411 = vmatprep.subr.bf16.mxu0 0
  %5412 = vmatpush2.bf16.msra.mxu0 0
  %5413 = vmatprep.subr.bf16.mxu0 0
  %5414 = vmatpush2.bf16.msra.mxu0 0
  %5415 = vmatprep.subr.bf16.mxu0 0
  %5416 = vmatpush2.bf16.msra.mxu0 0
  %5417 = vmatprep.subr.bf16.mxu0 0
  %5418 = vmatpush2.bf16.msra.mxu0 0
  %5419 = vmatprep.subr.bf16.mxu0 0
  %5420 = vmatpush2.bf16.msra.mxu0 0
  %5421 = vmatprep.subr.bf16.mxu0 0
  %5422 = vmatpush2.bf16.msra.mxu0 0
  %5423 = vmatprep.subr.bf16.mxu0 0
  %5424 = vmatpush2.bf16.msra.mxu0 0
  %5425 = vmatprep.mubr.bf16.mxu0 0
  %5426 = vmatmul.mubr.bf16.gmra.mxu0 %v5345
  %v5427 = vpop.f32.mrf.mxu0
  %v5428 = vadd.f32 0.0, %v5427
  %v5429 = vpop.f32.mrf.mxu0
  %v5430 = vadd.f32 0.0, %v5429
  %v5431 = vpop.f32.mrf.mxu0
  %v5432 = vadd.f32 0.0, %v5431
  %v5433 = vpop.f32.mrf.mxu0
  %v5434 = vadd.f32 0.0, %v5433
  %5435 = vdwg.mxu0
  %v5436 = vunpack.c.l.bf16 %v5346
  %v5437 = vunpack.c.h.bf16 %v5346
  %v5438 = vunpack.c.l.bf16 %v5347
  %v5439 = vunpack.c.h.bf16 %v5347
  %v5440 = vunpack.c.l.bf16 %v5348
  %v5441 = vunpack.c.h.bf16 %v5348
  %v5442 = vunpack.c.l.bf16 %v5349
  %v5443 = vunpack.c.h.bf16 %v5349
  %v5444 = vadd.f32 %v5436, %v5385
  %v5445 = vadd.f32 %v5437, %v5387
  %v5446 = vadd.f32 %v5438, %v5428
  %v5447 = vadd.f32 %v5439, %v5430
  %v5448 = vadd.f32 %v5440, %v5389
  %v5449 = vadd.f32 %v5441, %v5391
  %v5450 = vadd.f32 %v5442, %v5432
  %v5451 = vadd.f32 %v5443, %v5434
  %v5452 = vxor.u32 %v5444, 2147483648
  %v5453 = vxor.u32 %v5445, 2147483648
  %v5454 = vxor.u32 %v5446, 2147483648
  %v5455 = vxor.u32 %v5448, 2147483648
  %v5456 = vxor.u32 %v5449, 2147483648
  %v5457 = vxor.u32 %v5450, 2147483648
  %v5458 = vmul.f32 %v5452, 1.442695
  %v5459 = vpow.pop %v5458
  %v5460 = vmul.f32 %v5453, 1.442695
  %v5461 = vpow.pop %v5460
  %v5462 = vmul.f32 %v5454, 1.442695
  %v5463 = vpow.pop %v5462
  %v5464 = vmul.f32 %v5455, 1.442695
  %v5465 = vpow.pop %v5464
  %v5466 = vmul.f32 %v5456, 1.442695
  %v5467 = vpow.pop %v5466
  %v5468 = vmul.f32 %v5457, 1.442695
  %v5469 = vpow.pop %v5468
  %v5470 = vadd.f32 %v5459, 1.0
  %v5471 = vadd.f32 %v5461, 1.0
  %v5472 = vadd.f32 %v5463, 1.0
  %v5473 = vadd.f32 %v5465, 1.0
  %v5474 = vadd.f32 %v5467, 1.0
  %v5475 = vadd.f32 %v5469, 1.0
  %v5476 = vrcp.pop %v5470
  %v5477 = vmul.f32 1.0, %v5476
  %v5478 = vrcp.pop %v5471
  %v5479 = vmul.f32 1.0, %v5478
  %v5480 = vrcp.pop %v5472
  %v5481 = vmul.f32 1.0, %v5480
  %v5482 = vrcp.pop %v5473
  %v5483 = vmul.f32 1.0, %v5482
  %v5484 = vrcp.pop %v5474
  %v5485 = vmul.f32 1.0, %v5484
  %v5486 = vrcp.pop %v5475
  %v5487 = vmul.f32 1.0, %v5486
  %v5488 = vtanh.pop %v5447
  %v5489 = vtanh.pop %v5451
  %v5490 = vmul.f32 %v5479, %v5339
  %v5491 = vmul.f32 %v5485, %v5340
  %v5492 = vmul.f32 %v5477, %v5488
  %v5493 = vmul.f32 %v5483, %v5489
  %v5494 = vadd.f32 %v5490, %v5492
  %v5495 = vadd.f32 %v5491, %v5493
  %v5496 = vtanh.pop %v5494
  %v5497 = vtanh.pop %v5495
  %v5498 = vmul.f32 %v5481, %v5496
  %v5499 = vmul.f32 %v5487, %v5497
  %v5500 = vpack.c.bf16 %v5499, %v5498
  %v5501 = vld [vmem:[%s3138] sm:$0xff]
  %v5502 = vld [vmem:[%s3138 + $0x8] sm:$0xff]
  %v5503 = vld [vmem:[%s3138 + $0x10] sm:$0xff]
  %v5504 = vld [vmem:[%s3138 + $0x18] sm:$0xff]
  %5505 = vmatprep.subr.bf16.mxu0 %v4385
  %5506 = vmatpush1.bf16.msra.mxu0 %v4384
  %5507 = vmatprep.subr.bf16.mxu0 %v4381
  %5508 = vmatpush1.bf16.msra.mxu0 %v4380
  %5509 = vmatprep.subr.bf16.mxu0 %v4377
  %5510 = vmatpush1.bf16.msra.mxu0 %v4376
  %5511 = vmatprep.subr.bf16.mxu0 %v4373
  %5512 = vmatpush1.bf16.msra.mxu0 %v4372
  %5513 = vmatprep.subr.bf16.mxu0 %v4369
  %5514 = vmatpush1.bf16.msra.mxu0 %v4368
  %5515 = vmatprep.subr.bf16.mxu0 %v4365
  %5516 = vmatpush1.bf16.msra.mxu0 %v4364
  %5517 = vmatprep.subr.bf16.mxu0 %v4361
  %5518 = vmatpush1.bf16.msra.mxu0 %v4360
  %5519 = vmatprep.subr.bf16.mxu0 %v4357
  %5520 = vmatpush1.bf16.msra.mxu0 %v4356
  %5521 = vmatprep.subr.bf16.mxu0 0
  %5522 = vmatpush2.bf16.msra.mxu0 0
  %5523 = vmatprep.subr.bf16.mxu0 0
  %5524 = vmatpush2.bf16.msra.mxu0 0
  %5525 = vmatprep.subr.bf16.mxu0 0
  %5526 = vmatpush2.bf16.msra.mxu0 0
  %5527 = vmatprep.subr.bf16.mxu0 0
  %5528 = vmatpush2.bf16.msra.mxu0 0
  %5529 = vmatprep.subr.bf16.mxu0 0
  %5530 = vmatpush2.bf16.msra.mxu0 0
  %5531 = vmatprep.subr.bf16.mxu0 0
  %5532 = vmatpush2.bf16.msra.mxu0 0
  %5533 = vmatprep.subr.bf16.mxu0 0
  %5534 = vmatpush2.bf16.msra.mxu0 0
  %5535 = vmatprep.subr.bf16.mxu0 0
  %5536 = vmatpush2.bf16.msra.mxu0 0
  %5537 = vmatprep.mubr.bf16.mxu0 0
  %5538 = vmatmul.mubr.bf16.gmra.mxu0 %v5500
  %v5539 = vpop.f32.mrf.mxu0
  %v5540 = vadd.f32 0.0, %v5539
  %v5541 = vpop.f32.mrf.mxu0
  %v5542 = vadd.f32 0.0, %v5541
  %v5543 = vpop.f32.mrf.mxu0
  %v5544 = vadd.f32 0.0, %v5543
  %v5545 = vpop.f32.mrf.mxu0
  %v5546 = vadd.f32 0.0, %v5545
  %5547 = vdwg.mxu0
  %5548 = vmatprep.subr.bf16.mxu0 %v4387
  %5549 = vmatpush1.bf16.msra.mxu0 %v4386
  %5550 = vmatprep.subr.bf16.mxu0 %v4383
  %5551 = vmatpush1.bf16.msra.mxu0 %v4382
  %5552 = vmatprep.subr.bf16.mxu0 %v4379
  %5553 = vmatpush1.bf16.msra.mxu0 %v4378
  %5554 = vmatprep.subr.bf16.mxu0 %v4375
  %5555 = vmatpush1.bf16.msra.mxu0 %v4374
  %5556 = vmatprep.subr.bf16.mxu0 %v4371
  %5557 = vmatpush1.bf16.msra.mxu0 %v4370
  %5558 = vmatprep.subr.bf16.mxu0 %v4367
  %5559 = vmatpush1.bf16.msra.mxu0 %v4366
  %5560 = vmatprep.subr.bf16.mxu0 %v4363
  %5561 = vmatpush1.bf16.msra.mxu0 %v4362
  %5562 = vmatprep.subr.bf16.mxu0 %v4359
  %5563 = vmatpush1.bf16.msra.mxu0 %v4358
  %5564 = vmatprep.subr.bf16.mxu0 0
  %5565 = vmatpush2.bf16.msra.mxu0 0
  %5566 = vmatprep.subr.bf16.mxu0 0
  %5567 = vmatpush2.bf16.msra.mxu0 0
  %5568 = vmatprep.subr.bf16.mxu0 0
  %5569 = vmatpush2.bf16.msra.mxu0 0
  %5570 = vmatprep.subr.bf16.mxu0 0
  %5571 = vmatpush2.bf16.msra.mxu0 0
  %5572 = vmatprep.subr.bf16.mxu0 0
  %5573 = vmatpush2.bf16.msra.mxu0 0
  %5574 = vmatprep.subr.bf16.mxu0 0
  %5575 = vmatpush2.bf16.msra.mxu0 0
  %5576 = vmatprep.subr.bf16.mxu0 0
  %5577 = vmatpush2.bf16.msra.mxu0 0
  %5578 = vmatprep.subr.bf16.mxu0 0
  %5579 = vmatpush2.bf16.msra.mxu0 0
  %5580 = vmatprep.mubr.bf16.mxu0 0
  %5581 = vmatmul.mubr.bf16.gmra.mxu0 %v5500
  %v5582 = vpop.f32.mrf.mxu0
  %v5583 = vadd.f32 0.0, %v5582
  %v5584 = vpop.f32.mrf.mxu0
  %v5585 = vadd.f32 0.0, %v5584
  %v5586 = vpop.f32.mrf.mxu0
  %v5587 = vadd.f32 0.0, %v5586
  %v5588 = vpop.f32.mrf.mxu0
  %v5589 = vadd.f32 0.0, %v5588
  %5590 = vdwg.mxu0
  %v5591 = vunpack.c.l.bf16 %v5501
  %v5592 = vunpack.c.h.bf16 %v5501
  %v5593 = vunpack.c.l.bf16 %v5502
  %v5594 = vunpack.c.h.bf16 %v5502
  %v5595 = vunpack.c.l.bf16 %v5503
  %v5596 = vunpack.c.h.bf16 %v5503
  %v5597 = vunpack.c.l.bf16 %v5504
  %v5598 = vunpack.c.h.bf16 %v5504
  %v5599 = vadd.f32 %v5591, %v5540
  %v5600 = vadd.f32 %v5592, %v5542
  %v5601 = vadd.f32 %v5593, %v5583
  %v5602 = vadd.f32 %v5594, %v5585
  %v5603 = vadd.f32 %v5595, %v5544
  %v5604 = vadd.f32 %v5596, %v5546
  %v5605 = vadd.f32 %v5597, %v5587
  %v5606 = vadd.f32 %v5598, %v5589
  %v5607 = vxor.u32 %v5599, 2147483648
  %v5608 = vxor.u32 %v5600, 2147483648
  %v5609 = vxor.u32 %v5601, 2147483648
  %v5610 = vxor.u32 %v5603, 2147483648
  %v5611 = vxor.u32 %v5604, 2147483648
  %v5612 = vxor.u32 %v5605, 2147483648
  %v5613 = vmul.f32 %v5607, 1.442695
  %v5614 = vpow.pop %v5613
  %v5615 = vmul.f32 %v5608, 1.442695
  %v5616 = vpow.pop %v5615
  %v5617 = vmul.f32 %v5609, 1.442695
  %v5618 = vpow.pop %v5617
  %v5619 = vmul.f32 %v5610, 1.442695
  %v5620 = vpow.pop %v5619
  %v5621 = vmul.f32 %v5611, 1.442695
  %v5622 = vpow.pop %v5621
  %v5623 = vmul.f32 %v5612, 1.442695
  %v5624 = vpow.pop %v5623
  %v5625 = vadd.f32 %v5614, 1.0
  %v5626 = vadd.f32 %v5616, 1.0
  %v5627 = vadd.f32 %v5618, 1.0
  %v5628 = vadd.f32 %v5620, 1.0
  %v5629 = vadd.f32 %v5622, 1.0
  %v5630 = vadd.f32 %v5624, 1.0
  %v5631 = vrcp.pop %v5625
  %v5632 = vmul.f32 1.0, %v5631
  %v5633 = vrcp.pop %v5626
  %v5634 = vmul.f32 1.0, %v5633
  %v5635 = vrcp.pop %v5627
  %v5636 = vmul.f32 1.0, %v5635
  %v5637 = vrcp.pop %v5628
  %v5638 = vmul.f32 1.0, %v5637
  %v5639 = vrcp.pop %v5629
  %v5640 = vmul.f32 1.0, %v5639
  %v5641 = vrcp.pop %v5630
  %v5642 = vmul.f32 1.0, %v5641
  %v5643 = vtanh.pop %v5602
  %v5644 = vtanh.pop %v5606
  %v5645 = vmul.f32 %v5634, %v5494
  %v5646 = vmul.f32 %v5640, %v5495
  %v5647 = vmul.f32 %v5632, %v5643
  %v5648 = vmul.f32 %v5638, %v5644
  %v5649 = vadd.f32 %v5645, %v5647
  %v5650 = vadd.f32 %v5646, %v5648
  %v5651 = vtanh.pop %v5649
  %v5652 = vtanh.pop %v5650
  %v5653 = vmul.f32 %v5636, %v5651
  %v5654 = vmul.f32 %v5642, %v5652
  %v5655 = vpack.c.bf16 %v5654, %v5653
  %v5656 = vunpack.c.l.bf16 %v5655
  %v5657 = vunpack.c.h.bf16 %v5655
  %v5658 = vld [vmem:[%s8] sm:$0xff]
  %v5659 = vld [vmem:[%s8 + $0x8] sm:$0xff]
  %v5660 = vld [vmem:[%s8 + $0x10] sm:$0xff]
  %v5661 = vld [vmem:[%s8 + $0x18] sm:$0xff]
  %v5662 = vld [vmem:[%s8 + $0x20] sm:$0xff]
  %v5663 = vld [vmem:[%s8 + $0x28] sm:$0xff]
  %v5664 = vld [vmem:[%s8 + $0x30] sm:$0xff]
  %v5665 = vld [vmem:[%s8 + $0x38] sm:$0xff]
  %v5666 = vld [vmem:[%s8 + $0x40] sm:$0xff]
  %v5667 = vld [vmem:[%s8 + $0x48] sm:$0xff]
  %v5668 = vld [vmem:[%s8 + $0x50] sm:$0xff]
  %v5669 = vld [vmem:[%s8 + $0x58] sm:$0xff]
  %v5670 = vld [vmem:[%s8 + $0x60] sm:$0xff]
  %v5671 = vld [vmem:[%s8 + $0x68] sm:$0xff]
  %v5672 = vld [vmem:[%s8 + $0x70] sm:$0xff]
  %v5673 = vld [vmem:[%s8 + $0x78] sm:$0xff]
  %v5674 = vld [vmem:[%s10] sm:$0x1]
  %v5676 = vlaneseq
  %v5677 = vshrl.u32 %v5676, 7
  %v5678 = vsub.s32 0, %v5677
  %v5679 = vrot.slane %v5674, %v5678
  %5681 = vmatprep.subr.mxu0 0.0
  %5682 = vmatpush1.msra.mxu0 %v5673
  %5683 = vmatprep.subr.mxu0 0.0
  %5684 = vmatpush1.msra.mxu0 %v5672
  %5685 = vmatprep.subr.mxu0 0.0
  %5686 = vmatpush1.msra.mxu0 %v5671
  %5687 = vmatprep.subr.mxu0 0.0
  %5688 = vmatpush1.msra.mxu0 %v5670
  %5689 = vmatprep.subr.mxu0 0.0
  %5690 = vmatpush1.msra.mxu0 %v5669
  %5691 = vmatprep.subr.mxu0 0.0
  %5692 = vmatpush1.msra.mxu0 %v5668
  %5693 = vmatprep.subr.mxu0 0.0
  %5694 = vmatpush1.msra.mxu0 %v5667
  %5695 = vmatprep.subr.mxu0 0.0
  %5696 = vmatpush1.msra.mxu0 %v5666
  %5697 = vmatprep.subr.mxu0 0.0
  %5698 = vmatpush1.msra.mxu0 %v5665
  %5699 = vmatprep.subr.mxu0 0.0
  %5700 = vmatpush1.msra.mxu0 %v5664
  %5701 = vmatprep.subr.mxu0 0.0
  %5702 = vmatpush1.msra.mxu0 %v5663
  %5703 = vmatprep.subr.mxu0 0.0
  %5704 = vmatpush1.msra.mxu0 %v5662
  %5705 = vmatprep.subr.mxu0 0.0
  %5706 = vmatpush1.msra.mxu0 %v5661
  %5707 = vmatprep.subr.mxu0 0.0
  %5708 = vmatpush1.msra.mxu0 %v5660
  %5709 = vmatprep.subr.mxu0 0.0
  %5710 = vmatpush1.msra.mxu0 %v5659
  %5711 = vmatprep.subr.mxu0 0.0
  %5712 = vmatpush1.msra.mxu0 %v5658
  %5713 = vmatprep.subr.mxu0 0.0
  %5714 = vmatpush2.msra.mxu0 0.0
  %5715 = vmatprep.subr.mxu0 0.0
  %5716 = vmatpush2.msra.mxu0 0.0
  %5717 = vmatprep.subr.mxu0 0.0
  %5718 = vmatpush2.msra.mxu0 0.0
  %5719 = vmatprep.subr.mxu0 0.0
  %5720 = vmatpush2.msra.mxu0 0.0
  %5721 = vmatprep.subr.mxu0 0.0
  %5722 = vmatpush2.msra.mxu0 0.0
  %5723 = vmatprep.subr.mxu0 0.0
  %5724 = vmatpush2.msra.mxu0 0.0
  %5725 = vmatprep.subr.mxu0 0.0
  %5726 = vmatpush2.msra.mxu0 0.0
  %5727 = vmatprep.subr.mxu0 0.0
  %5728 = vmatpush2.msra.mxu0 0.0
  %5729 = vmatprep.subr.mxu0 0.0
  %5730 = vmatpush2.msra.mxu0 0.0
  %5731 = vmatprep.subr.mxu0 0.0
  %5732 = vmatpush2.msra.mxu0 0.0
  %5733 = vmatprep.subr.mxu0 0.0
  %5734 = vmatpush2.msra.mxu0 0.0
  %5735 = vmatprep.subr.mxu0 0.0
  %5736 = vmatpush2.msra.mxu0 0.0
  %5737 = vmatprep.subr.mxu0 0.0
  %5738 = vmatpush2.msra.mxu0 0.0
  %5739 = vmatprep.subr.mxu0 0.0
  %5740 = vmatpush2.msra.mxu0 0.0
  %5741 = vmatprep.subr.mxu0 0.0
  %5742 = vmatpush2.msra.mxu0 0.0
  %5743 = vmatprep.subr.mxu0 0.0
  %5744 = vmatpush2.msra.mxu0 0.0
  %5745 = vmatprep.mubr.f32.mxu0 0.0
  %5746 = vmatmul.mubr.f32.gmra.mxu0 %v5656
  %v5747 = vpop.f32.mrf.mxu0
  %v5748 = vadd.f32 %v5679, %v5747
  %v5749 = vpop.f32.mrf.mxu0
  %5750 = vmatprep.mubr.f32.mxu0 0.0
  %5751 = vmatmul.mubr.f32.gmra.mxu0 %v5657
  %v5752 = vpop.f32.mrf.mxu0
  %v5753 = vadd.f32 %v5679, %v5752
  %v5754 = vpop.f32.mrf.mxu0
  %5755 = vdwg.mxu0
  %v5756 = vld [vmem:[%s1] sm:$0xff]
  %v5757 = vld [vmem:[%s1 + $0x8] sm:$0xff]
  %v5758 = vld [vmem:[%s9] sm:$0x1]
  %5760 = vset.pattern.permute.xlu0 0
  %5761 = vperm.xlu0 %5760, %v5756
  %v5762 = vpop.permute.xlu0 %5761
  %5765 = vset.pattern.permute.xlu0 0
  %5766 = vperm.xlu0 %5765, %v5757
  %v5767 = vpop.permute.xlu0 %5766
  %v5770 = vlaneseq
  %v5771 = vshrl.u32 %v5770, 7
  %v5772 = vsub.s32 0, %v5771
  %v5773 = vrot.slane %v5758, %v5772
  %v5775 = vmul.f32 %v5762, %v5773
  %v5776 = vmul.f32 %v5767, %v5773
  %v5777 = vadd.f32 %v5748, %v5775
  %v5778 = vadd.f32 %v5753, %v5776
  %5779 = vst [vmem:[%s11] sm:$0xff] %v5777
  %5780 = vst [vmem:[%s11 + $0x8] sm:$0xff] %v5778
  %v5781 = vsub.f32 1.0, %v5756
  %v5782 = vsub.f32 1.0, %v5757
  %5784 = vset.pattern.permute.xlu0 0
  %5785 = vperm.xlu0 %5784, %v5781
  %v5786 = vpop.permute.xlu0 %5785
  %5789 = vset.pattern.permute.xlu0 0
  %5790 = vperm.xlu0 %5789, %v5782
  %v5791 = vpop.permute.xlu0 %5790
  %v5793 = vmul.f32 %v5786, %v5773
  %v5794 = vmul.f32 %v5791, %v5773
  %v5795 = vadd.f32 %v5748, %v5793
  %v5796 = vadd.f32 %v5753, %v5794
  %s5797 = scalar_lea.vmem %s11, 16
  %5798 = vst [vmem:[%s5797] sm:$0xff] %v5795
  %5799 = vst [vmem:[%s5797 + $0x8] sm:$0xff] %v5796
  // Predicated region
  $region46: #{lstm_lattice_forward.1} parent=0 // pred_check
    _
  $region47: #{lstm_lattice_forward.1} parent=0 // pred_check_branch
    %5801 = sbr.rel (0) target = $region49
  $region48: #{lstm_lattice_forward.1} parent=0 // pred_region
    _
  $region49: #{lstm_lattice_forward.1} parent=0 // pred_fallthru
    _
  // Predicated region
  $region50: #{lstm_lattice_forward.1} parent=0 // pred_check
    _
  $region51: #{lstm_lattice_forward.1} parent=0 // pred_check_branch
    %5803 = sbr.rel (0) target = $region53
  $region52: #{lstm_lattice_forward.1} parent=0 // pred_region
    _
  $region53: #{lstm_lattice_forward.1} parent=0 // pred_fallthru
    _

</llo_original>
